<compile_context>
chip_gen: v7x
topology: tpu7x:2x2x1
jax: 0.10.0
libtpu: 0.0.40
codegen_flags: <defaults>
</compile_context>

<pallas_src>
import jax
import jax.numpy as jnp
from jax import lax
from jax.experimental import pallas as pl
from jax.experimental.pallas import tpu as pltpu


def _fpn_kernel(xm_ref, xp_ref, xn_ref, skm_ref, skp_ref, skn_ref,
                w1_ref, b1_ref, w3_ref, out_ref):
    # xm_ref : [THc, W2, P]   coarse-row x tile (W already 2x-replicated)
    # xp_ref : [1,   W2, P]   coarse row just above the tile (clamped at border)
    # xn_ref : [1,   W2, P]   coarse row just below the tile (clamped at border)
    # skm_ref: [TH2, W2, S]   skip rows of the tile
    # skp_ref: [1,   W2, S]   skip row just above the tile (clamped)
    # skn_ref: [1,   W2, S]   skip row just below the tile (clamped)
    # w1_ref : [S, P]  bf16   skip_conv weight (in, out)
    # b1_ref : [1, P]  f32    skip_conv bias
    # w3_ref : [3, 3, P, P] bf16  afterup_conv weight (kh, kw, in, out)
    # out_ref: [TH2, W2, P]
    TH2, W2, P = out_ref.shape
    THc = xm_ref.shape[0]
    S = skm_ref.shape[2]
    Mh = (TH2 + 2) * W2
    f32, bf16 = jnp.float32, jnp.bfloat16

    w1 = w1_ref[...]
    b1 = b1_ref[...].astype(f32)

    # ---- 1x1 conv on skip (channels-in-lanes MXU matmul, f32 accumulation),
    # ---- bias, and fused add of the 2x nearest-upsampled x ------------------
    ym = jnp.dot(skm_ref[...].astype(bf16).reshape(TH2 * W2, S), w1,
                 preferred_element_type=f32) + b1                 # [TH2*W2, P]
    # H-direction 2x upsample = broadcast add over the (THc, 2) row-pair view.
    ym = (ym.reshape(THc, 2, W2, P)
          + xm_ref[...].astype(f32)[:, None]).reshape(TH2, W2, P)

    # Halo rows (the 3x3 conv's +-1 row neighbours).  Rows falling outside the
    # image are the conv's zero padding: scale the 1-row pieces by a scalar
    # 0/1 instead of masking the full tile.
    # NOTE: keyed off grid axis 1 being the row-tile axis (grid=(N, T)).
    t = pl.program_id(1)
    top_keep = jnp.where(t == 0, 0.0, 1.0)
    bot_keep = jnp.where(t == pl.num_programs(1) - 1, 0.0, 1.0)
    yt = (jnp.dot(skp_ref[0].astype(bf16), w1, preferred_element_type=f32)
          + b1 + xp_ref[0].astype(f32)) * top_keep                # [W2, P]
    yb = (jnp.dot(skn_ref[0].astype(bf16), w1, preferred_element_type=f32)
          + b1 + xn_ref[0].astype(f32)) * bot_keep                # [W2, P]
    y3 = jnp.concatenate([yt[None], ym, yb[None]], axis=0)        # [TH2+2,W2,P]

    # ---- 3x3 conv (padding=1) as 9 shifted bf16 MXU matmuls ----------------
    # Column (+-1) shifts: zero the opposite edge column, then XLU-roll the
    # flattened tile (the wrap artifact lands in the pre-zeroed column;
    # requires W2 >= 2).  Row (+-1) shifts: aligned slices at multiples of W2.
    col = lax.broadcasted_iota(jnp.int32, (W2, 1), 0)
    y_c = y3.reshape(Mh, P)
    y_l = jnp.where(col != 0, y3, 0.0).reshape(Mh, P)        # used for dw=+1
    y_r = jnp.where(col != W2 - 1, y3, 0.0).reshape(Mh, P)   # used for dw=-1

    acc = None
    for dw, base in ((0, y_c), (1, y_l), (-1, y_r)):
        yw = base if dw == 0 else pltpu.roll(base, (-dw) % Mh, axis=0)
        yw = yw.astype(bf16)                      # cast once per column shift
        for dh in (-1, 0, 1):
            start = (1 + dh) * W2                 # sublane-aligned row offset
            d = jnp.dot(yw[start:start + TH2 * W2], w3_ref[dh + 1, dw + 1],
                        preferred_element_type=f32)
            acc = d if acc is None else acc + d   # init from the first tap

    out_ref[...] = acc.reshape(TH2, W2, P).astype(out_ref.dtype)


def _vmem_capacity_bytes():
    try:
        info = pltpu.get_tpu_info()
        cap = getattr(info, "vmem_capacity_bytes", None)
        if cap:
            return int(cap)
    except Exception:
        pass
    return 64 << 20                               # conservative (v7x-sized)


def _pick_tile_rows(H2, W2, P, S, N):
    """Largest even divisor of H2 whose per-grid-step VMEM footprint (double-
    buffered input/output/weight blocks + in-kernel temporaries) fits a
    generation-aware budget; keeps >=2 parallel grid steps when N == 1."""
    cap = _vmem_capacity_bytes()
    budget = (48 << 20) if cap >= (96 << 20) else (22 << 20)
    wbytes = 2 * (2 * (S * P + 9 * P * P) + 4 * P)     # bf16 w1/w3 + f32 b1, x2
    best = 2
    for th2 in range(2, H2 + 1, 2):
        if H2 % th2:
            continue
        thc = th2 // 2
        dma = 2 * 4 * ((thc + 2) * W2 * P + (th2 + 2) * W2 * S)   # inputs, x2 buf
        dma += 2 * 4 * th2 * W2 * P                               # output, x2 buf
        tmp = 6 * 4 * (th2 + 2) * W2 * P                          # f32/bf16 temps
        if dma + tmp + wbytes <= budget:
            best = th2
    if N == 1 and H2 // best == 1:                 # v7x megacore: want >=2 steps
        half = best // 2
        if half >= 2 and half % 2 == 0 and H2 % half == 0:
            best = half
    return best


def fpn_block_forward(x_nchw, skip_nchw, w1, b1, w3, *, tile_rows=None):
    """x_nchw: [N,P,H,W], skip_nchw: [N,S,2H,2W], w1: [P,S,1,1], b1: [P],
    w3: [P,P,3,3].  Returns [N,P,2H,2W] (NCHW), matching the PyTorch module."""
    N, P, H, W = x_nchw.shape
    S = skip_nchw.shape[1]
    H2, W2 = 2 * H, 2 * W

    TH2 = tile_rows if tile_rows is not None else _pick_tile_rows(H2, W2, P, S, N)
    assert H2 % TH2 == 0 and TH2 % 2 == 0, "tile_rows must be an even divisor"
    T = H2 // TH2
    THc = TH2 // 2

    # Layout glue (vanishes if the surrounding model is kept NHWC).
    x_nhwc = jnp.transpose(x_nchw, (0, 2, 3, 1))            # [N, H,  W,  P]
    skip_nhwc = jnp.transpose(skip_nchw, (0, 2, 3, 1))      # [N, H2, W2, S]
    # W-direction nearest replication of x (wrapper-side; see TODO at top).
    xw = jnp.repeat(x_nhwc, 2, axis=2)                      # [N, H,  W2, P]

    # Weights: re-layout + bf16 cast once (not per grid step).
    w1_k = jnp.transpose(w1[:, :, 0, 0], (1, 0)).astype(jnp.bfloat16)   # [S, P]
    b1_k = b1.reshape(1, P).astype(jnp.float32)                         # [1, P]
    w3_k = jnp.transpose(w3, (2, 3, 1, 0)).astype(jnp.bfloat16)         # [3,3,Pi,Po]

    def tile_map(n, t):                          # main tile (block indices)
        return (n, t, 0, 0)

    def row_above(rows):                         # 1-row halo above, clamped
        return lambda n, t: (n, jnp.maximum(t * rows - 1, 0), 0, 0)

    def row_below(rows, limit):                  # 1-row halo below, clamped
        return lambda n, t: (n, jnp.minimum(t * rows + rows, limit - 1), 0, 0)

    flops = 2 * N * H2 * W2 * (S * P + 9 * P * P)
    bytes_accessed = (4 * (xw.size + skip_nhwc.size + N * H2 * W2 * P)
                      + 2 * (w1_k.size + w3_k.size) + 4 * b1_k.size)
    cap = _vmem_capacity_bytes()
    vmem_limit = (100 << 20) if cap >= (96 << 20) else (52 << 20)

    out_nhwc = pl.pallas_call(
        _fpn_kernel,
        out_shape=jax.ShapeDtypeStruct((N, H2, W2, P), x_nchw.dtype),
        grid_spec=pltpu.PrefetchScalarGridSpec(
            num_scalar_prefetch=0,
            grid=(N, T),
            in_specs=[
                pl.BlockSpec((None, THc, W2, P), tile_map),
                pl.BlockSpec((None, 1, W2, P), row_above(THc)),
                pl.BlockSpec((None, 1, W2, P), row_below(THc, H)),
                pl.BlockSpec((None, TH2, W2, S), tile_map),
                pl.BlockSpec((None, 1, W2, S), row_above(TH2)),
                pl.BlockSpec((None, 1, W2, S), row_below(TH2, H2)),
                pl.BlockSpec((S, P), lambda n, t: (0, 0)),
                pl.BlockSpec((1, P), lambda n, t: (0, 0)),
                pl.BlockSpec((3, 3, P, P), lambda n, t: (0, 0, 0, 0)),
            ],
            out_specs=pl.BlockSpec((None, TH2, W2, P), tile_map),
        ),
        compiler_params=pltpu.CompilerParams(
            dimension_semantics=("parallel", "parallel"),
            vmem_limit_bytes=vmem_limit,
        ),
        cost_estimate=pl.CostEstimate(
            flops=int(flops), transcendentals=0,
            bytes_accessed=int(bytes_accessed)),
    )(xw, xw, xw, skip_nhwc, skip_nhwc, skip_nhwc, w1_k, b1_k, w3_k)

    return jnp.transpose(out_nhwc, (0, 3, 1, 2))             # back to NCHW


def _reference_forward(x, skip, w1, b1, w3):
    # pure-JAX f32 reference matching the PyTorch module (NCHW throughout)
    xu = jnp.repeat(jnp.repeat(x, 2, axis=2), 2, axis=3)
    s = lax.conv_general_dilated(
        skip, w1, window_strides=(1, 1), padding="VALID",
        dimension_numbers=("NCHW", "OIHW", "NCHW"))
    s = s + b1[None, :, None, None]
    y = xu + s
    return lax.conv_general_dilated(
        y, w3, window_strides=(1, 1), padding=((1, 1), (1, 1)),
        dimension_numbers=("NCHW", "OIHW", "NCHW"))


def _run_case(key, N, P, S, H, W, tile_rows=None):
    k1, k2, k3, k4, k5 = jax.random.split(key, 5)
    x = jax.random.normal(k1, (N, P, H, W), jnp.float32)
    skip = jax.random.normal(k2, (N, S, 2 * H, 2 * W), jnp.float32)
    w1 = jax.random.normal(k3, (P, S, 1, 1), jnp.float32) * 0.1
    b1 = jax.random.normal(k4, (P,), jnp.float32) * 0.1
    w3 = jax.random.normal(k5, (P, P, 3, 3), jnp.float32) * 0.1

    out = fpn_block_forward(x, skip, w1, b1, w3, tile_rows=tile_rows)
    jax.block_until_ready(out)

    ref = _reference_forward(x, skip, w1, b1, w3)
    assert out.shape == (N, P, 2 * H, 2 * W)
    # bf16 MXU inputs -> tolerance loosened vs the pure-f32 reference.
    err = float(jnp.max(jnp.abs(out - ref)))
    assert jnp.allclose(out, ref, atol=5e-2, rtol=5e-2), (
        f"mismatch vs reference; max abs err = {err}")


if __name__ == "__main__":
    key = jax.random.PRNGKey(0)
    k_a, k_b = jax.random.split(key)
    # single whole-image row tile per batch element (t==0 is also the last tile)
    _run_case(k_a, N=2, P=8, S=4, H=8, W=8)
    # two halo'd row tiles -> exercises the clamped 1-row halo BlockSpecs
    _run_case(k_b, N=1, P=16, S=8, H=16, W=16, tile_rows=16)
    print("KERNEL_OK")
</pallas_src>

<mosaic_0001>
module attributes {stable_mosaic.version = 11 : i64} {
  func.func @_fpn_kernel(%arg0: i32, %arg1: i32, %arg2: memref<1x8x16x8xf32, #tpu.memory_space<vmem>>, %arg3: memref<1x1x16x8xf32, #tpu.memory_space<vmem>>, %arg4: memref<1x1x16x8xf32, #tpu.memory_space<vmem>>, %arg5: memref<1x16x16x4xf32, #tpu.memory_space<vmem>>, %arg6: memref<1x1x16x4xf32, #tpu.memory_space<vmem>>, %arg7: memref<1x1x16x4xf32, #tpu.memory_space<vmem>>, %arg8: memref<4x8xbf16, #tpu.memory_space<vmem>>, %arg9: memref<1x8xf32, #tpu.memory_space<vmem>>, %arg10: memref<3x3x8x8xbf16, #tpu.memory_space<vmem>>, %arg11: memref<1x16x16x8xf32, #tpu.memory_space<vmem>>) attributes {dimension_semantics = [#tpu.dimension_semantics<parallel>, #tpu.dimension_semantics<parallel>], iteration_bounds = array<i64: 2, 1>, scalar_prefetch = 0 : i64, scratch_operands = 0 : i64, tpu.core_type = #tpu.core_type<tc>, window_params = [{transform_indices = @transform_0, window_bounds = array<i64: 1, 8, 16, 8>}, {transform_indices = @transform_1, window_bounds = array<i64: 1, 1, 16, 8>}, {transform_indices = @transform_2, window_bounds = array<i64: 1, 1, 16, 8>}, {transform_indices = @transform_3, window_bounds = array<i64: 1, 16, 16, 4>}, {transform_indices = @transform_4, window_bounds = array<i64: 1, 1, 16, 4>}, {transform_indices = @transform_5, window_bounds = array<i64: 1, 1, 16, 4>}, {pipeline_mode = #tpu.pipeline_mode<synchronous>, transform_indices = @transform_6, window_bounds = array<i64: 4, 8>}, {pipeline_mode = #tpu.pipeline_mode<synchronous>, transform_indices = @transform_7, window_bounds = array<i64: 1, 8>}, {pipeline_mode = #tpu.pipeline_mode<synchronous>, transform_indices = @transform_8, window_bounds = array<i64: 3, 3, 8, 8>}, {transform_indices = @transform_9, window_bounds = array<i64: 1, 16, 16, 8>}]} {
    %c0 = arith.constant 0 : index
    %c0_0 = arith.constant 0 : index
    %0 = vector.load %arg8[%c0, %c0_0] : memref<4x8xbf16, #tpu.memory_space<vmem>>, vector<4x8xbf16>
    %c0_1 = arith.constant 0 : index
    %c0_2 = arith.constant 0 : index
    %1 = vector.load %arg9[%c0_1, %c0_2] : memref<1x8xf32, #tpu.memory_space<vmem>>, vector<1x8xf32>
    %c0_3 = arith.constant 0 : index
    %c0_4 = arith.constant 0 : index
    %c0_5 = arith.constant 0 : index
    %c0_6 = arith.constant 0 : index
    %2 = vector.load %arg5[%c0_3, %c0_4, %c0_5, %c0_6] : memref<1x16x16x4xf32, #tpu.memory_space<vmem>>, vector<1x16x16x4xf32>
    %3 = vector.shape_cast %2 : vector<1x16x16x4xf32> to vector<16x16x4xf32>
    %4 = arith.truncf %3 : vector<16x16x4xf32> to vector<16x16x4xbf16>
    %5 = vector.shape_cast %4 : vector<16x16x4xbf16> to vector<256x4xbf16>
    %cst = arith.constant dense<0.000000e+00> : vector<256x8xf32>
    %6 = tpu.matmul %5, %0, %cst {dimension_numbers = #tpu.dot_dimension_numbers<[1], [0], [0], [1], [0, 0, 1, 1], [], []>} : vector<256x4xbf16>, vector<4x8xbf16>, vector<256x8xf32> -> vector<256x8xf32>
    %7 = vector.broadcast %1 : vector<1x8xf32> to vector<256x8xf32>
    %8 = arith.addf %6, %7 : vector<256x8xf32>
    %9 = vector.shape_cast %8 : vector<256x8xf32> to vector<8x2x16x8xf32>
    %c0_7 = arith.constant 0 : index
    %c0_8 = arith.constant 0 : index
    %c0_9 = arith.constant 0 : index
    %c0_10 = arith.constant 0 : index
    %10 = vector.load %arg2[%c0_7, %c0_8, %c0_9, %c0_10] : memref<1x8x16x8xf32, #tpu.memory_space<vmem>>, vector<1x8x16x8xf32>
    %11 = vector.shape_cast %10 : vector<1x8x16x8xf32> to vector<8x16x8xf32>
    %12 = vector.shape_cast %11 : vector<8x16x8xf32> to vector<8x1x16x8xf32>
    %13 = vector.broadcast %12 : vector<8x1x16x8xf32> to vector<8x2x16x8xf32>
    %14 = arith.addf %9, %13 : vector<8x2x16x8xf32>
    %15 = vector.shape_cast %14 : vector<8x2x16x8xf32> to vector<16x16x8xf32>
    %c0_i32 = arith.constant 0 : i32
    %16 = arith.cmpi eq, %arg1, %c0_i32 : i32
    %cst_11 = arith.constant 0.000000e+00 : f32
    %cst_12 = arith.constant 1.000000e+00 : f32
    %17 = arith.select %16, %cst_11, %cst_12 : f32
    %c0_i32_13 = arith.constant 0 : i32
    %18 = arith.cmpi eq, %arg1, %c0_i32_13 : i32
    %cst_14 = arith.constant 0.000000e+00 : f32
    %cst_15 = arith.constant 1.000000e+00 : f32
    %19 = arith.select %18, %cst_14, %cst_15 : f32
    %c0_16 = arith.constant 0 : index
    %c0_17 = arith.constant 0 : index
    %c0_18 = arith.constant 0 : index
    %c0_19 = arith.constant 0 : index
    %20 = vector.load %arg6[%c0_16, %c0_17, %c0_18, %c0_19] : memref<1x1x16x4xf32, #tpu.memory_space<vmem>>, vector<1x1x16x4xf32>
    %21 = vector.shape_cast %20 : vector<1x1x16x4xf32> to vector<16x4xf32>
    %22 = arith.truncf %21 : vector<16x4xf32> to vector<16x4xbf16>
    %cst_20 = arith.constant dense<0.000000e+00> : vector<16x8xf32>
    %23 = tpu.matmul %22, %0, %cst_20 {dimension_numbers = #tpu.dot_dimension_numbers<[1], [0], [0], [1], [0, 0, 1, 1], [], []>} : vector<16x4xbf16>, vector<4x8xbf16>, vector<16x8xf32> -> vector<16x8xf32>
    %24 = vector.broadcast %1 : vector<1x8xf32> to vector<16x8xf32>
    %25 = arith.addf %23, %24 : vector<16x8xf32>
    %c0_21 = arith.constant 0 : index
    %c0_22 = arith.constant 0 : index
    %c0_23 = arith.constant 0 : index
    %c0_24 = arith.constant 0 : index
    %26 = vector.load %arg3[%c0_21, %c0_22, %c0_23, %c0_24] : memref<1x1x16x8xf32, #tpu.memory_space<vmem>>, vector<1x1x16x8xf32>
    %27 = vector.shape_cast %26 : vector<1x1x16x8xf32> to vector<16x8xf32>
    %28 = arith.addf %25, %27 : vector<16x8xf32>
    %29 = vector.broadcast %17 : f32 to vector<16x8xf32>
    %30 = arith.mulf %28, %29 : vector<16x8xf32>
    %c0_25 = arith.constant 0 : index
    %c0_26 = arith.constant 0 : index
    %c0_27 = arith.constant 0 : index
    %c0_28 = arith.constant 0 : index
    %31 = vector.load %arg7[%c0_25, %c0_26, %c0_27, %c0_28] : memref<1x1x16x4xf32, #tpu.memory_space<vmem>>, vector<1x1x16x4xf32>
    %32 = vector.shape_cast %31 : vector<1x1x16x4xf32> to vector<16x4xf32>
    %33 = arith.truncf %32 : vector<16x4xf32> to vector<16x4xbf16>
    %cst_29 = arith.constant dense<0.000000e+00> : vector<16x8xf32>
    %34 = tpu.matmul %33, %0, %cst_29 {dimension_numbers = #tpu.dot_dimension_numbers<[1], [0], [0], [1], [0, 0, 1, 1], [], []>} : vector<16x4xbf16>, vector<4x8xbf16>, vector<16x8xf32> -> vector<16x8xf32>
    %35 = vector.broadcast %1 : vector<1x8xf32> to vector<16x8xf32>
    %36 = arith.addf %34, %35 : vector<16x8xf32>
    %c0_30 = arith.constant 0 : index
    %c0_31 = arith.constant 0 : index
    %c0_32 = arith.constant 0 : index
    %c0_33 = arith.constant 0 : index
    %37 = vector.load %arg4[%c0_30, %c0_31, %c0_32, %c0_33] : memref<1x1x16x8xf32, #tpu.memory_space<vmem>>, vector<1x1x16x8xf32>
    %38 = vector.shape_cast %37 : vector<1x1x16x8xf32> to vector<16x8xf32>
    %39 = arith.addf %36, %38 : vector<16x8xf32>
    %40 = vector.broadcast %19 : f32 to vector<16x8xf32>
    %41 = arith.mulf %39, %40 : vector<16x8xf32>
    %42 = vector.shape_cast %30 : vector<16x8xf32> to vector<1x16x8xf32>
    %43 = vector.shape_cast %41 : vector<16x8xf32> to vector<1x16x8xf32>
    %44 = tpu.concatenate %42, %15, %43 in 0 : vector<1x16x8xf32>, vector<16x16x8xf32>, vector<1x16x8xf32> -> vector<18x16x8xf32>
    %45 = tpu.iota {dimensions = array<i32: 0>} : vector<16x1xi32>
    %46 = vector.shape_cast %44 : vector<18x16x8xf32> to vector<288x8xf32>
    %c0_i32_34 = arith.constant 0 : i32
    %47 = vector.broadcast %c0_i32_34 : i32 to vector<16x1xi32>
    %48 = arith.cmpi ne, %45, %47 : vector<16x1xi32>
    %cst_35 = arith.constant 0.000000e+00 : f32
    %49 = vector.shape_cast %48 : vector<16x1xi1> to vector<1x16x1xi1>
    %50 = vector.broadcast %49 : vector<1x16x1xi1> to vector<18x16x8xi1>
    %51 = vector.broadcast %cst_35 : f32 to vector<18x16x8xf32>
    %52 = arith.select %50, %44, %51 : vector<18x16x8xi1>, vector<18x16x8xf32>
    %53 = vector.shape_cast %52 : vector<18x16x8xf32> to vector<288x8xf32>
    %c15_i32 = arith.constant 15 : i32
    %54 = vector.broadcast %c15_i32 : i32 to vector<16x1xi32>
    %55 = arith.cmpi ne, %45, %54 : vector<16x1xi32>
    %cst_36 = arith.constant 0.000000e+00 : f32
    %56 = vector.shape_cast %55 : vector<16x1xi1> to vector<1x16x1xi1>
    %57 = vector.broadcast %56 : vector<1x16x1xi1> to vector<18x16x8xi1>
    %58 = vector.broadcast %cst_36 : f32 to vector<18x16x8xf32>
    %59 = arith.select %57, %44, %58 : vector<18x16x8xi1>, vector<18x16x8xf32>
    %60 = vector.shape_cast %59 : vector<18x16x8xf32> to vector<288x8xf32>
    %61 = arith.truncf %46 : vector<288x8xf32> to vector<288x8xbf16>
    %62 = vector.extract_strided_slice %61 {offsets = [0, 0], sizes = [256, 8], strides = [1, 1]} : vector<288x8xbf16> to vector<256x8xbf16>
    %c0_37 = arith.constant 0 : index
    %c1 = arith.constant 1 : index
    %c0_38 = arith.constant 0 : index
    %c0_39 = arith.constant 0 : index
    %63 = vector.load %arg10[%c0_37, %c1, %c0_38, %c0_39] : memref<3x3x8x8xbf16, #tpu.memory_space<vmem>>, vector<1x1x8x8xbf16>
    %64 = vector.shape_cast %63 : vector<1x1x8x8xbf16> to vector<8x8xbf16>
    %cst_40 = arith.constant dense<0.000000e+00> : vector<256x8xf32>
    %65 = tpu.matmul %62, %64, %cst_40 {dimension_numbers = #tpu.dot_dimension_numbers<[1], [0], [0], [1], [0, 0, 1, 1], [], []>} : vector<256x8xbf16>, vector<8x8xbf16>, vector<256x8xf32> -> vector<256x8xf32>
    %66 = vector.extract_strided_slice %61 {offsets = [16, 0], sizes = [256, 8], strides = [1, 1]} : vector<288x8xbf16> to vector<256x8xbf16>
    %c1_41 = arith.constant 1 : index
    %c1_42 = arith.constant 1 : index
    %c0_43 = arith.constant 0 : index
    %c0_44 = arith.constant 0 : index
    %67 = vector.load %arg10[%c1_41, %c1_42, %c0_43, %c0_44] : memref<3x3x8x8xbf16, #tpu.memory_space<vmem>>, vector<1x1x8x8xbf16>
    %68 = vector.shape_cast %67 : vector<1x1x8x8xbf16> to vector<8x8xbf16>
    %cst_45 = arith.constant dense<0.000000e+00> : vector<256x8xf32>
    %69 = tpu.matmul %66, %68, %cst_45 {dimension_numbers = #tpu.dot_dimension_numbers<[1], [0], [0], [1], [0, 0, 1, 1], [], []>} : vector<256x8xbf16>, vector<8x8xbf16>, vector<256x8xf32> -> vector<256x8xf32>
    %70 = arith.addf %65, %69 : vector<256x8xf32>
    %71 = vector.extract_strided_slice %61 {offsets = [32, 0], sizes = [256, 8], strides = [1, 1]} : vector<288x8xbf16> to vector<256x8xbf16>
    %c2 = arith.constant 2 : index
    %c1_46 = arith.constant 1 : index
    %c0_47 = arith.constant 0 : index
    %c0_48 = arith.constant 0 : index
    %72 = vector.load %arg10[%c2, %c1_46, %c0_47, %c0_48] : memref<3x3x8x8xbf16, #tpu.memory_space<vmem>>, vector<1x1x8x8xbf16>
    %73 = vector.shape_cast %72 : vector<1x1x8x8xbf16> to vector<8x8xbf16>
    %cst_49 = arith.constant dense<0.000000e+00> : vector<256x8xf32>
    %74 = tpu.matmul %71, %73, %cst_49 {dimension_numbers = #tpu.dot_dimension_numbers<[1], [0], [0], [1], [0, 0, 1, 1], [], []>} : vector<256x8xbf16>, vector<8x8xbf16>, vector<256x8xf32> -> vector<256x8xf32>
    %75 = arith.addf %70, %74 : vector<256x8xf32>
    %c287_i32 = arith.constant 287 : i32
    %76 = tpu.dynamic_rotate %53 by %c287_i32 dim 0 : vector<288x8xf32>, i32 -> vector<288x8xf32>
    %77 = arith.truncf %76 : vector<288x8xf32> to vector<288x8xbf16>
    %78 = vector.extract_strided_slice %77 {offsets = [0, 0], sizes = [256, 8], strides = [1, 1]} : vector<288x8xbf16> to vector<256x8xbf16>
    %c0_50 = arith.constant 0 : index
    %c2_51 = arith.constant 2 : index
    %c0_52 = arith.constant 0 : index
    %c0_53 = arith.constant 0 : index
    %79 = vector.load %arg10[%c0_50, %c2_51, %c0_52, %c0_53] : memref<3x3x8x8xbf16, #tpu.memory_space<vmem>>, vector<1x1x8x8xbf16>
    %80 = vector.shape_cast %79 : vector<1x1x8x8xbf16> to vector<8x8xbf16>
    %cst_54 = arith.constant dense<0.000000e+00> : vector<256x8xf32>
    %81 = tpu.matmul %78, %80, %cst_54 {dimension_numbers = #tpu.dot_dimension_numbers<[1], [0], [0], [1], [0, 0, 1, 1], [], []>} : vector<256x8xbf16>, vector<8x8xbf16>, vector<256x8xf32> -> vector<256x8xf32>
    %82 = arith.addf %75, %81 : vector<256x8xf32>
    %83 = vector.extract_strided_slice %77 {offsets = [16, 0], sizes = [256, 8], strides = [1, 1]} : vector<288x8xbf16> to vector<256x8xbf16>
    %c1_55 = arith.constant 1 : index
    %c2_56 = arith.constant 2 : index
    %c0_57 = arith.constant 0 : index
    %c0_58 = arith.constant 0 : index
    %84 = vector.load %arg10[%c1_55, %c2_56, %c0_57, %c0_58] : memref<3x3x8x8xbf16, #tpu.memory_space<vmem>>, vector<1x1x8x8xbf16>
    %85 = vector.shape_cast %84 : vector<1x1x8x8xbf16> to vector<8x8xbf16>
    %cst_59 = arith.constant dense<0.000000e+00> : vector<256x8xf32>
    %86 = tpu.matmul %83, %85, %cst_59 {dimension_numbers = #tpu.dot_dimension_numbers<[1], [0], [0], [1], [0, 0, 1, 1], [], []>} : vector<256x8xbf16>, vector<8x8xbf16>, vector<256x8xf32> -> vector<256x8xf32>
    %87 = arith.addf %82, %86 : vector<256x8xf32>
    %88 = vector.extract_strided_slice %77 {offsets = [32, 0], sizes = [256, 8], strides = [1, 1]} : vector<288x8xbf16> to vector<256x8xbf16>
    %c2_60 = arith.constant 2 : index
    %c2_61 = arith.constant 2 : index
    %c0_62 = arith.constant 0 : index
    %c0_63 = arith.constant 0 : index
    %89 = vector.load %arg10[%c2_60, %c2_61, %c0_62, %c0_63] : memref<3x3x8x8xbf16, #tpu.memory_space<vmem>>, vector<1x1x8x8xbf16>
    %90 = vector.shape_cast %89 : vector<1x1x8x8xbf16> to vector<8x8xbf16>
    %cst_64 = arith.constant dense<0.000000e+00> : vector<256x8xf32>
    %91 = tpu.matmul %88, %90, %cst_64 {dimension_numbers = #tpu.dot_dimension_numbers<[1], [0], [0], [1], [0, 0, 1, 1], [], []>} : vector<256x8xbf16>, vector<8x8xbf16>, vector<256x8xf32> -> vector<256x8xf32>
    %92 = arith.addf %87, %91 : vector<256x8xf32>
    %c1_i32 = arith.constant 1 : i32
    %93 = tpu.dynamic_rotate %60 by %c1_i32 dim 0 : vector<288x8xf32>, i32 -> vector<288x8xf32>
    %94 = arith.truncf %93 : vector<288x8xf32> to vector<288x8xbf16>
    %95 = vector.extract_strided_slice %94 {offsets = [0, 0], sizes = [256, 8], strides = [1, 1]} : vector<288x8xbf16> to vector<256x8xbf16>
    %c0_65 = arith.constant 0 : index
    %c0_66 = arith.constant 0 : index
    %c0_67 = arith.constant 0 : index
    %c0_68 = arith.constant 0 : index
    %96 = vector.load %arg10[%c0_65, %c0_66, %c0_67, %c0_68] : memref<3x3x8x8xbf16, #tpu.memory_space<vmem>>, vector<1x1x8x8xbf16>
    %97 = vector.shape_cast %96 : vector<1x1x8x8xbf16> to vector<8x8xbf16>
    %cst_69 = arith.constant dense<0.000000e+00> : vector<256x8xf32>
    %98 = tpu.matmul %95, %97, %cst_69 {dimension_numbers = #tpu.dot_dimension_numbers<[1], [0], [0], [1], [0, 0, 1, 1], [], []>} : vector<256x8xbf16>, vector<8x8xbf16>, vector<256x8xf32> -> vector<256x8xf32>
    %99 = arith.addf %92, %98 : vector<256x8xf32>
    %100 = vector.extract_strided_slice %94 {offsets = [16, 0], sizes = [256, 8], strides = [1, 1]} : vector<288x8xbf16> to vector<256x8xbf16>
    %c1_70 = arith.constant 1 : index
    %c0_71 = arith.constant 0 : index
    %c0_72 = arith.constant 0 : index
    %c0_73 = arith.constant 0 : index
    %101 = vector.load %arg10[%c1_70, %c0_71, %c0_72, %c0_73] : memref<3x3x8x8xbf16, #tpu.memory_space<vmem>>, vector<1x1x8x8xbf16>
    %102 = vector.shape_cast %101 : vector<1x1x8x8xbf16> to vector<8x8xbf16>
    %cst_74 = arith.constant dense<0.000000e+00> : vector<256x8xf32>
    %103 = tpu.matmul %100, %102, %cst_74 {dimension_numbers = #tpu.dot_dimension_numbers<[1], [0], [0], [1], [0, 0, 1, 1], [], []>} : vector<256x8xbf16>, vector<8x8xbf16>, vector<256x8xf32> -> vector<256x8xf32>
    %104 = arith.addf %99, %103 : vector<256x8xf32>
    %105 = vector.extract_strided_slice %94 {offsets = [32, 0], sizes = [256, 8], strides = [1, 1]} : vector<288x8xbf16> to vector<256x8xbf16>
    %c2_75 = arith.constant 2 : index
    %c0_76 = arith.constant 0 : index
    %c0_77 = arith.constant 0 : index
    %c0_78 = arith.constant 0 : index
    %106 = vector.load %arg10[%c2_75, %c0_76, %c0_77, %c0_78] : memref<3x3x8x8xbf16, #tpu.memory_space<vmem>>, vector<1x1x8x8xbf16>
    %107 = vector.shape_cast %106 : vector<1x1x8x8xbf16> to vector<8x8xbf16>
    %cst_79 = arith.constant dense<0.000000e+00> : vector<256x8xf32>
    %108 = tpu.matmul %105, %107, %cst_79 {dimension_numbers = #tpu.dot_dimension_numbers<[1], [0], [0], [1], [0, 0, 1, 1], [], []>} : vector<256x8xbf16>, vector<8x8xbf16>, vector<256x8xf32> -> vector<256x8xf32>
    %109 = arith.addf %104, %108 : vector<256x8xf32>
    %110 = vector.shape_cast %109 : vector<256x8xf32> to vector<16x16x8xf32>
    %c0_80 = arith.constant 0 : index
    %c0_81 = arith.constant 0 : index
    %c0_82 = arith.constant 0 : index
    %c0_83 = arith.constant 0 : index
    %111 = vector.load %arg11[%c0_80, %c0_81, %c0_82, %c0_83] : memref<1x16x16x8xf32, #tpu.memory_space<vmem>>, vector<1x16x16x8xf32>
    %112 = vector.shape_cast %111 : vector<1x16x16x8xf32> to vector<16x16x8xf32>
    %113 = vector.shape_cast %110 : vector<16x16x8xf32> to vector<1x16x16x8xf32>
    tpu.vector_store %arg11[%c0_80, %c0_81, %c0_82, %c0_83], %113 {strides = array<i32>} : memref<1x16x16x8xf32, #tpu.memory_space<vmem>>, vector<1x16x16x8xf32>,
    return
  }
  func.func @transform_0(%arg0: i32, %arg1: i32) -> (i32, i32, i32, i32) {
    %c0_i32 = arith.constant 0 : i32
    %c0_i32_0 = arith.constant 0 : i32
    %c0_i32_1 = arith.constant 0 : i32
    return %arg0, %arg1, %c0_i32, %c0_i32_0 : i32, i32, i32, i32
  }
  func.func @transform_1(%arg0: i32, %arg1: i32) -> (i32, i32, i32, i32) {
    %c8_i32 = arith.constant 8 : i32
    %0 = arith.muli %arg1, %c8_i32 : i32
    %c1_i32 = arith.constant 1 : i32
    %1 = arith.subi %0, %c1_i32 : i32
    %c0_i32 = arith.constant 0 : i32
    %2 = arith.maxsi %1, %c0_i32 : i32
    %c0_i32_0 = arith.constant 0 : i32
    %c0_i32_1 = arith.constant 0 : i32
    %c0_i32_2 = arith.constant 0 : i32
    return %arg0, %2, %c0_i32_0, %c0_i32_1 : i32, i32, i32, i32
  }
  func.func @transform_2(%arg0: i32, %arg1: i32) -> (i32, i32, i32, i32) {
    %c8_i32 = arith.constant 8 : i32
    %0 = arith.muli %arg1, %c8_i32 : i32
    %c8_i32_0 = arith.constant 8 : i32
    %1 = arith.addi %0, %c8_i32_0 : i32
    %c7_i32 = arith.constant 7 : i32
    %2 = arith.minsi %1, %c7_i32 : i32
    %c0_i32 = arith.constant 0 : i32
    %c0_i32_1 = arith.constant 0 : i32
    %c0_i32_2 = arith.constant 0 : i32
    return %arg0, %2, %c0_i32, %c0_i32_1 : i32, i32, i32, i32
  }
  func.func @transform_3(%arg0: i32, %arg1: i32) -> (i32, i32, i32, i32) {
    %c0_i32 = arith.constant 0 : i32
    %c0_i32_0 = arith.constant 0 : i32
    %c0_i32_1 = arith.constant 0 : i32
    return %arg0, %arg1, %c0_i32, %c0_i32_0 : i32, i32, i32, i32
  }
  func.func @transform_4(%arg0: i32, %arg1: i32) -> (i32, i32, i32, i32) {
    %c16_i32 = arith.constant 16 : i32
    %0 = arith.muli %arg1, %c16_i32 : i32
    %c1_i32 = arith.constant 1 : i32
    %1 = arith.subi %0, %c1_i32 : i32
    %c0_i32 = arith.constant 0 : i32
    %2 = arith.maxsi %1, %c0_i32 : i32
    %c0_i32_0 = arith.constant 0 : i32
    %c0_i32_1 = arith.constant 0 : i32
    %c0_i32_2 = arith.constant 0 : i32
    return %arg0, %2, %c0_i32_0, %c0_i32_1 : i32, i32, i32, i32
  }
  func.func @transform_5(%arg0: i32, %arg1: i32) -> (i32, i32, i32, i32) {
    %c16_i32 = arith.constant 16 : i32
    %0 = arith.muli %arg1, %c16_i32 : i32
    %c16_i32_0 = arith.constant 16 : i32
    %1 = arith.addi %0, %c16_i32_0 : i32
    %c15_i32 = arith.constant 15 : i32
    %2 = arith.minsi %1, %c15_i32 : i32
    %c0_i32 = arith.constant 0 : i32
    %c0_i32_1 = arith.constant 0 : i32
    %c0_i32_2 = arith.constant 0 : i32
    return %arg0, %2, %c0_i32, %c0_i32_1 : i32, i32, i32, i32
  }
  func.func @transform_6(%arg0: i32, %arg1: i32) -> (i32, i32) {
    %c0_i32 = arith.constant 0 : i32
    %c0_i32_0 = arith.constant 0 : i32
    %c0_i32_1 = arith.constant 0 : i32
    return %c0_i32, %c0_i32_0 : i32, i32
  }
  func.func @transform_7(%arg0: i32, %arg1: i32) -> (i32, i32) {
    %c0_i32 = arith.constant 0 : i32
    %c0_i32_0 = arith.constant 0 : i32
    %c0_i32_1 = arith.constant 0 : i32
    return %c0_i32, %c0_i32_0 : i32, i32
  }
  func.func @transform_8(%arg0: i32, %arg1: i32) -> (i32, i32, i32, i32) {
    %c0_i32 = arith.constant 0 : i32
    %c0_i32_0 = arith.constant 0 : i32
    %c0_i32_1 = arith.constant 0 : i32
    %c0_i32_2 = arith.constant 0 : i32
    %c0_i32_3 = arith.constant 0 : i32
    return %c0_i32, %c0_i32_0, %c0_i32_1, %c0_i32_2 : i32, i32, i32, i32
  }
  func.func @transform_9(%arg0: i32, %arg1: i32) -> (i32, i32, i32, i32) {
    %c0_i32 = arith.constant 0 : i32
    %c0_i32_0 = arith.constant 0 : i32
    %c0_i32_1 = arith.constant 0 : i32
    return %arg0, %arg1, %c0_i32, %c0_i32_0 : i32, i32, i32, i32
  }
}

</mosaic_0001>

<llo_original>
// kernel: tpu_custom_call.1
$region0: #{tpu_custom_call.1}
  #allocation0 [shape = 'u32[]', space=smem, size = 0x4, offset = 0x4, fixed_abs, tag = 'smem constant byte address 0x4 - core index']
  #allocation1 [shape = 'u32[144,128]{1,0:T(1,128)}', space=vmem, size = 0x12000, scoped, tag = 'internal scratch']
  %s0 = inlined_call_operand.vmem [shape: f32[2,8,16,8], index: 0, kind: input, shape index: {}]
  %s1 = inlined_call_operand.vmem [shape: f32[2,8,16,8], index: 1, kind: input, shape index: {}]
  %s2 = inlined_call_operand.vmem [shape: f32[2,8,16,8], index: 2, kind: input, shape index: {}]
  %s3 = inlined_call_operand.vmem [shape: f32[2,16,16,4], index: 3, kind: input, shape index: {}]
  %s4 = inlined_call_operand.vmem [shape: f32[2,16,16,4], index: 4, kind: input, shape index: {}]
  %s5 = inlined_call_operand.vmem [shape: f32[2,16,16,4], index: 5, kind: input, shape index: {}]
  %s6 = inlined_call_operand.vmem [shape: bf16[4,8], index: 6, kind: input, shape index: {}]
  %s7 = inlined_call_operand.vmem [shape: f32[1,8], index: 7, kind: input, shape index: {}]
  %s8 = inlined_call_operand.vmem [shape: bf16[3,3,8,8], index: 8, kind: input, shape index: {}]
  %s9 = inlined_call_operand.vmem [shape: f32[2,16,16,8], index: 9, kind: output, shape index: {}]
  %s10 = sld [smem:[#allocation0]]
  $region69: #{tpu_custom_call.1} parent=0
    _
  %s12 = ssub.s32 1, %s10
  %s13 = scalar_select 0, %s12, %s10
  loop: start=0, step=1, limit=4
  $region2: #{tpu_custom_call.1} parent=0 // loop_pre_header
    _
  $region3: #{tpu_custom_call.1} parent=0 // loop_header
    %s15 = sphi 0, %s19
    %p16 = scmp.ge.s32.totalorder %s15, 4
    %s22 = sphi 0, %s34
    %s23 = sphi 0, %s30
    %s24 = sphi 0, %s22
    %s25 = sphi 0, %s23
    %s26 = sphi 0, %s24
    %s27 = sphi 0, %s25
    %s39 = sphi 0, %s41
    %s42 = sphi 0, %s39
    %s43 = sphi 0, %s42
    %s59 = sphi 0, %s43
    %s75 = sphi 0, %s77
    %s78 = sphi 0, %s75
    %s79 = sphi 0, %s78
    %s95 = sphi 0, %s79
    %s111 = sphi 0, %s113
    %s114 = sphi 0, %s111
    %s115 = sphi 0, %s114
    %s131 = sphi 0, %s115
    %s139 = sphi 0, %s141
    %s142 = sphi 0, %s139
    %s143 = sphi 0, %s142
    %s159 = sphi 0, %s143
    %s175 = sphi 0, %s177
    %s178 = sphi 0, %s175
    %s179 = sphi 0, %s178
    %s195 = sphi 0, %s179
    %s211 = sphi 0, %s213
    %s214 = sphi 0, %s211
    %s215 = sphi 0, %s214
    %s231 = sphi 0, %s215
    %s235 = sphi 0, %s235
    %s237 = sphi 0, %s235
    %s238 = sphi 0, %s237
    %s252 = sphi 0, %s238
    %s256 = sphi 0, %s256
    %s258 = sphi 0, %s256
    %s259 = sphi 0, %s258
    %s273 = sphi 0, %s259
    %s277 = sphi 0, %s277
    %s279 = sphi 0, %s277
    %s280 = sphi 0, %s279
    %s294 = sphi 0, %s280
    %s302 = sphi 0, %s304
    %s305 = sphi 0, %s302
    %s306 = sphi 0, %s305
    %s322 = sphi 0, %s306
  $region4: #{tpu_custom_call.1} parent=0 // loop_header_branch
    %18 = sbr.rel (%p16) target = $region8
  $region5: #{tpu_custom_call.1} parent=0 // loop_body
    %s20 = ssub.s32 %s15, 1
    %s21 = ssub.s32 %s15, 2
    %s28 = sadd.s32 1, %s23
    %p29 = scmp.ge.s32.totalorder %s28, 1
    %s30 = scalar_select %p29, 0, %s28
    %s31 = sadd.s32 1, %s22
    %s32 = scalar_select %p29, %s31, %s22
    %p33 = scmp.ge.s32.totalorder %s32, 2
    %s34 = scalar_select %p33, 0, %s32
    %s35 = ssub.s32 %s22, %s34
    %s36 = ssub.s32 %s23, %s30
    %s37 = sor.u32 %s35, %s36
    %p38 = scmp.eq.s32.totalorder %s37, 0
    %s40 = sadd.s32 %s39, 1
    %s41 = scalar_select %p38, %s39, %s40
    %p44 = pneg %p38
    %p45 = scmp.eq.s32.totalorder %s15, 1
    %p46 = por %p44, %p45
    %p47 = scmp.ne.s32.totalorder %s39, %s42
    %p48 = scmp.eq.s32.totalorder %s15, 0
    %p49 = por %p47, %p48
    %p50 = scmp.ne.s32.totalorder %s39, %s42
    %p51 = scmp.eq.s32.totalorder %s20, 1
    %p52 = por %p50, %p51
    %p53 = scmp.ne.s32.totalorder %s42, %s43
    %p54 = scmp.eq.s32.totalorder %s20, 0
    %p55 = por %p53, %p54
    %p56 = scmp.ne.s32.totalorder %s42, %s43
    %p57 = scmp.eq.s32.totalorder %s21, 1
    %p58 = por %p56, %p57
    %p60 = scmp.ne.s32.totalorder %s43, %s59
    %p61 = scmp.eq.s32.totalorder %s21, 0
    %p62 = por %p60, %p61
    %s63 = smul.u32 %s23, 8
    %s64 = ssub.s32 %s63, 1
    %p65 = scmp.gt.s32.totalorder %s64, 0
    %s66 = scalar_select %p65, %s64, 0
    %s67 = smul.u32 %s30, 8
    %s68 = ssub.s32 %s67, 1
    %p69 = scmp.gt.s32.totalorder %s68, 0
    %s70 = scalar_select %p69, %s68, 0
    %s71 = ssub.s32 %s22, %s34
    %s72 = ssub.s32 %s66, %s70
    %s73 = sor.u32 %s71, %s72
    %p74 = scmp.eq.s32.totalorder %s73, 0
    %s76 = sadd.s32 %s75, 1
    %s77 = scalar_select %p74, %s75, %s76
    %p80 = pneg %p74
    %p81 = scmp.eq.s32.totalorder %s15, 1
    %p82 = por %p80, %p81
    %p83 = scmp.ne.s32.totalorder %s75, %s78
    %p84 = scmp.eq.s32.totalorder %s15, 0
    %p85 = por %p83, %p84
    %p86 = scmp.ne.s32.totalorder %s75, %s78
    %p87 = scmp.eq.s32.totalorder %s20, 1
    %p88 = por %p86, %p87
    %p89 = scmp.ne.s32.totalorder %s78, %s79
    %p90 = scmp.eq.s32.totalorder %s20, 0
    %p91 = por %p89, %p90
    %p92 = scmp.ne.s32.totalorder %s78, %s79
    %p93 = scmp.eq.s32.totalorder %s21, 1
    %p94 = por %p92, %p93
    %p96 = scmp.ne.s32.totalorder %s79, %s95
    %p97 = scmp.eq.s32.totalorder %s21, 0
    %p98 = por %p96, %p97
    %s99 = smul.u32 %s23, 8
    %s100 = sadd.s32 %s99, 8
    %p101 = scmp.lt.s32.totalorder %s100, 7
    %s102 = scalar_select %p101, %s100, 7
    %s103 = smul.u32 %s30, 8
    %s104 = sadd.s32 %s103, 8
    %p105 = scmp.lt.s32.totalorder %s104, 7
    %s106 = scalar_select %p105, %s104, 7
    %s107 = ssub.s32 %s22, %s34
    %s108 = ssub.s32 %s102, %s106
    %s109 = sor.u32 %s107, %s108
    %p110 = scmp.eq.s32.totalorder %s109, 0
    %s112 = sadd.s32 %s111, 1
    %s113 = scalar_select %p110, %s111, %s112
    %p116 = pneg %p110
    %p117 = scmp.eq.s32.totalorder %s15, 1
    %p118 = por %p116, %p117
    %p119 = scmp.ne.s32.totalorder %s111, %s114
    %p120 = scmp.eq.s32.totalorder %s15, 0
    %p121 = por %p119, %p120
    %p122 = scmp.ne.s32.totalorder %s111, %s114
    %p123 = scmp.eq.s32.totalorder %s20, 1
    %p124 = por %p122, %p123
    %p125 = scmp.ne.s32.totalorder %s114, %s115
    %p126 = scmp.eq.s32.totalorder %s20, 0
    %p127 = por %p125, %p126
    %p128 = scmp.ne.s32.totalorder %s114, %s115
    %p129 = scmp.eq.s32.totalorder %s21, 1
    %p130 = por %p128, %p129
    %p132 = scmp.ne.s32.totalorder %s115, %s131
    %p133 = scmp.eq.s32.totalorder %s21, 0
    %p134 = por %p132, %p133
    %s135 = ssub.s32 %s22, %s34
    %s136 = ssub.s32 %s23, %s30
    %s137 = sor.u32 %s135, %s136
    %p138 = scmp.eq.s32.totalorder %s137, 0
    %s140 = sadd.s32 %s139, 1
    %s141 = scalar_select %p138, %s139, %s140
    %p144 = pneg %p138
    %p145 = scmp.eq.s32.totalorder %s15, 1
    %p146 = por %p144, %p145
    %p147 = scmp.ne.s32.totalorder %s139, %s142
    %p148 = scmp.eq.s32.totalorder %s15, 0
    %p149 = por %p147, %p148
    %p150 = scmp.ne.s32.totalorder %s139, %s142
    %p151 = scmp.eq.s32.totalorder %s20, 1
    %p152 = por %p150, %p151
    %p153 = scmp.ne.s32.totalorder %s142, %s143
    %p154 = scmp.eq.s32.totalorder %s20, 0
    %p155 = por %p153, %p154
    %p156 = scmp.ne.s32.totalorder %s142, %s143
    %p157 = scmp.eq.s32.totalorder %s21, 1
    %p158 = por %p156, %p157
    %p160 = scmp.ne.s32.totalorder %s143, %s159
    %p161 = scmp.eq.s32.totalorder %s21, 0
    %p162 = por %p160, %p161
    %s163 = smul.u32 %s23, 16
    %s164 = ssub.s32 %s163, 1
    %p165 = scmp.gt.s32.totalorder %s164, 0
    %s166 = scalar_select %p165, %s164, 0
    %s167 = smul.u32 %s30, 16
    %s168 = ssub.s32 %s167, 1
    %p169 = scmp.gt.s32.totalorder %s168, 0
    %s170 = scalar_select %p169, %s168, 0
    %s171 = ssub.s32 %s22, %s34
    %s172 = ssub.s32 %s166, %s170
    %s173 = sor.u32 %s171, %s172
    %p174 = scmp.eq.s32.totalorder %s173, 0
    %s176 = sadd.s32 %s175, 1
    %s177 = scalar_select %p174, %s175, %s176
    %p180 = pneg %p174
    %p181 = scmp.eq.s32.totalorder %s15, 1
    %p182 = por %p180, %p181
    %p183 = scmp.ne.s32.totalorder %s175, %s178
    %p184 = scmp.eq.s32.totalorder %s15, 0
    %p185 = por %p183, %p184
    %p186 = scmp.ne.s32.totalorder %s175, %s178
    %p187 = scmp.eq.s32.totalorder %s20, 1
    %p188 = por %p186, %p187
    %p189 = scmp.ne.s32.totalorder %s178, %s179
    %p190 = scmp.eq.s32.totalorder %s20, 0
    %p191 = por %p189, %p190
    %p192 = scmp.ne.s32.totalorder %s178, %s179
    %p193 = scmp.eq.s32.totalorder %s21, 1
    %p194 = por %p192, %p193
    %p196 = scmp.ne.s32.totalorder %s179, %s195
    %p197 = scmp.eq.s32.totalorder %s21, 0
    %p198 = por %p196, %p197
    %s199 = smul.u32 %s23, 16
    %s200 = sadd.s32 %s199, 16
    %p201 = scmp.lt.s32.totalorder %s200, 15
    %s202 = scalar_select %p201, %s200, 15
    %s203 = smul.u32 %s30, 16
    %s204 = sadd.s32 %s203, 16
    %p205 = scmp.lt.s32.totalorder %s204, 15
    %s206 = scalar_select %p205, %s204, 15
    %s207 = ssub.s32 %s22, %s34
    %s208 = ssub.s32 %s202, %s206
    %s209 = sor.u32 %s207, %s208
    %p210 = scmp.eq.s32.totalorder %s209, 0
    %s212 = sadd.s32 %s211, 1
    %s213 = scalar_select %p210, %s211, %s212
    %p216 = pneg %p210
    %p217 = scmp.eq.s32.totalorder %s15, 1
    %p218 = por %p216, %p217
    %p219 = scmp.ne.s32.totalorder %s211, %s214
    %p220 = scmp.eq.s32.totalorder %s15, 0
    %p221 = por %p219, %p220
    %p222 = scmp.ne.s32.totalorder %s211, %s214
    %p223 = scmp.eq.s32.totalorder %s20, 1
    %p224 = por %p222, %p223
    %p225 = scmp.ne.s32.totalorder %s214, %s215
    %p226 = scmp.eq.s32.totalorder %s20, 0
    %p227 = por %p225, %p226
    %p228 = scmp.ne.s32.totalorder %s214, %s215
    %p229 = scmp.eq.s32.totalorder %s21, 1
    %p230 = por %p228, %p229
    %p232 = scmp.ne.s32.totalorder %s215, %s231
    %p233 = scmp.eq.s32.totalorder %s21, 0
    %p234 = por %p232, %p233
    %s236 = sadd.s32 %s235, 1
    %p239 = scmp.eq.s32.totalorder %s15, 1
    %p240 = scmp.ne.s32.totalorder %s235, %s237
    %p241 = scmp.eq.s32.totalorder %s15, 0
    %p242 = por %p240, %p241
    %p243 = scmp.ne.s32.totalorder %s235, %s237
    %p244 = scmp.eq.s32.totalorder %s20, 1
    %p245 = por %p243, %p244
    %p246 = scmp.ne.s32.totalorder %s237, %s238
    %p247 = scmp.eq.s32.totalorder %s20, 0
    %p248 = por %p246, %p247
    %p249 = scmp.ne.s32.totalorder %s237, %s238
    %p250 = scmp.eq.s32.totalorder %s21, 1
    %p251 = por %p249, %p250
    %p253 = scmp.ne.s32.totalorder %s238, %s252
    %p254 = scmp.eq.s32.totalorder %s21, 0
    %p255 = por %p253, %p254
    %s257 = sadd.s32 %s256, 1
    %p260 = scmp.eq.s32.totalorder %s15, 1
    %p261 = scmp.ne.s32.totalorder %s256, %s258
    %p262 = scmp.eq.s32.totalorder %s15, 0
    %p263 = por %p261, %p262
    %p264 = scmp.ne.s32.totalorder %s256, %s258
    %p265 = scmp.eq.s32.totalorder %s20, 1
    %p266 = por %p264, %p265
    %p267 = scmp.ne.s32.totalorder %s258, %s259
    %p268 = scmp.eq.s32.totalorder %s20, 0
    %p269 = por %p267, %p268
    %p270 = scmp.ne.s32.totalorder %s258, %s259
    %p271 = scmp.eq.s32.totalorder %s21, 1
    %p272 = por %p270, %p271
    %p274 = scmp.ne.s32.totalorder %s259, %s273
    %p275 = scmp.eq.s32.totalorder %s21, 0
    %p276 = por %p274, %p275
    %s278 = sadd.s32 %s277, 1
    %p281 = scmp.eq.s32.totalorder %s15, 1
    %p282 = scmp.ne.s32.totalorder %s277, %s279
    %p283 = scmp.eq.s32.totalorder %s15, 0
    %p284 = por %p282, %p283
    %p285 = scmp.ne.s32.totalorder %s277, %s279
    %p286 = scmp.eq.s32.totalorder %s20, 1
    %p287 = por %p285, %p286
    %p288 = scmp.ne.s32.totalorder %s279, %s280
    %p289 = scmp.eq.s32.totalorder %s20, 0
    %p290 = por %p288, %p289
    %p291 = scmp.ne.s32.totalorder %s279, %s280
    %p292 = scmp.eq.s32.totalorder %s21, 1
    %p293 = por %p291, %p292
    %p295 = scmp.ne.s32.totalorder %s280, %s294
    %p296 = scmp.eq.s32.totalorder %s21, 0
    %p297 = por %p295, %p296
    %s298 = ssub.s32 %s22, %s34
    %s299 = ssub.s32 %s23, %s30
    %s300 = sor.u32 %s298, %s299
    %p301 = scmp.eq.s32.totalorder %s300, 0
    %s303 = sadd.s32 %s302, 1
    %s304 = scalar_select %p301, %s302, %s303
    %p307 = pneg %p301
    %p308 = scmp.eq.s32.totalorder %s15, 1
    %p309 = por %p307, %p308
    %p310 = scmp.ne.s32.totalorder %s302, %s305
    %p311 = scmp.eq.s32.totalorder %s15, 0
    %p312 = por %p310, %p311
    %p313 = scmp.ne.s32.totalorder %s302, %s305
    %p314 = scmp.eq.s32.totalorder %s20, 1
    %p315 = por %p313, %p314
    %p316 = scmp.ne.s32.totalorder %s305, %s306
    %p317 = scmp.eq.s32.totalorder %s20, 0
    %p318 = por %p316, %p317
    %p319 = scmp.ne.s32.totalorder %s305, %s306
    %p320 = scmp.eq.s32.totalorder %s21, 1
    %p321 = por %p319, %p320
    %p323 = scmp.ne.s32.totalorder %s306, %s322
    %p324 = scmp.eq.s32.totalorder %s21, 0
    %p325 = por %p323, %p324
    %p326 = scmp.le.s32.totalorder 1, %s15
    %p327 = scmp.lt.s32.totalorder %s15, 3
    %p328 = pnand %p326, %p327
    %p329 = pneg %p328
    // Predicated region
    $region9: #{tpu_custom_call.1} parent=5 // pred_check
      _
    $region10: #{tpu_custom_call.1} parent=5 // pred_check_branch
      %331 = sbr.rel (%p328) target = $region12
    $region11: #{tpu_custom_call.1} parent=5 // pred_region
      %s332 = ssub.s32 %s15, 1
      // Predicated region
      $region13: #{tpu_custom_call.1} parent=11 // pred_check
        %p333 = pneg %p248
      $region14: #{tpu_custom_call.1} parent=11 // pred_check_branch
        %335 = sbr.rel (%p333) target = $region16
      $region15: #{tpu_custom_call.1} parent=11 // pred_region
        _
      $region16: #{tpu_custom_call.1} parent=11 // pred_fallthru
        _
      // Predicated region
      $region17: #{tpu_custom_call.1} parent=11 // pred_check
        %p336 = pneg %p269
      $region18: #{tpu_custom_call.1} parent=11 // pred_check_branch
        %338 = sbr.rel (%p336) target = $region20
      $region19: #{tpu_custom_call.1} parent=11 // pred_region
        _
      $region20: #{tpu_custom_call.1} parent=11 // pred_fallthru
        _
      // Predicated region
      $region21: #{tpu_custom_call.1} parent=11 // pred_check
        %p339 = pneg %p290
      $region22: #{tpu_custom_call.1} parent=11 // pred_check_branch
        %341 = sbr.rel (%p339) target = $region24
      $region23: #{tpu_custom_call.1} parent=11 // pred_region
        _
      $region24: #{tpu_custom_call.1} parent=11 // pred_fallthru
        _
    $region12: #{tpu_custom_call.1} parent=5 // pred_fallthru
      _
    %p342 = scmp.lt.s32.totalorder %s15, 2
    // Predicated region
    $region25: #{tpu_custom_call.1} parent=5 // pred_check
      %p343 = pneg %p342
    $region26: #{tpu_custom_call.1} parent=5 // pred_check_branch
      %345 = sbr.rel (%p343) target = $region28
    $region27: #{tpu_custom_call.1} parent=5 // pred_region
      // Predicated region
      $region29: #{tpu_custom_call.1} parent=27 // pred_check
        %p346 = pneg %p49
      $region30: #{tpu_custom_call.1} parent=27 // pred_check_branch
        %348 = sbr.rel (%p346) target = $region32
      $region31: #{tpu_custom_call.1} parent=27 // pred_region
        %s349 = smul.u32 8, %s23
        %p350 = scmp.lt.s32.totalorder %s22, 1
        %s351 = scalar_select %p350, %s22, 1
        %p352 = scmp.lt.s32.totalorder %s349, 7
        %s353 = scalar_select %p352, %s349, 7
        %s354 = smul.addr %s353, 2
        %s355 = smul.addr %s351, 16
        %s356 = sadd.s32 %s354, %s355
        %s357 = smul.addr %s356, 8
        %s358 = scalar_lea.vmem %s0, %s357
        %s359 = smul.u32 8, %s23
      $region32: #{tpu_custom_call.1} parent=27 // pred_fallthru
        _
      // Predicated region
      $region33: #{tpu_custom_call.1} parent=27 // pred_check
        %p360 = pneg %p85
      $region34: #{tpu_custom_call.1} parent=27 // pred_check_branch
        %362 = sbr.rel (%p360) target = $region36
      $region35: #{tpu_custom_call.1} parent=27 // pred_region
        %s363 = smul.u32 %s23, 8
        %s364 = ssub.s32 %s363, 1
        %p365 = scmp.gt.s32.totalorder %s364, 0
        %s366 = scalar_select %p365, %s364, 0
        %p367 = scmp.lt.s32.totalorder %s22, 1
        %s368 = scalar_select %p367, %s22, 1
        %p369 = scmp.lt.s32.totalorder %s366, 7
        %s370 = scalar_select %p369, %s366, 7
        %s371 = smul.addr %s370, 2
        %s372 = smul.addr %s368, 16
        %s373 = sadd.s32 %s371, %s372
        %s374 = smul.addr %s373, 8
        %s375 = scalar_lea.vmem %s1, %s374
        %s376 = smul.u32 %s23, 8
        %s377 = ssub.s32 %s376, 1
        %p378 = scmp.gt.s32.totalorder %s377, 0
        %s379 = scalar_select %p378, %s377, 0
      $region36: #{tpu_custom_call.1} parent=27 // pred_fallthru
        _
      // Predicated region
      $region37: #{tpu_custom_call.1} parent=27 // pred_check
        %p380 = pneg %p121
      $region38: #{tpu_custom_call.1} parent=27 // pred_check_branch
        %382 = sbr.rel (%p380) target = $region40
      $region39: #{tpu_custom_call.1} parent=27 // pred_region
        %s383 = smul.u32 %s23, 8
        %s384 = sadd.s32 %s383, 8
        %p385 = scmp.lt.s32.totalorder %s384, 7
        %s386 = scalar_select %p385, %s384, 7
        %p387 = scmp.lt.s32.totalorder %s22, 1
        %s388 = scalar_select %p387, %s22, 1
        %p389 = scmp.lt.s32.totalorder %s386, 7
        %s390 = scalar_select %p389, %s386, 7
        %s391 = smul.addr %s390, 2
        %s392 = smul.addr %s388, 16
        %s393 = sadd.s32 %s391, %s392
        %s394 = smul.addr %s393, 8
        %s395 = scalar_lea.vmem %s2, %s394
        %s396 = smul.u32 %s23, 8
        %s397 = sadd.s32 %s396, 8
        %p398 = scmp.lt.s32.totalorder %s397, 7
        %s399 = scalar_select %p398, %s397, 7
      $region40: #{tpu_custom_call.1} parent=27 // pred_fallthru
        _
      // Predicated region
      $region41: #{tpu_custom_call.1} parent=27 // pred_check
        %p400 = pneg %p149
      $region42: #{tpu_custom_call.1} parent=27 // pred_check_branch
        %402 = sbr.rel (%p400) target = $region44
      $region43: #{tpu_custom_call.1} parent=27 // pred_region
        %s403 = smul.u32 16, %s23
        %p404 = scmp.lt.s32.totalorder %s22, 1
        %s405 = scalar_select %p404, %s22, 1
        %p406 = scmp.lt.s32.totalorder %s403, 15
        %s407 = scalar_select %p406, %s403, 15
        %s408 = smul.addr %s407, 2
        %s409 = smul.addr %s405, 32
        %s410 = sadd.s32 %s408, %s409
        %s411 = smul.addr %s410, 8
        %s412 = scalar_lea.vmem %s3, %s411
        %s413 = smul.u32 16, %s23
      $region44: #{tpu_custom_call.1} parent=27 // pred_fallthru
        _
      // Predicated region
      $region45: #{tpu_custom_call.1} parent=27 // pred_check
        %p414 = pneg %p185
      $region46: #{tpu_custom_call.1} parent=27 // pred_check_branch
        %416 = sbr.rel (%p414) target = $region48
      $region47: #{tpu_custom_call.1} parent=27 // pred_region
        %s417 = smul.u32 %s23, 16
        %s418 = ssub.s32 %s417, 1
        %p419 = scmp.gt.s32.totalorder %s418, 0
        %s420 = scalar_select %p419, %s418, 0
        %p421 = scmp.lt.s32.totalorder %s22, 1
        %s422 = scalar_select %p421, %s22, 1
        %p423 = scmp.lt.s32.totalorder %s420, 15
        %s424 = scalar_select %p423, %s420, 15
        %s425 = smul.addr %s424, 2
        %s426 = smul.addr %s422, 32
        %s427 = sadd.s32 %s425, %s426
        %s428 = smul.addr %s427, 8
        %s429 = scalar_lea.vmem %s4, %s428
        %s430 = smul.u32 %s23, 16
        %s431 = ssub.s32 %s430, 1
        %p432 = scmp.gt.s32.totalorder %s431, 0
        %s433 = scalar_select %p432, %s431, 0
      $region48: #{tpu_custom_call.1} parent=27 // pred_fallthru
        _
      // Predicated region
      $region49: #{tpu_custom_call.1} parent=27 // pred_check
        %p434 = pneg %p221
      $region50: #{tpu_custom_call.1} parent=27 // pred_check_branch
        %436 = sbr.rel (%p434) target = $region52
      $region51: #{tpu_custom_call.1} parent=27 // pred_region
        %s437 = smul.u32 %s23, 16
        %s438 = sadd.s32 %s437, 16
        %p439 = scmp.lt.s32.totalorder %s438, 15
        %s440 = scalar_select %p439, %s438, 15
        %p441 = scmp.lt.s32.totalorder %s22, 1
        %s442 = scalar_select %p441, %s22, 1
        %p443 = scmp.lt.s32.totalorder %s440, 15
        %s444 = scalar_select %p443, %s440, 15
        %s445 = smul.addr %s444, 2
        %s446 = smul.addr %s442, 32
        %s447 = sadd.s32 %s445, %s446
        %s448 = smul.addr %s447, 8
        %s449 = scalar_lea.vmem %s5, %s448
        %s450 = smul.u32 %s23, 16
        %s451 = sadd.s32 %s450, 16
        %p452 = scmp.lt.s32.totalorder %s451, 15
        %s453 = scalar_select %p452, %s451, 15
      $region52: #{tpu_custom_call.1} parent=27 // pred_fallthru
        _
    $region28: #{tpu_custom_call.1} parent=5 // pred_fallthru
      _
    %p454 = scmp.le.s32.totalorder 1, %s15
    %p455 = scmp.lt.s32.totalorder %s15, 3
    %p456 = pnand %p454, %p455
    %p457 = pneg %p456
    // Predicated region
    $region53: #{tpu_custom_call.1} parent=5 // pred_check
      _
    $region54: #{tpu_custom_call.1} parent=5 // pred_check_branch
      %459 = sbr.rel (%p456) target = $region56
    $region55: #{tpu_custom_call.1} parent=5 // pred_region
      %s460 = ssub.s32 %s15, 1
      %s461 = smul.u32 8, %s25
      %p462 = scmp.lt.s32.totalorder %s24, 1
      %s463 = scalar_select %p462, %s24, 1
      %p464 = scmp.lt.s32.totalorder %s461, 7
      %s465 = scalar_select %p464, %s461, 7
      %s466 = smul.addr %s465, 2
      %s467 = smul.addr %s463, 16
      %s468 = sadd.s32 %s466, %s467
      %s469 = smul.addr %s468, 8
      %s470 = scalar_lea.vmem %s0, %s469
      %p471 = pneg %p55
      %p472 = pneg %p52
      %s473 = smul.u32 %s25, 8
      %s474 = ssub.s32 %s473, 1
      %p475 = scmp.gt.s32.totalorder %s474, 0
      %s476 = scalar_select %p475, %s474, 0
      %p477 = scmp.lt.s32.totalorder %s24, 1
      %s478 = scalar_select %p477, %s24, 1
      %p479 = scmp.lt.s32.totalorder %s476, 7
      %s480 = scalar_select %p479, %s476, 7
      %s481 = smul.addr %s480, 2
      %s482 = smul.addr %s478, 16
      %s483 = sadd.s32 %s481, %s482
      %s484 = smul.addr %s483, 8
      %s485 = scalar_lea.vmem %s1, %s484
      %p486 = pneg %p91
      %p487 = pneg %p88
      %s488 = smul.u32 %s25, 8
      %s489 = sadd.s32 %s488, 8
      %p490 = scmp.lt.s32.totalorder %s489, 7
      %s491 = scalar_select %p490, %s489, 7
      %p492 = scmp.lt.s32.totalorder %s24, 1
      %s493 = scalar_select %p492, %s24, 1
      %p494 = scmp.lt.s32.totalorder %s491, 7
      %s495 = scalar_select %p494, %s491, 7
      %s496 = smul.addr %s495, 2
      %s497 = smul.addr %s493, 16
      %s498 = sadd.s32 %s496, %s497
      %s499 = smul.addr %s498, 8
      %s500 = scalar_lea.vmem %s2, %s499
      %p501 = pneg %p127
      %p502 = pneg %p124
      %s503 = smul.u32 16, %s25
      %p504 = scmp.lt.s32.totalorder %s24, 1
      %s505 = scalar_select %p504, %s24, 1
      %p506 = scmp.lt.s32.totalorder %s503, 15
      %s507 = scalar_select %p506, %s503, 15
      %s508 = smul.addr %s507, 2
      %s509 = smul.addr %s505, 32
      %s510 = sadd.s32 %s508, %s509
      %s511 = smul.addr %s510, 8
      %s512 = scalar_lea.vmem %s3, %s511
      %p513 = pneg %p155
      %p514 = pneg %p152
      %s515 = smul.u32 %s25, 16
      %s516 = ssub.s32 %s515, 1
      %p517 = scmp.gt.s32.totalorder %s516, 0
      %s518 = scalar_select %p517, %s516, 0
      %p519 = scmp.lt.s32.totalorder %s24, 1
      %s520 = scalar_select %p519, %s24, 1
      %p521 = scmp.lt.s32.totalorder %s518, 15
      %s522 = scalar_select %p521, %s518, 15
      %s523 = smul.addr %s522, 2
      %s524 = smul.addr %s520, 32
      %s525 = sadd.s32 %s523, %s524
      %s526 = smul.addr %s525, 8
      %s527 = scalar_lea.vmem %s4, %s526
      %p528 = pneg %p191
      %p529 = pneg %p188
      %s530 = smul.u32 %s25, 16
      %s531 = sadd.s32 %s530, 16
      %p532 = scmp.lt.s32.totalorder %s531, 15
      %s533 = scalar_select %p532, %s531, 15
      %p534 = scmp.lt.s32.totalorder %s24, 1
      %s535 = scalar_select %p534, %s24, 1
      %p536 = scmp.lt.s32.totalorder %s533, 15
      %s537 = scalar_select %p536, %s533, 15
      %s538 = smul.addr %s537, 2
      %s539 = smul.addr %s535, 32
      %s540 = sadd.s32 %s538, %s539
      %s541 = smul.addr %s540, 8
      %s542 = scalar_lea.vmem %s5, %s541
      %p543 = pneg %p227
      %p544 = pneg %p224
      %p545 = pneg %p248
      %p546 = pneg %p245
      %p547 = pneg %p269
      %p548 = pneg %p266
      %p549 = pneg %p290
      %p550 = pneg %p287
      %p551 = pneg %p318
      %p552 = pneg %p315
      %s553 = smul.u32 16, %s25
      %p554 = scmp.lt.s32.totalorder %s24, 1
      %s555 = scalar_select %p554, %s24, 1
      %p556 = scmp.lt.s32.totalorder %s553, 15
      %s557 = scalar_select %p556, %s553, 15
      %s558 = smul.addr %s557, 2
      %s559 = smul.addr %s555, 32
      %s560 = sadd.s32 %s558, %s559
      %s561 = smul.addr %s560, 8
      %s562 = scalar_lea.vmem %s9, %s561
      %s563 = smul.u32 8, %s25
      %p564 = scmp.lt.s32.totalorder %s24, 1
      %s565 = scalar_select %p564, %s24, 1
      %p566 = scmp.lt.s32.totalorder %s563, 7
      %s567 = scalar_select %p566, %s563, 7
      %s568 = smul.addr %s567, 2
      %s569 = smul.addr %s565, 16
      %s570 = sadd.s32 %s568, %s569
      %s571 = smul.addr %s570, 8
      %s572 = scalar_lea.vmem %s0, %s571
      %s573 = smul.u32 8, %s25
      %s574 = smul.u32 %s25, 8
      %s575 = ssub.s32 %s574, 1
      %p576 = scmp.gt.s32.totalorder %s575, 0
      %s577 = scalar_select %p576, %s575, 0
      %p578 = scmp.lt.s32.totalorder %s24, 1
      %s579 = scalar_select %p578, %s24, 1
      %p580 = scmp.lt.s32.totalorder %s577, 7
      %s581 = scalar_select %p580, %s577, 7
      %s582 = smul.addr %s581, 2
      %s583 = smul.addr %s579, 16
      %s584 = sadd.s32 %s582, %s583
      %s585 = smul.addr %s584, 8
      %s586 = scalar_lea.vmem %s1, %s585
      %s587 = smul.u32 %s25, 8
      %s588 = ssub.s32 %s587, 1
      %p589 = scmp.gt.s32.totalorder %s588, 0
      %s590 = scalar_select %p589, %s588, 0
      %s591 = smul.u32 %s25, 8
      %s592 = sadd.s32 %s591, 8
      %p593 = scmp.lt.s32.totalorder %s592, 7
      %s594 = scalar_select %p593, %s592, 7
      %p595 = scmp.lt.s32.totalorder %s24, 1
      %s596 = scalar_select %p595, %s24, 1
      %p597 = scmp.lt.s32.totalorder %s594, 7
      %s598 = scalar_select %p597, %s594, 7
      %s599 = smul.addr %s598, 2
      %s600 = smul.addr %s596, 16
      %s601 = sadd.s32 %s599, %s600
      %s602 = smul.addr %s601, 8
      %s603 = scalar_lea.vmem %s2, %s602
      %s604 = smul.u32 %s25, 8
      %s605 = sadd.s32 %s604, 8
      %p606 = scmp.lt.s32.totalorder %s605, 7
      %s607 = scalar_select %p606, %s605, 7
      %s608 = smul.u32 16, %s25
      %p609 = scmp.lt.s32.totalorder %s24, 1
      %s610 = scalar_select %p609, %s24, 1
      %p611 = scmp.lt.s32.totalorder %s608, 15
      %s612 = scalar_select %p611, %s608, 15
      %s613 = smul.addr %s612, 2
      %s614 = smul.addr %s610, 32
      %s615 = sadd.s32 %s613, %s614
      %s616 = smul.addr %s615, 8
      %s617 = scalar_lea.vmem %s3, %s616
      %s618 = smul.u32 16, %s25
      %s619 = smul.u32 %s25, 16
      %s620 = ssub.s32 %s619, 1
      %p621 = scmp.gt.s32.totalorder %s620, 0
      %s622 = scalar_select %p621, %s620, 0
      %p623 = scmp.lt.s32.totalorder %s24, 1
      %s624 = scalar_select %p623, %s24, 1
      %p625 = scmp.lt.s32.totalorder %s622, 15
      %s626 = scalar_select %p625, %s622, 15
      %s627 = smul.addr %s626, 2
      %s628 = smul.addr %s624, 32
      %s629 = sadd.s32 %s627, %s628
      %s630 = smul.addr %s629, 8
      %s631 = scalar_lea.vmem %s4, %s630
      %s632 = smul.u32 %s25, 16
      %s633 = ssub.s32 %s632, 1
      %p634 = scmp.gt.s32.totalorder %s633, 0
      %s635 = scalar_select %p634, %s633, 0
      %s636 = smul.u32 %s25, 16
      %s637 = sadd.s32 %s636, 16
      %p638 = scmp.lt.s32.totalorder %s637, 15
      %s639 = scalar_select %p638, %s637, 15
      %p640 = scmp.lt.s32.totalorder %s24, 1
      %s641 = scalar_select %p640, %s24, 1
      %p642 = scmp.lt.s32.totalorder %s639, 15
      %s643 = scalar_select %p642, %s639, 15
      %s644 = smul.addr %s643, 2
      %s645 = smul.addr %s641, 32
      %s646 = sadd.s32 %s644, %s645
      %s647 = smul.addr %s646, 8
      %s648 = scalar_lea.vmem %s5, %s647
      %s649 = smul.u32 %s25, 16
      %s650 = sadd.s32 %s649, 16
      %p651 = scmp.lt.s32.totalorder %s650, 15
      %s652 = scalar_select %p651, %s650, 15
      %s653 = smul.u32 16, %s25
      %p654 = scmp.lt.s32.totalorder %s24, 1
      %s655 = scalar_select %p654, %s24, 1
      %p656 = scmp.lt.s32.totalorder %s653, 15
      %s657 = scalar_select %p656, %s653, 15
      %s658 = smul.addr %s657, 2
      %s659 = smul.addr %s655, 32
      %s660 = sadd.s32 %s658, %s659
      %s661 = smul.addr %s660, 8
      %s662 = scalar_lea.vmem %s9, %s661
      %s663 = smul.u32 16, %s25
      %v665 = vld [vmem:[%s6] sm:$0x3]
      %v666 = vld [vmem:[%s7] sm:$0x1]
      %v667 = vld [vmem:[%s617] sm:$0xff]
      %v668 = vld [vmem:[%s617 + $0x8] sm:$0xff]
      %v669 = vld [vmem:[%s617 + $0x10] sm:$0xff]
      %v670 = vld [vmem:[%s617 + $0x18] sm:$0xff]
      %v671 = vld [vmem:[%s617 + $0x20] sm:$0xff]
      %v672 = vld [vmem:[%s617 + $0x28] sm:$0xff]
      %v673 = vld [vmem:[%s617 + $0x30] sm:$0xff]
      %v674 = vld [vmem:[%s617 + $0x38] sm:$0xff]
      %v675 = vld [vmem:[%s617 + $0x40] sm:$0xff]
      %v676 = vld [vmem:[%s617 + $0x48] sm:$0xff]
      %v677 = vld [vmem:[%s617 + $0x50] sm:$0xff]
      %v678 = vld [vmem:[%s617 + $0x58] sm:$0xff]
      %v679 = vld [vmem:[%s617 + $0x60] sm:$0xff]
      %v680 = vld [vmem:[%s617 + $0x68] sm:$0xff]
      %v681 = vld [vmem:[%s617 + $0x70] sm:$0xff]
      %v682 = vld [vmem:[%s617 + $0x78] sm:$0xff]
      %v683 = vld [vmem:[%s617 + $0x80] sm:$0xff]
      %v684 = vld [vmem:[%s617 + $0x88] sm:$0xff]
      %v685 = vld [vmem:[%s617 + $0x90] sm:$0xff]
      %v686 = vld [vmem:[%s617 + $0x98] sm:$0xff]
      %v687 = vld [vmem:[%s617 + $0xa0] sm:$0xff]
      %v688 = vld [vmem:[%s617 + $0xa8] sm:$0xff]
      %v689 = vld [vmem:[%s617 + $0xb0] sm:$0xff]
      %v690 = vld [vmem:[%s617 + $0xb8] sm:$0xff]
      %v691 = vld [vmem:[%s617 + $0xc0] sm:$0xff]
      %v692 = vld [vmem:[%s617 + $0xc8] sm:$0xff]
      %v693 = vld [vmem:[%s617 + $0xd0] sm:$0xff]
      %v694 = vld [vmem:[%s617 + $0xd8] sm:$0xff]
      %v695 = vld [vmem:[%s617 + $0xe0] sm:$0xff]
      %v696 = vld [vmem:[%s617 + $0xe8] sm:$0xff]
      %v697 = vld [vmem:[%s617 + $0xf0] sm:$0xff]
      %v698 = vld [vmem:[%s617 + $0xf8] sm:$0xff]
      %v699 = vpack.c.bf16 %v668, %v667
      %v700 = vpack.c.bf16 %v670, %v669
      %v701 = vpack.c.bf16 %v672, %v671
      %v702 = vpack.c.bf16 %v674, %v673
      %v703 = vpack.c.bf16 %v676, %v675
      %v704 = vpack.c.bf16 %v678, %v677
      %v705 = vpack.c.bf16 %v680, %v679
      %v706 = vpack.c.bf16 %v682, %v681
      %v707 = vpack.c.bf16 %v684, %v683
      %v708 = vpack.c.bf16 %v686, %v685
      %v709 = vpack.c.bf16 %v688, %v687
      %v710 = vpack.c.bf16 %v690, %v689
      %v711 = vpack.c.bf16 %v692, %v691
      %v712 = vpack.c.bf16 %v694, %v693
      %v713 = vpack.c.bf16 %v696, %v695
      %v714 = vpack.c.bf16 %v698, %v697
      %v716 = vlaneseq
      %v717 = vshrl.u32 %v716, 7
      %v718 = vsub.s32 0, %v717
      %v719 = vrot.slane %v666, %v718
      %vm721 = vcmask 31744
      %v723 = vsel %vm721, %v699, 0
      %v726 = vsel %vm721, %v700, 0
      %v729 = vsel %vm721, %v701, 0
      %v732 = vsel %vm721, %v702, 0
      %v735 = vsel %vm721, %v703, 0
      %v738 = vsel %vm721, %v704, 0
      %v741 = vsel %vm721, %v705, 0
      %v744 = vsel %vm721, %v706, 0
      %v747 = vsel %vm721, %v707, 0
      %v750 = vsel %vm721, %v708, 0
      %v753 = vsel %vm721, %v709, 0
      %v756 = vsel %vm721, %v710, 0
      %v759 = vsel %vm721, %v711, 0
      %v762 = vsel %vm721, %v712, 0
      %v765 = vsel %vm721, %v713, 0
      %v768 = vsel %vm721, %v714, 0
      %vm770 = vcmask 1041408
      %v772 = vsel %vm770, %v665, 0
      %774 = vmatprep.subr.bf16.mxu0 0
      %775 = vmatpush1.bf16.msra.mxu0 %v772
      %776 = vmatprep.subr.bf16.mxu0 0
      %777 = vmatpush1.bf16.msra.mxu0 0
      %778 = vmatprep.subr.bf16.mxu0 0
      %779 = vmatpush1.bf16.msra.mxu0 0
      %780 = vmatprep.subr.bf16.mxu0 0
      %781 = vmatpush1.bf16.msra.mxu0 0
      %782 = vmatprep.subr.bf16.mxu0 0
      %783 = vmatpush1.bf16.msra.mxu0 0
      %784 = vmatprep.subr.bf16.mxu0 0
      %785 = vmatpush1.bf16.msra.mxu0 0
      %786 = vmatprep.subr.bf16.mxu0 0
      %787 = vmatpush1.bf16.msra.mxu0 0
      %788 = vmatprep.subr.bf16.mxu0 0
      %789 = vmatpush1.bf16.msra.mxu0 0
      %790 = vmatprep.subr.bf16.mxu0 0
      %791 = vmatpush1.bf16.msra.mxu0 0
      %792 = vmatprep.subr.bf16.mxu0 0
      %793 = vmatpush1.bf16.msra.mxu0 0
      %794 = vmatprep.subr.bf16.mxu0 0
      %795 = vmatpush1.bf16.msra.mxu0 0
      %796 = vmatprep.subr.bf16.mxu0 0
      %797 = vmatpush1.bf16.msra.mxu0 0
      %798 = vmatprep.subr.bf16.mxu0 0
      %799 = vmatpush1.bf16.msra.mxu0 0
      %800 = vmatprep.subr.bf16.mxu0 0
      %801 = vmatpush1.bf16.msra.mxu0 0
      %802 = vmatprep.subr.bf16.mxu0 0
      %803 = vmatpush1.bf16.msra.mxu0 0
      %804 = vmatprep.subr.bf16.mxu0 0
      %805 = vmatpush1.bf16.msra.mxu0 0
      %806 = vmatprep.mubr.bf16.mxu0 0
      %807 = vmatmul.mubr.bf16.gmra.mrb[0].mxu0 %v723
      %v808 = vpop.f32.mrb[0].mxu0
      %v809 = vadd.f32 %v719, %v808
      %v810 = vpop.f32.mrb[0].mxu0
      %v811 = vpop.f32.mrb[0].mxu0
      %v812 = vadd.f32 %v719, %v811
      %v813 = vpop.f32.mrb[0].mxu0
      %814 = vmatprep.mubr.bf16.mxu0 0
      %815 = vmatmul.mubr.bf16.gmra.mrb[0].mxu0 %v726
      %v816 = vpop.f32.mrb[0].mxu0
      %v817 = vadd.f32 %v719, %v816
      %v818 = vpop.f32.mrb[0].mxu0
      %v819 = vpop.f32.mrb[0].mxu0
      %v820 = vadd.f32 %v719, %v819
      %v821 = vpop.f32.mrb[0].mxu0
      %822 = vmatprep.mubr.bf16.mxu0 0
      %823 = vmatmul.mubr.bf16.gmra.mrb[0].mxu0 %v729
      %v824 = vpop.f32.mrb[0].mxu0
      %v825 = vadd.f32 %v719, %v824
      %v826 = vpop.f32.mrb[0].mxu0
      %v827 = vpop.f32.mrb[0].mxu0
      %v828 = vadd.f32 %v719, %v827
      %v829 = vpop.f32.mrb[0].mxu0
      %830 = vmatprep.mubr.bf16.mxu0 0
      %831 = vmatmul.mubr.bf16.gmra.mrb[0].mxu0 %v732
      %v832 = vpop.f32.mrb[0].mxu0
      %v833 = vadd.f32 %v719, %v832
      %v834 = vpop.f32.mrb[0].mxu0
      %v835 = vpop.f32.mrb[0].mxu0
      %v836 = vadd.f32 %v719, %v835
      %v837 = vpop.f32.mrb[0].mxu0
      %838 = vmatprep.mubr.bf16.mxu0 0
      %839 = vmatmul.mubr.bf16.gmra.mrb[0].mxu0 %v735
      %v840 = vpop.f32.mrb[0].mxu0
      %v841 = vadd.f32 %v719, %v840
      %v842 = vpop.f32.mrb[0].mxu0
      %v843 = vpop.f32.mrb[0].mxu0
      %v844 = vadd.f32 %v719, %v843
      %v845 = vpop.f32.mrb[0].mxu0
      %846 = vmatprep.mubr.bf16.mxu0 0
      %847 = vmatmul.mubr.bf16.gmra.mrb[0].mxu0 %v738
      %v848 = vpop.f32.mrb[0].mxu0
      %v849 = vadd.f32 %v719, %v848
      %v850 = vpop.f32.mrb[0].mxu0
      %v851 = vpop.f32.mrb[0].mxu0
      %v852 = vadd.f32 %v719, %v851
      %v853 = vpop.f32.mrb[0].mxu0
      %854 = vmatprep.mubr.bf16.mxu0 0
      %855 = vmatmul.mubr.bf16.gmra.mrb[0].mxu0 %v741
      %v856 = vpop.f32.mrb[0].mxu0
      %v857 = vadd.f32 %v719, %v856
      %v858 = vpop.f32.mrb[0].mxu0
      %v859 = vpop.f32.mrb[0].mxu0
      %v860 = vadd.f32 %v719, %v859
      %v861 = vpop.f32.mrb[0].mxu0
      %862 = vmatprep.mubr.bf16.mxu0 0
      %863 = vmatmul.mubr.bf16.gmra.mrb[0].mxu0 %v744
      %v864 = vpop.f32.mrb[0].mxu0
      %v865 = vadd.f32 %v719, %v864
      %v866 = vpop.f32.mrb[0].mxu0
      %v867 = vpop.f32.mrb[0].mxu0
      %v868 = vadd.f32 %v719, %v867
      %v869 = vpop.f32.mrb[0].mxu0
      %870 = vmatprep.mubr.bf16.mxu0 0
      %871 = vmatmul.mubr.bf16.gmra.mrb[0].mxu0 %v747
      %v872 = vpop.f32.mrb[0].mxu0
      %v873 = vadd.f32 %v719, %v872
      %v874 = vpop.f32.mrb[0].mxu0
      %v875 = vpop.f32.mrb[0].mxu0
      %v876 = vadd.f32 %v719, %v875
      %v877 = vpop.f32.mrb[0].mxu0
      %878 = vmatprep.mubr.bf16.mxu0 0
      %879 = vmatmul.mubr.bf16.gmra.mrb[0].mxu0 %v750
      %v880 = vpop.f32.mrb[0].mxu0
      %v881 = vadd.f32 %v719, %v880
      %v882 = vpop.f32.mrb[0].mxu0
      %v883 = vpop.f32.mrb[0].mxu0
      %v884 = vadd.f32 %v719, %v883
      %v885 = vpop.f32.mrb[0].mxu0
      %886 = vmatprep.mubr.bf16.mxu0 0
      %887 = vmatmul.mubr.bf16.gmra.mrb[0].mxu0 %v753
      %v888 = vpop.f32.mrb[0].mxu0
      %v889 = vadd.f32 %v719, %v888
      %v890 = vpop.f32.mrb[0].mxu0
      %v891 = vpop.f32.mrb[0].mxu0
      %v892 = vadd.f32 %v719, %v891
      %v893 = vpop.f32.mrb[0].mxu0
      %894 = vmatprep.mubr.bf16.mxu0 0
      %895 = vmatmul.mubr.bf16.gmra.mrb[0].mxu0 %v756
      %v896 = vpop.f32.mrb[0].mxu0
      %v897 = vadd.f32 %v719, %v896
      %v898 = vpop.f32.mrb[0].mxu0
      %v899 = vpop.f32.mrb[0].mxu0
      %v900 = vadd.f32 %v719, %v899
      %v901 = vpop.f32.mrb[0].mxu0
      %902 = vmatprep.mubr.bf16.mxu0 0
      %903 = vmatmul.mubr.bf16.gmra.mrb[0].mxu0 %v759
      %v904 = vpop.f32.mrb[0].mxu0
      %v905 = vadd.f32 %v719, %v904
      %v906 = vpop.f32.mrb[0].mxu0
      %v907 = vpop.f32.mrb[0].mxu0
      %v908 = vadd.f32 %v719, %v907
      %v909 = vpop.f32.mrb[0].mxu0
      %910 = vmatprep.mubr.bf16.mxu0 0
      %911 = vmatmul.mubr.bf16.gmra.mrb[0].mxu0 %v762
      %v912 = vpop.f32.mrb[0].mxu0
      %v913 = vadd.f32 %v719, %v912
      %v914 = vpop.f32.mrb[0].mxu0
      %v915 = vpop.f32.mrb[0].mxu0
      %v916 = vadd.f32 %v719, %v915
      %v917 = vpop.f32.mrb[0].mxu0
      %918 = vmatprep.mubr.bf16.mxu0 0
      %919 = vmatmul.mubr.bf16.gmra.mrb[0].mxu0 %v765
      %v920 = vpop.f32.mrb[0].mxu0
      %v921 = vadd.f32 %v719, %v920
      %v922 = vpop.f32.mrb[0].mxu0
      %v923 = vpop.f32.mrb[0].mxu0
      %v924 = vadd.f32 %v719, %v923
      %v925 = vpop.f32.mrb[0].mxu0
      %926 = vmatprep.mubr.bf16.mxu0 0
      %927 = vmatmul.mubr.bf16.gmra.mrb[0].mxu0 %v768
      %v928 = vpop.f32.mrb[0].mxu0
      %v929 = vadd.f32 %v719, %v928
      %v930 = vpop.f32.mrb[0].mxu0
      %v931 = vpop.f32.mrb[0].mxu0
      %v932 = vadd.f32 %v719, %v931
      %v933 = vpop.f32.mrb[0].mxu0
      %934 = vdwg.mxu0
      %v935 = vld [vmem:[%s572] sm:$0xff]
      %v936 = vld [vmem:[%s572 + $0x8] sm:$0xff]
      %v937 = vld [vmem:[%s572 + $0x10] sm:$0xff]
      %v938 = vld [vmem:[%s572 + $0x18] sm:$0xff]
      %v939 = vld [vmem:[%s572 + $0x20] sm:$0xff]
      %v940 = vld [vmem:[%s572 + $0x28] sm:$0xff]
      %v941 = vld [vmem:[%s572 + $0x30] sm:$0xff]
      %v942 = vld [vmem:[%s572 + $0x38] sm:$0xff]
      %v943 = vld [vmem:[%s572 + $0x40] sm:$0xff]
      %v944 = vld [vmem:[%s572 + $0x48] sm:$0xff]
      %v945 = vld [vmem:[%s572 + $0x50] sm:$0xff]
      %v946 = vld [vmem:[%s572 + $0x58] sm:$0xff]
      %v947 = vld [vmem:[%s572 + $0x60] sm:$0xff]
      %v948 = vld [vmem:[%s572 + $0x68] sm:$0xff]
      %v949 = vld [vmem:[%s572 + $0x70] sm:$0xff]
      %v950 = vld [vmem:[%s572 + $0x78] sm:$0xff]
      %v951 = vadd.f32 %v809, %v935
      %v952 = vadd.f32 %v812, %v936
      %v953 = vadd.f32 %v817, %v935
      %v954 = vadd.f32 %v820, %v936
      %v955 = vadd.f32 %v825, %v937
      %v956 = vadd.f32 %v828, %v938
      %v957 = vadd.f32 %v833, %v937
      %v958 = vadd.f32 %v836, %v938
      %v959 = vadd.f32 %v841, %v939
      %v960 = vadd.f32 %v844, %v940
      %v961 = vadd.f32 %v849, %v939
      %v962 = vadd.f32 %v852, %v940
      %v963 = vadd.f32 %v857, %v941
      %v964 = vadd.f32 %v860, %v942
      %v965 = vadd.f32 %v865, %v941
      %v966 = vadd.f32 %v868, %v942
      %v967 = vadd.f32 %v873, %v943
      %v968 = vadd.f32 %v876, %v944
      %v969 = vadd.f32 %v881, %v943
      %v970 = vadd.f32 %v884, %v944
      %v971 = vadd.f32 %v889, %v945
      %v972 = vadd.f32 %v892, %v946
      %v973 = vadd.f32 %v897, %v945
      %v974 = vadd.f32 %v900, %v946
      %v975 = vadd.f32 %v905, %v947
      %v976 = vadd.f32 %v908, %v948
      %v977 = vadd.f32 %v913, %v947
      %v978 = vadd.f32 %v916, %v948
      %v979 = vadd.f32 %v921, %v949
      %v980 = vadd.f32 %v924, %v950
      %v981 = vadd.f32 %v929, %v949
      %v982 = vadd.f32 %v932, %v950
      %p983 = scmp.eq.s32.totalorder %s25, 0
      %s984 = scalar_select %p983, 0.0, 1.0
      %v985 = vld [vmem:[%s631] sm:$0xff]
      %v986 = vld [vmem:[%s631 + $0x8] sm:$0xff]
      %v987 = vpack.c.bf16 %v986, %v985
      %v989 = vsel %vm721, %v987, 0
      %991 = vmatprep.subr.bf16.mxu0 0
      %992 = vmatpush1.bf16.msra.mxu0 %v772
      %993 = vmatprep.subr.bf16.mxu0 0
      %994 = vmatpush1.bf16.msra.mxu0 0
      %995 = vmatprep.subr.bf16.mxu0 0
      %996 = vmatpush1.bf16.msra.mxu0 0
      %997 = vmatprep.subr.bf16.mxu0 0
      %998 = vmatpush1.bf16.msra.mxu0 0
      %999 = vmatprep.subr.bf16.mxu0 0
      %1000 = vmatpush1.bf16.msra.mxu0 0
      %1001 = vmatprep.subr.bf16.mxu0 0
      %1002 = vmatpush1.bf16.msra.mxu0 0
      %1003 = vmatprep.subr.bf16.mxu0 0
      %1004 = vmatpush1.bf16.msra.mxu0 0
      %1005 = vmatprep.subr.bf16.mxu0 0
      %1006 = vmatpush1.bf16.msra.mxu0 0
      %1007 = vmatprep.subr.bf16.mxu0 0
      %1008 = vmatpush1.bf16.msra.mxu0 0
      %1009 = vmatprep.subr.bf16.mxu0 0
      %1010 = vmatpush1.bf16.msra.mxu0 0
      %1011 = vmatprep.subr.bf16.mxu0 0
      %1012 = vmatpush1.bf16.msra.mxu0 0
      %1013 = vmatprep.subr.bf16.mxu0 0
      %1014 = vmatpush1.bf16.msra.mxu0 0
      %1015 = vmatprep.subr.bf16.mxu0 0
      %1016 = vmatpush1.bf16.msra.mxu0 0
      %1017 = vmatprep.subr.bf16.mxu0 0
      %1018 = vmatpush1.bf16.msra.mxu0 0
      %1019 = vmatprep.subr.bf16.mxu0 0
      %1020 = vmatpush1.bf16.msra.mxu0 0
      %1021 = vmatprep.subr.bf16.mxu0 0
      %1022 = vmatpush1.bf16.msra.mxu0 0
      %1023 = vmatprep.mubr.bf16.mxu0 0
      %1024 = vmatmul.mubr.bf16.gmra.mrb[0].mxu0 %v989
      %v1025 = vpop.f32.mrb[0].mxu0
      %v1026 = vadd.f32 %v719, %v1025
      %v1027 = vpop.f32.mrb[0].mxu0
      %v1028 = vpop.f32.mrb[0].mxu0
      %v1029 = vadd.f32 %v719, %v1028
      %v1030 = vpop.f32.mrb[0].mxu0
      %1031 = vdwg.mxu0
      %v1032 = vld [vmem:[%s586] sm:$0xff]
      %v1033 = vld [vmem:[%s586 + $0x8] sm:$0xff]
      %v1034 = vadd.f32 %v1026, %v1032
      %v1035 = vadd.f32 %v1029, %v1033
      %v1036 = vstv %s984
      %v1037 = vmul.f32 %v1034, %v1036
      %v1038 = vmul.f32 %v1035, %v1036
      %v1039 = vld [vmem:[%s648] sm:$0xff]
      %v1040 = vld [vmem:[%s648 + $0x8] sm:$0xff]
      %v1041 = vpack.c.bf16 %v1040, %v1039
      %v1043 = vsel %vm721, %v1041, 0
      %1045 = vmatprep.subr.bf16.mxu0 0
      %1046 = vmatpush1.bf16.msra.mxu0 %v772
      %1047 = vmatprep.subr.bf16.mxu0 0
      %1048 = vmatpush1.bf16.msra.mxu0 0
      %1049 = vmatprep.subr.bf16.mxu0 0
      %1050 = vmatpush1.bf16.msra.mxu0 0
      %1051 = vmatprep.subr.bf16.mxu0 0
      %1052 = vmatpush1.bf16.msra.mxu0 0
      %1053 = vmatprep.subr.bf16.mxu0 0
      %1054 = vmatpush1.bf16.msra.mxu0 0
      %1055 = vmatprep.subr.bf16.mxu0 0
      %1056 = vmatpush1.bf16.msra.mxu0 0
      %1057 = vmatprep.subr.bf16.mxu0 0
      %1058 = vmatpush1.bf16.msra.mxu0 0
      %1059 = vmatprep.subr.bf16.mxu0 0
      %1060 = vmatpush1.bf16.msra.mxu0 0
      %1061 = vmatprep.subr.bf16.mxu0 0
      %1062 = vmatpush1.bf16.msra.mxu0 0
      %1063 = vmatprep.subr.bf16.mxu0 0
      %1064 = vmatpush1.bf16.msra.mxu0 0
      %1065 = vmatprep.subr.bf16.mxu0 0
      %1066 = vmatpush1.bf16.msra.mxu0 0
      %1067 = vmatprep.subr.bf16.mxu0 0
      %1068 = vmatpush1.bf16.msra.mxu0 0
      %1069 = vmatprep.subr.bf16.mxu0 0
      %1070 = vmatpush1.bf16.msra.mxu0 0
      %1071 = vmatprep.subr.bf16.mxu0 0
      %1072 = vmatpush1.bf16.msra.mxu0 0
      %1073 = vmatprep.subr.bf16.mxu0 0
      %1074 = vmatpush1.bf16.msra.mxu0 0
      %1075 = vmatprep.subr.bf16.mxu0 0
      %1076 = vmatpush1.bf16.msra.mxu0 0
      %1077 = vmatprep.mubr.bf16.mxu0 0
      %1078 = vmatmul.mubr.bf16.gmra.mrb[0].mxu0 %v1043
      %v1079 = vpop.f32.mrb[0].mxu0
      %v1080 = vadd.f32 %v719, %v1079
      %v1081 = vpop.f32.mrb[0].mxu0
      %v1082 = vpop.f32.mrb[0].mxu0
      %v1083 = vadd.f32 %v719, %v1082
      %v1084 = vpop.f32.mrb[0].mxu0
      %1085 = vdwg.mxu0
      %v1086 = vld [vmem:[%s603] sm:$0xff]
      %v1087 = vld [vmem:[%s603 + $0x8] sm:$0xff]
      %v1088 = vadd.f32 %v1080, %v1086
      %v1089 = vadd.f32 %v1083, %v1087
      %v1090 = vmul.f32 %v1088, %v1036
      %v1091 = vmul.f32 %v1089, %v1036
      %v1092 = vlaneseq
      %v1093 = vshrl.u32 %v1092, 7
      %v1094 = vadd.s32 %v1093, 8
      %vm1095 = vcmp.ne.s32.totalorder %v1093, 0
      %vm1096 = vcmp.ne.s32.totalorder %v1094, 0
      %v1097 = vsel %vm1095, 1, 0
      %v1098 = vsel %vm1096, 1, 0
      %vm1099 = vcmp.eq.s32.totalorder %v1097, 1
      %vm1100 = vcmp.eq.s32.totalorder %v1098, 1
      %v1101 = vsel %vm1099, %v1037, 0.0
      %v1102 = vsel %vm1100, %v1038, 0.0
      %v1103 = vsel %vm1099, %v951, 0.0
      %v1104 = vsel %vm1100, %v952, 0.0
      %v1105 = vsel %vm1099, %v953, 0.0
      %v1106 = vsel %vm1100, %v954, 0.0
      %v1107 = vsel %vm1099, %v955, 0.0
      %v1108 = vsel %vm1100, %v956, 0.0
      %v1109 = vsel %vm1099, %v957, 0.0
      %v1110 = vsel %vm1100, %v958, 0.0
      %v1111 = vsel %vm1099, %v959, 0.0
      %v1112 = vsel %vm1100, %v960, 0.0
      %v1113 = vsel %vm1099, %v961, 0.0
      %v1114 = vsel %vm1100, %v962, 0.0
      %v1115 = vsel %vm1099, %v963, 0.0
      %v1116 = vsel %vm1100, %v964, 0.0
      %v1117 = vsel %vm1099, %v965, 0.0
      %v1118 = vsel %vm1100, %v966, 0.0
      %v1119 = vsel %vm1099, %v967, 0.0
      %v1120 = vsel %vm1100, %v968, 0.0
      %v1121 = vsel %vm1099, %v969, 0.0
      %v1122 = vsel %vm1100, %v970, 0.0
      %v1123 = vsel %vm1099, %v971, 0.0
      %v1124 = vsel %vm1100, %v972, 0.0
      %v1125 = vsel %vm1099, %v973, 0.0
      %v1126 = vsel %vm1100, %v974, 0.0
      %v1127 = vsel %vm1099, %v975, 0.0
      %v1128 = vsel %vm1100, %v976, 0.0
      %v1129 = vsel %vm1099, %v977, 0.0
      %v1130 = vsel %vm1100, %v978, 0.0
      %v1131 = vsel %vm1099, %v979, 0.0
      %v1132 = vsel %vm1100, %v980, 0.0
      %v1133 = vsel %vm1099, %v981, 0.0
      %v1134 = vsel %vm1100, %v982, 0.0
      %v1135 = vsel %vm1099, %v1090, 0.0
      %v1136 = vsel %vm1100, %v1091, 0.0
      %vm1137 = vcmp.ne.s32.totalorder %v1093, 15
      %vm1138 = vcmp.ne.s32.totalorder %v1094, 15
      %v1139 = vsel %vm1137, 1, 0
      %v1140 = vsel %vm1138, 1, 0
      %vm1141 = vcmp.eq.s32.totalorder %v1139, 1
      %vm1142 = vcmp.eq.s32.totalorder %v1140, 1
      %v1143 = vsel %vm1141, %v1037, 0.0
      %v1144 = vsel %vm1142, %v1038, 0.0
      %v1145 = vsel %vm1141, %v951, 0.0
      %v1146 = vsel %vm1142, %v952, 0.0
      %v1147 = vsel %vm1141, %v953, 0.0
      %v1148 = vsel %vm1142, %v954, 0.0
      %v1149 = vsel %vm1141, %v955, 0.0
      %v1150 = vsel %vm1142, %v956, 0.0
      %v1151 = vsel %vm1141, %v957, 0.0
      %v1152 = vsel %vm1142, %v958, 0.0
      %v1153 = vsel %vm1141, %v959, 0.0
      %v1154 = vsel %vm1142, %v960, 0.0
      %v1155 = vsel %vm1141, %v961, 0.0
      %v1156 = vsel %vm1142, %v962, 0.0
      %v1157 = vsel %vm1141, %v963, 0.0
      %v1158 = vsel %vm1142, %v964, 0.0
      %v1159 = vsel %vm1141, %v965, 0.0
      %v1160 = vsel %vm1142, %v966, 0.0
      %v1161 = vsel %vm1141, %v967, 0.0
      %v1162 = vsel %vm1142, %v968, 0.0
      %v1163 = vsel %vm1141, %v969, 0.0
      %v1164 = vsel %vm1142, %v970, 0.0
      %v1165 = vsel %vm1141, %v971, 0.0
      %v1166 = vsel %vm1142, %v972, 0.0
      %v1167 = vsel %vm1141, %v973, 0.0
      %v1168 = vsel %vm1142, %v974, 0.0
      %v1169 = vsel %vm1141, %v975, 0.0
      %v1170 = vsel %vm1142, %v976, 0.0
      %v1171 = vsel %vm1141, %v977, 0.0
      %v1172 = vsel %vm1142, %v978, 0.0
      %v1173 = vsel %vm1141, %v979, 0.0
      %v1174 = vsel %vm1142, %v980, 0.0
      %v1175 = vsel %vm1141, %v981, 0.0
      %v1176 = vsel %vm1142, %v982, 0.0
      %v1177 = vsel %vm1141, %v1090, 0.0
      %v1178 = vsel %vm1142, %v1091, 0.0
      %v1179 = vpack.c.bf16 %v1038, %v1037
      %v1180 = vpack.c.bf16 %v952, %v951
      %v1181 = vpack.c.bf16 %v954, %v953
      %v1182 = vpack.c.bf16 %v956, %v955
      %v1183 = vpack.c.bf16 %v958, %v957
      %v1184 = vpack.c.bf16 %v960, %v959
      %v1185 = vpack.c.bf16 %v962, %v961
      %v1186 = vpack.c.bf16 %v964, %v963
      %v1187 = vpack.c.bf16 %v966, %v965
      %v1188 = vpack.c.bf16 %v968, %v967
      %v1189 = vpack.c.bf16 %v970, %v969
      %v1190 = vpack.c.bf16 %v972, %v971
      %v1191 = vpack.c.bf16 %v974, %v973
      %v1192 = vpack.c.bf16 %v976, %v975
      %v1193 = vpack.c.bf16 %v978, %v977
      %v1194 = vpack.c.bf16 %v980, %v979
      %v1195 = vpack.c.bf16 %v982, %v981
      %v1196 = vpack.c.bf16 %v1091, %v1090
      %s1197 = scalar_lea.vmem %s8, 4
      %v1198 = vld [vmem:[%s1197] sm:$0xf]
      %s1199 = scalar_lea.vmem %s8, 16
      %v1200 = vld [vmem:[%s1199] sm:$0xf]
      %vm1201 = vcmask 64512
      %v1203 = vsel %vm1201, %v1180, 0
      %v1206 = vsel %vm1201, %v1181, 0
      %v1209 = vsel %vm1201, %v1182, 0
      %v1212 = vsel %vm1201, %v1183, 0
      %v1215 = vsel %vm1201, %v1184, 0
      %v1218 = vsel %vm1201, %v1185, 0
      %v1221 = vsel %vm1201, %v1186, 0
      %v1224 = vsel %vm1201, %v1187, 0
      %v1227 = vsel %vm1201, %v1188, 0
      %v1230 = vsel %vm1201, %v1189, 0
      %v1233 = vsel %vm1201, %v1190, 0
      %v1236 = vsel %vm1201, %v1191, 0
      %v1239 = vsel %vm1201, %v1192, 0
      %v1242 = vsel %vm1201, %v1193, 0
      %v1245 = vsel %vm1201, %v1194, 0
      %v1248 = vsel %vm1201, %v1195, 0
      %vm1250 = vcmask 1043456
      %v1252 = vsel %vm1250, %v1200, 0
      %1254 = vmatprep.subr.bf16.mxu0 0
      %1255 = vmatpush1.bf16.msra.mxu0 %v1252
      %1256 = vmatprep.subr.bf16.mxu0 0
      %1257 = vmatpush1.bf16.msra.mxu0 0
      %1258 = vmatprep.subr.bf16.mxu0 0
      %1259 = vmatpush1.bf16.msra.mxu0 0
      %1260 = vmatprep.subr.bf16.mxu0 0
      %1261 = vmatpush1.bf16.msra.mxu0 0
      %1262 = vmatprep.subr.bf16.mxu0 0
      %1263 = vmatpush1.bf16.msra.mxu0 0
      %1264 = vmatprep.subr.bf16.mxu0 0
      %1265 = vmatpush1.bf16.msra.mxu0 0
      %1266 = vmatprep.subr.bf16.mxu0 0
      %1267 = vmatpush1.bf16.msra.mxu0 0
      %1268 = vmatprep.subr.bf16.mxu0 0
      %1269 = vmatpush1.bf16.msra.mxu0 0
      %1270 = vmatprep.subr.bf16.mxu0 0
      %1271 = vmatpush1.bf16.msra.mxu0 0
      %1272 = vmatprep.subr.bf16.mxu0 0
      %1273 = vmatpush1.bf16.msra.mxu0 0
      %1274 = vmatprep.subr.bf16.mxu0 0
      %1275 = vmatpush1.bf16.msra.mxu0 0
      %1276 = vmatprep.subr.bf16.mxu0 0
      %1277 = vmatpush1.bf16.msra.mxu0 0
      %1278 = vmatprep.subr.bf16.mxu0 0
      %1279 = vmatpush1.bf16.msra.mxu0 0
      %1280 = vmatprep.subr.bf16.mxu0 0
      %1281 = vmatpush1.bf16.msra.mxu0 0
      %1282 = vmatprep.subr.bf16.mxu0 0
      %1283 = vmatpush1.bf16.msra.mxu0 0
      %1284 = vmatprep.subr.bf16.mxu0 0
      %1285 = vmatpush1.bf16.msra.mxu0 0
      %1286 = vmatprep.mubr.bf16.mxu0 0
      %1287 = vmatmul.mubr.bf16.gmra.mrb[0].mxu0 %v1203
      %v1288 = vpop.f32.mrb[0].mxu0
      %v1289 = vadd.f32 0.0, %v1288
      %v1290 = vpop.f32.mrb[0].mxu0
      %v1291 = vpop.f32.mrb[0].mxu0
      %v1292 = vadd.f32 0.0, %v1291
      %v1293 = vpop.f32.mrb[0].mxu0
      %1294 = vmatprep.mubr.bf16.mxu0 0
      %1295 = vmatmul.mubr.bf16.gmra.mrb[0].mxu0 %v1206
      %v1296 = vpop.f32.mrb[0].mxu0
      %v1297 = vadd.f32 0.0, %v1296
      %v1298 = vpop.f32.mrb[0].mxu0
      %v1299 = vpop.f32.mrb[0].mxu0
      %v1300 = vadd.f32 0.0, %v1299
      %v1301 = vpop.f32.mrb[0].mxu0
      %1302 = vmatprep.mubr.bf16.mxu0 0
      %1303 = vmatmul.mubr.bf16.gmra.mrb[0].mxu0 %v1209
      %v1304 = vpop.f32.mrb[0].mxu0
      %v1305 = vadd.f32 0.0, %v1304
      %v1306 = vpop.f32.mrb[0].mxu0
      %v1307 = vpop.f32.mrb[0].mxu0
      %v1308 = vadd.f32 0.0, %v1307
      %v1309 = vpop.f32.mrb[0].mxu0
      %1310 = vmatprep.mubr.bf16.mxu0 0
      %1311 = vmatmul.mubr.bf16.gmra.mrb[0].mxu0 %v1212
      %v1312 = vpop.f32.mrb[0].mxu0
      %v1313 = vadd.f32 0.0, %v1312
      %v1314 = vpop.f32.mrb[0].mxu0
      %v1315 = vpop.f32.mrb[0].mxu0
      %v1316 = vadd.f32 0.0, %v1315
      %v1317 = vpop.f32.mrb[0].mxu0
      %1318 = vmatprep.mubr.bf16.mxu0 0
      %1319 = vmatmul.mubr.bf16.gmra.mrb[0].mxu0 %v1215
      %v1320 = vpop.f32.mrb[0].mxu0
      %v1321 = vadd.f32 0.0, %v1320
      %v1322 = vpop.f32.mrb[0].mxu0
      %v1323 = vpop.f32.mrb[0].mxu0
      %v1324 = vadd.f32 0.0, %v1323
      %v1325 = vpop.f32.mrb[0].mxu0
      %1326 = vmatprep.mubr.bf16.mxu0 0
      %1327 = vmatmul.mubr.bf16.gmra.mrb[0].mxu0 %v1218
      %v1328 = vpop.f32.mrb[0].mxu0
      %v1329 = vadd.f32 0.0, %v1328
      %v1330 = vpop.f32.mrb[0].mxu0
      %v1331 = vpop.f32.mrb[0].mxu0
      %v1332 = vadd.f32 0.0, %v1331
      %v1333 = vpop.f32.mrb[0].mxu0
      %1334 = vmatprep.mubr.bf16.mxu0 0
      %1335 = vmatmul.mubr.bf16.gmra.mrb[0].mxu0 %v1221
      %v1336 = vpop.f32.mrb[0].mxu0
      %v1337 = vadd.f32 0.0, %v1336
      %v1338 = vpop.f32.mrb[0].mxu0
      %v1339 = vpop.f32.mrb[0].mxu0
      %v1340 = vadd.f32 0.0, %v1339
      %v1341 = vpop.f32.mrb[0].mxu0
      %1342 = vmatprep.mubr.bf16.mxu0 0
      %1343 = vmatmul.mubr.bf16.gmra.mrb[0].mxu0 %v1224
      %v1344 = vpop.f32.mrb[0].mxu0
      %v1345 = vadd.f32 0.0, %v1344
      %v1346 = vpop.f32.mrb[0].mxu0
      %v1347 = vpop.f32.mrb[0].mxu0
      %v1348 = vadd.f32 0.0, %v1347
      %v1349 = vpop.f32.mrb[0].mxu0
      %1350 = vmatprep.mubr.bf16.mxu0 0
      %1351 = vmatmul.mubr.bf16.gmra.mrb[0].mxu0 %v1227
      %v1352 = vpop.f32.mrb[0].mxu0
      %v1353 = vadd.f32 0.0, %v1352
      %v1354 = vpop.f32.mrb[0].mxu0
      %v1355 = vpop.f32.mrb[0].mxu0
      %v1356 = vadd.f32 0.0, %v1355
      %v1357 = vpop.f32.mrb[0].mxu0
      %1358 = vmatprep.mubr.bf16.mxu0 0
      %1359 = vmatmul.mubr.bf16.gmra.mrb[0].mxu0 %v1230
      %v1360 = vpop.f32.mrb[0].mxu0
      %v1361 = vadd.f32 0.0, %v1360
      %v1362 = vpop.f32.mrb[0].mxu0
      %v1363 = vpop.f32.mrb[0].mxu0
      %v1364 = vadd.f32 0.0, %v1363
      %v1365 = vpop.f32.mrb[0].mxu0
      %1366 = vmatprep.mubr.bf16.mxu0 0
      %1367 = vmatmul.mubr.bf16.gmra.mrb[0].mxu0 %v1233
      %v1368 = vpop.f32.mrb[0].mxu0
      %v1369 = vadd.f32 0.0, %v1368
      %v1370 = vpop.f32.mrb[0].mxu0
      %v1371 = vpop.f32.mrb[0].mxu0
      %v1372 = vadd.f32 0.0, %v1371
      %v1373 = vpop.f32.mrb[0].mxu0
      %1374 = vmatprep.mubr.bf16.mxu0 0
      %1375 = vmatmul.mubr.bf16.gmra.mrb[0].mxu0 %v1236
      %v1376 = vpop.f32.mrb[0].mxu0
      %v1377 = vadd.f32 0.0, %v1376
      %v1378 = vpop.f32.mrb[0].mxu0
      %v1379 = vpop.f32.mrb[0].mxu0
      %v1380 = vadd.f32 0.0, %v1379
      %v1381 = vpop.f32.mrb[0].mxu0
      %1382 = vmatprep.mubr.bf16.mxu0 0
      %1383 = vmatmul.mubr.bf16.gmra.mrb[0].mxu0 %v1239
      %v1384 = vpop.f32.mrb[0].mxu0
      %v1385 = vadd.f32 0.0, %v1384
      %v1386 = vpop.f32.mrb[0].mxu0
      %v1387 = vpop.f32.mrb[0].mxu0
      %v1388 = vadd.f32 0.0, %v1387
      %v1389 = vpop.f32.mrb[0].mxu0
      %1390 = vmatprep.mubr.bf16.mxu0 0
      %1391 = vmatmul.mubr.bf16.gmra.mrb[0].mxu0 %v1242
      %v1392 = vpop.f32.mrb[0].mxu0
      %v1393 = vadd.f32 0.0, %v1392
      %v1394 = vpop.f32.mrb[0].mxu0
      %v1395 = vpop.f32.mrb[0].mxu0
      %v1396 = vadd.f32 0.0, %v1395
      %v1397 = vpop.f32.mrb[0].mxu0
      %1398 = vmatprep.mubr.bf16.mxu0 0
      %1399 = vmatmul.mubr.bf16.gmra.mrb[0].mxu0 %v1245
      %v1400 = vpop.f32.mrb[0].mxu0
      %v1401 = vadd.f32 0.0, %v1400
      %v1402 = vpop.f32.mrb[0].mxu0
      %v1403 = vpop.f32.mrb[0].mxu0
      %v1404 = vadd.f32 0.0, %v1403
      %v1405 = vpop.f32.mrb[0].mxu0
      %1406 = vmatprep.mubr.bf16.mxu0 0
      %1407 = vmatmul.mubr.bf16.gmra.mrb[0].mxu0 %v1248
      %v1408 = vpop.f32.mrb[0].mxu0
      %v1409 = vadd.f32 0.0, %v1408
      %v1410 = vpop.f32.mrb[0].mxu0
      %v1411 = vpop.f32.mrb[0].mxu0
      %v1412 = vadd.f32 0.0, %v1411
      %v1413 = vpop.f32.mrb[0].mxu0
      %1414 = vdwg.mxu0
      %v1416 = vsel %vm1201, %v1179, 0
      %v1419 = vsel %vm1250, %v1198, 0
      %1421 = vmatprep.subr.bf16.mxu0 0
      %1422 = vmatpush1.bf16.msra.mxu0 %v1419
      %1423 = vmatprep.subr.bf16.mxu0 0
      %1424 = vmatpush1.bf16.msra.mxu0 0
      %1425 = vmatprep.subr.bf16.mxu0 0
      %1426 = vmatpush1.bf16.msra.mxu0 0
      %1427 = vmatprep.subr.bf16.mxu0 0
      %1428 = vmatpush1.bf16.msra.mxu0 0
      %1429 = vmatprep.subr.bf16.mxu0 0
      %1430 = vmatpush1.bf16.msra.mxu0 0
      %1431 = vmatprep.subr.bf16.mxu0 0
      %1432 = vmatpush1.bf16.msra.mxu0 0
      %1433 = vmatprep.subr.bf16.mxu0 0
      %1434 = vmatpush1.bf16.msra.mxu0 0
      %1435 = vmatprep.subr.bf16.mxu0 0
      %1436 = vmatpush1.bf16.msra.mxu0 0
      %1437 = vmatprep.subr.bf16.mxu0 0
      %1438 = vmatpush1.bf16.msra.mxu0 0
      %1439 = vmatprep.subr.bf16.mxu0 0
      %1440 = vmatpush1.bf16.msra.mxu0 0
      %1441 = vmatprep.subr.bf16.mxu0 0
      %1442 = vmatpush1.bf16.msra.mxu0 0
      %1443 = vmatprep.subr.bf16.mxu0 0
      %1444 = vmatpush1.bf16.msra.mxu0 0
      %1445 = vmatprep.subr.bf16.mxu0 0
      %1446 = vmatpush1.bf16.msra.mxu0 0
      %1447 = vmatprep.subr.bf16.mxu0 0
      %1448 = vmatpush1.bf16.msra.mxu0 0
      %1449 = vmatprep.subr.bf16.mxu0 0
      %1450 = vmatpush1.bf16.msra.mxu0 0
      %1451 = vmatprep.subr.bf16.mxu0 0
      %1452 = vmatpush1.bf16.msra.mxu0 0
      %1453 = vmatprep.mubr.bf16.mxu0 0
      %1454 = vmatmul.mubr.bf16.gmra.mrb[0].mxu0 %v1416
      %v1455 = vpop.f32.mrb[0].mxu0
      %v1456 = vadd.f32 %v1289, %v1455
      %v1457 = vpop.f32.mrb[0].mxu0
      %v1458 = vpop.f32.mrb[0].mxu0
      %v1459 = vadd.f32 %v1292, %v1458
      %v1460 = vpop.f32.mrb[0].mxu0
      %1461 = vmatprep.mubr.bf16.mxu0 0
      %1462 = vmatmul.mubr.bf16.gmra.mrb[0].mxu0 %v1203
      %v1463 = vpop.f32.mrb[0].mxu0
      %v1464 = vadd.f32 %v1297, %v1463
      %v1465 = vpop.f32.mrb[0].mxu0
      %v1466 = vpop.f32.mrb[0].mxu0
      %v1467 = vadd.f32 %v1300, %v1466
      %v1468 = vpop.f32.mrb[0].mxu0
      %1469 = vmatprep.mubr.bf16.mxu0 0
      %1470 = vmatmul.mubr.bf16.gmra.mrb[0].mxu0 %v1206
      %v1471 = vpop.f32.mrb[0].mxu0
      %v1472 = vadd.f32 %v1305, %v1471
      %v1473 = vpop.f32.mrb[0].mxu0
      %v1474 = vpop.f32.mrb[0].mxu0
      %v1475 = vadd.f32 %v1308, %v1474
      %v1476 = vpop.f32.mrb[0].mxu0
      %1477 = vmatprep.mubr.bf16.mxu0 0
      %1478 = vmatmul.mubr.bf16.gmra.mrb[0].mxu0 %v1209
      %v1479 = vpop.f32.mrb[0].mxu0
      %v1480 = vadd.f32 %v1313, %v1479
      %v1481 = vpop.f32.mrb[0].mxu0
      %v1482 = vpop.f32.mrb[0].mxu0
      %v1483 = vadd.f32 %v1316, %v1482
      %v1484 = vpop.f32.mrb[0].mxu0
      %1485 = vmatprep.mubr.bf16.mxu0 0
      %1486 = vmatmul.mubr.bf16.gmra.mrb[0].mxu0 %v1212
      %v1487 = vpop.f32.mrb[0].mxu0
      %v1488 = vadd.f32 %v1321, %v1487
      %v1489 = vpop.f32.mrb[0].mxu0
      %v1490 = vpop.f32.mrb[0].mxu0
      %v1491 = vadd.f32 %v1324, %v1490
      %v1492 = vpop.f32.mrb[0].mxu0
      %1493 = vmatprep.mubr.bf16.mxu0 0
      %1494 = vmatmul.mubr.bf16.gmra.mrb[0].mxu0 %v1215
      %v1495 = vpop.f32.mrb[0].mxu0
      %v1496 = vadd.f32 %v1329, %v1495
      %v1497 = vpop.f32.mrb[0].mxu0
      %v1498 = vpop.f32.mrb[0].mxu0
      %v1499 = vadd.f32 %v1332, %v1498
      %v1500 = vpop.f32.mrb[0].mxu0
      %1501 = vmatprep.mubr.bf16.mxu0 0
      %1502 = vmatmul.mubr.bf16.gmra.mrb[0].mxu0 %v1218
      %v1503 = vpop.f32.mrb[0].mxu0
      %v1504 = vadd.f32 %v1337, %v1503
      %v1505 = vpop.f32.mrb[0].mxu0
      %v1506 = vpop.f32.mrb[0].mxu0
      %v1507 = vadd.f32 %v1340, %v1506
      %v1508 = vpop.f32.mrb[0].mxu0
      %1509 = vmatprep.mubr.bf16.mxu0 0
      %1510 = vmatmul.mubr.bf16.gmra.mrb[0].mxu0 %v1221
      %v1511 = vpop.f32.mrb[0].mxu0
      %v1512 = vadd.f32 %v1345, %v1511
      %v1513 = vpop.f32.mrb[0].mxu0
      %v1514 = vpop.f32.mrb[0].mxu0
      %v1515 = vadd.f32 %v1348, %v1514
      %v1516 = vpop.f32.mrb[0].mxu0
      %1517 = vmatprep.mubr.bf16.mxu0 0
      %1518 = vmatmul.mubr.bf16.gmra.mrb[0].mxu0 %v1224
      %v1519 = vpop.f32.mrb[0].mxu0
      %v1520 = vadd.f32 %v1353, %v1519
      %v1521 = vpop.f32.mrb[0].mxu0
      %v1522 = vpop.f32.mrb[0].mxu0
      %v1523 = vadd.f32 %v1356, %v1522
      %v1524 = vpop.f32.mrb[0].mxu0
      %1525 = vmatprep.mubr.bf16.mxu0 0
      %1526 = vmatmul.mubr.bf16.gmra.mrb[0].mxu0 %v1227
      %v1527 = vpop.f32.mrb[0].mxu0
      %v1528 = vadd.f32 %v1361, %v1527
      %v1529 = vpop.f32.mrb[0].mxu0
      %v1530 = vpop.f32.mrb[0].mxu0
      %v1531 = vadd.f32 %v1364, %v1530
      %v1532 = vpop.f32.mrb[0].mxu0
      %1533 = vmatprep.mubr.bf16.mxu0 0
      %1534 = vmatmul.mubr.bf16.gmra.mrb[0].mxu0 %v1230
      %v1535 = vpop.f32.mrb[0].mxu0
      %v1536 = vadd.f32 %v1369, %v1535
      %v1537 = vpop.f32.mrb[0].mxu0
      %v1538 = vpop.f32.mrb[0].mxu0
      %v1539 = vadd.f32 %v1372, %v1538
      %v1540 = vpop.f32.mrb[0].mxu0
      %1541 = vmatprep.mubr.bf16.mxu0 0
      %1542 = vmatmul.mubr.bf16.gmra.mrb[0].mxu0 %v1233
      %v1543 = vpop.f32.mrb[0].mxu0
      %v1544 = vadd.f32 %v1377, %v1543
      %v1545 = vpop.f32.mrb[0].mxu0
      %v1546 = vpop.f32.mrb[0].mxu0
      %v1547 = vadd.f32 %v1380, %v1546
      %v1548 = vpop.f32.mrb[0].mxu0
      %1549 = vmatprep.mubr.bf16.mxu0 0
      %1550 = vmatmul.mubr.bf16.gmra.mrb[0].mxu0 %v1236
      %v1551 = vpop.f32.mrb[0].mxu0
      %v1552 = vadd.f32 %v1385, %v1551
      %v1553 = vpop.f32.mrb[0].mxu0
      %v1554 = vpop.f32.mrb[0].mxu0
      %v1555 = vadd.f32 %v1388, %v1554
      %v1556 = vpop.f32.mrb[0].mxu0
      %1557 = vmatprep.mubr.bf16.mxu0 0
      %1558 = vmatmul.mubr.bf16.gmra.mrb[0].mxu0 %v1239
      %v1559 = vpop.f32.mrb[0].mxu0
      %v1560 = vadd.f32 %v1393, %v1559
      %v1561 = vpop.f32.mrb[0].mxu0
      %v1562 = vpop.f32.mrb[0].mxu0
      %v1563 = vadd.f32 %v1396, %v1562
      %v1564 = vpop.f32.mrb[0].mxu0
      %1565 = vmatprep.mubr.bf16.mxu0 0
      %1566 = vmatmul.mubr.bf16.gmra.mrb[0].mxu0 %v1242
      %v1567 = vpop.f32.mrb[0].mxu0
      %v1568 = vadd.f32 %v1401, %v1567
      %v1569 = vpop.f32.mrb[0].mxu0
      %v1570 = vpop.f32.mrb[0].mxu0
      %v1571 = vadd.f32 %v1404, %v1570
      %v1572 = vpop.f32.mrb[0].mxu0
      %1573 = vmatprep.mubr.bf16.mxu0 0
      %1574 = vmatmul.mubr.bf16.gmra.mrb[0].mxu0 %v1245
      %v1575 = vpop.f32.mrb[0].mxu0
      %v1576 = vadd.f32 %v1409, %v1575
      %v1577 = vpop.f32.mrb[0].mxu0
      %v1578 = vpop.f32.mrb[0].mxu0
      %v1579 = vadd.f32 %v1412, %v1578
      %v1580 = vpop.f32.mrb[0].mxu0
      %1581 = vdwg.mxu0
      %s1582 = scalar_lea.vmem %s8, 28
      %v1583 = vld [vmem:[%s1582] sm:$0xf]
      %v1585 = vsel %vm1201, %v1196, 0
      %v1588 = vsel %vm1250, %v1583, 0
      %1590 = vmatprep.subr.bf16.mxu0 0
      %1591 = vmatpush1.bf16.msra.mxu0 %v1588
      %1592 = vmatprep.subr.bf16.mxu0 0
      %1593 = vmatpush1.bf16.msra.mxu0 0
      %1594 = vmatprep.subr.bf16.mxu0 0
      %1595 = vmatpush1.bf16.msra.mxu0 0
      %1596 = vmatprep.subr.bf16.mxu0 0
      %1597 = vmatpush1.bf16.msra.mxu0 0
      %1598 = vmatprep.subr.bf16.mxu0 0
      %1599 = vmatpush1.bf16.msra.mxu0 0
      %1600 = vmatprep.subr.bf16.mxu0 0
      %1601 = vmatpush1.bf16.msra.mxu0 0
      %1602 = vmatprep.subr.bf16.mxu0 0
      %1603 = vmatpush1.bf16.msra.mxu0 0
      %1604 = vmatprep.subr.bf16.mxu0 0
      %1605 = vmatpush1.bf16.msra.mxu0 0
      %1606 = vmatprep.subr.bf16.mxu0 0
      %1607 = vmatpush1.bf16.msra.mxu0 0
      %1608 = vmatprep.subr.bf16.mxu0 0
      %1609 = vmatpush1.bf16.msra.mxu0 0
      %1610 = vmatprep.subr.bf16.mxu0 0
      %1611 = vmatpush1.bf16.msra.mxu0 0
      %1612 = vmatprep.subr.bf16.mxu0 0
      %1613 = vmatpush1.bf16.msra.mxu0 0
      %1614 = vmatprep.subr.bf16.mxu0 0
      %1615 = vmatpush1.bf16.msra.mxu0 0
      %1616 = vmatprep.subr.bf16.mxu0 0
      %1617 = vmatpush1.bf16.msra.mxu0 0
      %1618 = vmatprep.subr.bf16.mxu0 0
      %1619 = vmatpush1.bf16.msra.mxu0 0
      %1620 = vmatprep.subr.bf16.mxu0 0
      %1621 = vmatpush1.bf16.msra.mxu0 0
      %1622 = vmatprep.mubr.bf16.mxu0 0
      %1623 = vmatmul.mubr.bf16.gmra.mrb[0].mxu0 %v1206
      %v1624 = vpop.f32.mrb[0].mxu0
      %v1625 = vadd.f32 0.0, %v1624
      %v1626 = vpop.f32.mrb[0].mxu0
      %v1627 = vpop.f32.mrb[0].mxu0
      %v1628 = vadd.f32 0.0, %v1627
      %v1629 = vpop.f32.mrb[0].mxu0
      %1630 = vmatprep.mubr.bf16.mxu0 0
      %1631 = vmatmul.mubr.bf16.gmra.mrb[0].mxu0 %v1209
      %v1632 = vpop.f32.mrb[0].mxu0
      %v1633 = vadd.f32 0.0, %v1632
      %v1634 = vpop.f32.mrb[0].mxu0
      %v1635 = vpop.f32.mrb[0].mxu0
      %v1636 = vadd.f32 0.0, %v1635
      %v1637 = vpop.f32.mrb[0].mxu0
      %1638 = vmatprep.mubr.bf16.mxu0 0
      %1639 = vmatmul.mubr.bf16.gmra.mrb[0].mxu0 %v1212
      %v1640 = vpop.f32.mrb[0].mxu0
      %v1641 = vadd.f32 0.0, %v1640
      %v1642 = vpop.f32.mrb[0].mxu0
      %v1643 = vpop.f32.mrb[0].mxu0
      %v1644 = vadd.f32 0.0, %v1643
      %v1645 = vpop.f32.mrb[0].mxu0
      %1646 = vmatprep.mubr.bf16.mxu0 0
      %1647 = vmatmul.mubr.bf16.gmra.mrb[0].mxu0 %v1215
      %v1648 = vpop.f32.mrb[0].mxu0
      %v1649 = vadd.f32 0.0, %v1648
      %v1650 = vpop.f32.mrb[0].mxu0
      %v1651 = vpop.f32.mrb[0].mxu0
      %v1652 = vadd.f32 0.0, %v1651
      %v1653 = vpop.f32.mrb[0].mxu0
      %1654 = vmatprep.mubr.bf16.mxu0 0
      %1655 = vmatmul.mubr.bf16.gmra.mrb[0].mxu0 %v1218
      %v1656 = vpop.f32.mrb[0].mxu0
      %v1657 = vadd.f32 0.0, %v1656
      %v1658 = vpop.f32.mrb[0].mxu0
      %v1659 = vpop.f32.mrb[0].mxu0
      %v1660 = vadd.f32 0.0, %v1659
      %v1661 = vpop.f32.mrb[0].mxu0
      %1662 = vmatprep.mubr.bf16.mxu0 0
      %1663 = vmatmul.mubr.bf16.gmra.mrb[0].mxu0 %v1221
      %v1664 = vpop.f32.mrb[0].mxu0
      %v1665 = vadd.f32 0.0, %v1664
      %v1666 = vpop.f32.mrb[0].mxu0
      %v1667 = vpop.f32.mrb[0].mxu0
      %v1668 = vadd.f32 0.0, %v1667
      %v1669 = vpop.f32.mrb[0].mxu0
      %1670 = vmatprep.mubr.bf16.mxu0 0
      %1671 = vmatmul.mubr.bf16.gmra.mrb[0].mxu0 %v1224
      %v1672 = vpop.f32.mrb[0].mxu0
      %v1673 = vadd.f32 0.0, %v1672
      %v1674 = vpop.f32.mrb[0].mxu0
      %v1675 = vpop.f32.mrb[0].mxu0
      %v1676 = vadd.f32 0.0, %v1675
      %v1677 = vpop.f32.mrb[0].mxu0
      %1678 = vmatprep.mubr.bf16.mxu0 0
      %1679 = vmatmul.mubr.bf16.gmra.mrb[0].mxu0 %v1227
      %v1680 = vpop.f32.mrb[0].mxu0
      %v1681 = vadd.f32 0.0, %v1680
      %v1682 = vpop.f32.mrb[0].mxu0
      %v1683 = vpop.f32.mrb[0].mxu0
      %v1684 = vadd.f32 0.0, %v1683
      %v1685 = vpop.f32.mrb[0].mxu0
      %1686 = vmatprep.mubr.bf16.mxu0 0
      %1687 = vmatmul.mubr.bf16.gmra.mrb[0].mxu0 %v1230
      %v1688 = vpop.f32.mrb[0].mxu0
      %v1689 = vadd.f32 0.0, %v1688
      %v1690 = vpop.f32.mrb[0].mxu0
      %v1691 = vpop.f32.mrb[0].mxu0
      %v1692 = vadd.f32 0.0, %v1691
      %v1693 = vpop.f32.mrb[0].mxu0
      %1694 = vmatprep.mubr.bf16.mxu0 0
      %1695 = vmatmul.mubr.bf16.gmra.mrb[0].mxu0 %v1233
      %v1696 = vpop.f32.mrb[0].mxu0
      %v1697 = vadd.f32 0.0, %v1696
      %v1698 = vpop.f32.mrb[0].mxu0
      %v1699 = vpop.f32.mrb[0].mxu0
      %v1700 = vadd.f32 0.0, %v1699
      %v1701 = vpop.f32.mrb[0].mxu0
      %1702 = vmatprep.mubr.bf16.mxu0 0
      %1703 = vmatmul.mubr.bf16.gmra.mrb[0].mxu0 %v1236
      %v1704 = vpop.f32.mrb[0].mxu0
      %v1705 = vadd.f32 0.0, %v1704
      %v1706 = vpop.f32.mrb[0].mxu0
      %v1707 = vpop.f32.mrb[0].mxu0
      %v1708 = vadd.f32 0.0, %v1707
      %v1709 = vpop.f32.mrb[0].mxu0
      %1710 = vmatprep.mubr.bf16.mxu0 0
      %1711 = vmatmul.mubr.bf16.gmra.mrb[0].mxu0 %v1239
      %v1712 = vpop.f32.mrb[0].mxu0
      %v1713 = vadd.f32 0.0, %v1712
      %v1714 = vpop.f32.mrb[0].mxu0
      %v1715 = vpop.f32.mrb[0].mxu0
      %v1716 = vadd.f32 0.0, %v1715
      %v1717 = vpop.f32.mrb[0].mxu0
      %1718 = vmatprep.mubr.bf16.mxu0 0
      %1719 = vmatmul.mubr.bf16.gmra.mrb[0].mxu0 %v1242
      %v1720 = vpop.f32.mrb[0].mxu0
      %v1721 = vadd.f32 0.0, %v1720
      %v1722 = vpop.f32.mrb[0].mxu0
      %v1723 = vpop.f32.mrb[0].mxu0
      %v1724 = vadd.f32 0.0, %v1723
      %v1725 = vpop.f32.mrb[0].mxu0
      %1726 = vmatprep.mubr.bf16.mxu0 0
      %1727 = vmatmul.mubr.bf16.gmra.mrb[0].mxu0 %v1245
      %v1728 = vpop.f32.mrb[0].mxu0
      %v1729 = vadd.f32 0.0, %v1728
      %v1730 = vpop.f32.mrb[0].mxu0
      %v1731 = vpop.f32.mrb[0].mxu0
      %v1732 = vadd.f32 0.0, %v1731
      %v1733 = vpop.f32.mrb[0].mxu0
      %1734 = vmatprep.mubr.bf16.mxu0 0
      %1735 = vmatmul.mubr.bf16.gmra.mrb[0].mxu0 %v1248
      %v1736 = vpop.f32.mrb[0].mxu0
      %v1737 = vadd.f32 0.0, %v1736
      %v1738 = vpop.f32.mrb[0].mxu0
      %v1739 = vpop.f32.mrb[0].mxu0
      %v1740 = vadd.f32 0.0, %v1739
      %v1741 = vpop.f32.mrb[0].mxu0
      %1742 = vmatprep.mubr.bf16.mxu0 0
      %1743 = vmatmul.mubr.bf16.gmra.mrb[0].mxu0 %v1585
      %v1744 = vpop.f32.mrb[0].mxu0
      %v1745 = vadd.f32 0.0, %v1744
      %v1746 = vpop.f32.mrb[0].mxu0
      %v1747 = vpop.f32.mrb[0].mxu0
      %v1748 = vadd.f32 0.0, %v1747
      %v1749 = vpop.f32.mrb[0].mxu0
      %1750 = vdwg.mxu0
      %v1751 = vadd.f32 %v1456, %v1625
      %v1752 = vadd.f32 %v1459, %v1628
      %v1753 = vadd.f32 %v1464, %v1633
      %v1754 = vadd.f32 %v1467, %v1636
      %v1755 = vadd.f32 %v1472, %v1641
      %v1756 = vadd.f32 %v1475, %v1644
      %v1757 = vadd.f32 %v1480, %v1649
      %v1758 = vadd.f32 %v1483, %v1652
      %v1759 = vadd.f32 %v1488, %v1657
      %v1760 = vadd.f32 %v1491, %v1660
      %v1761 = vadd.f32 %v1496, %v1665
      %v1762 = vadd.f32 %v1499, %v1668
      %v1763 = vadd.f32 %v1504, %v1673
      %v1764 = vadd.f32 %v1507, %v1676
      %v1765 = vadd.f32 %v1512, %v1681
      %v1766 = vadd.f32 %v1515, %v1684
      %v1767 = vadd.f32 %v1520, %v1689
      %v1768 = vadd.f32 %v1523, %v1692
      %v1769 = vadd.f32 %v1528, %v1697
      %v1770 = vadd.f32 %v1531, %v1700
      %v1771 = vadd.f32 %v1536, %v1705
      %v1772 = vadd.f32 %v1539, %v1708
      %v1773 = vadd.f32 %v1544, %v1713
      %v1774 = vadd.f32 %v1547, %v1716
      %v1775 = vadd.f32 %v1552, %v1721
      %v1776 = vadd.f32 %v1555, %v1724
      %v1777 = vadd.f32 %v1560, %v1729
      %v1778 = vadd.f32 %v1563, %v1732
      %v1779 = vadd.f32 %v1568, %v1737
      %v1780 = vadd.f32 %v1571, %v1740
      %v1781 = vadd.f32 %v1576, %v1745
      %v1782 = vadd.f32 %v1579, %v1748
      %v1783 = vrot.slane %v1101, 1
      %v1784 = vrot.slane %v1102, 1
      %v1785 = vrot.slane %v1103, 1
      %v1786 = vrot.slane %v1104, 1
      %v1787 = vrot.slane %v1105, 1
      %v1788 = vrot.slane %v1106, 1
      %v1789 = vrot.slane %v1107, 1
      %v1790 = vrot.slane %v1108, 1
      %v1791 = vrot.slane %v1109, 1
      %v1792 = vrot.slane %v1110, 1
      %v1793 = vrot.slane %v1111, 1
      %v1794 = vrot.slane %v1112, 1
      %v1795 = vrot.slane %v1113, 1
      %v1796 = vrot.slane %v1114, 1
      %v1797 = vrot.slane %v1115, 1
      %v1798 = vrot.slane %v1116, 1
      %v1799 = vrot.slane %v1117, 1
      %v1800 = vrot.slane %v1118, 1
      %v1801 = vrot.slane %v1119, 1
      %v1802 = vrot.slane %v1120, 1
      %v1803 = vrot.slane %v1121, 1
      %v1804 = vrot.slane %v1122, 1
      %v1805 = vrot.slane %v1123, 1
      %v1806 = vrot.slane %v1124, 1
      %v1807 = vrot.slane %v1125, 1
      %v1808 = vrot.slane %v1126, 1
      %v1809 = vrot.slane %v1127, 1
      %v1810 = vrot.slane %v1128, 1
      %v1811 = vrot.slane %v1129, 1
      %v1812 = vrot.slane %v1130, 1
      %v1813 = vrot.slane %v1131, 1
      %v1814 = vrot.slane %v1132, 1
      %v1815 = vrot.slane %v1133, 1
      %v1816 = vrot.slane %v1134, 1
      %v1817 = vrot.slane %v1135, 1
      %v1818 = vrot.slane %v1136, 1
      %vm1819 = vcmp.lt.s32.totalorder %v1093, 7
      %v1820 = vsel %vm1819, %v1817, %v1818
      %v1821 = vsel %vm1819, %v1816, %v1817
      %v1822 = vsel %vm1819, %v1815, %v1816
      %v1823 = vsel %vm1819, %v1814, %v1815
      %v1824 = vsel %vm1819, %v1813, %v1814
      %v1825 = vsel %vm1819, %v1812, %v1813
      %v1826 = vsel %vm1819, %v1811, %v1812
      %v1827 = vsel %vm1819, %v1810, %v1811
      %v1828 = vsel %vm1819, %v1809, %v1810
      %v1829 = vsel %vm1819, %v1808, %v1809
      %v1830 = vsel %vm1819, %v1807, %v1808
      %v1831 = vsel %vm1819, %v1806, %v1807
      %v1832 = vsel %vm1819, %v1805, %v1806
      %v1833 = vsel %vm1819, %v1804, %v1805
      %v1834 = vsel %vm1819, %v1803, %v1804
      %v1835 = vsel %vm1819, %v1802, %v1803
      %v1836 = vsel %vm1819, %v1801, %v1802
      %v1837 = vsel %vm1819, %v1800, %v1801
      %v1838 = vsel %vm1819, %v1799, %v1800
      %v1839 = vsel %vm1819, %v1798, %v1799
      %v1840 = vsel %vm1819, %v1797, %v1798
      %v1841 = vsel %vm1819, %v1796, %v1797
      %v1842 = vsel %vm1819, %v1795, %v1796
      %v1843 = vsel %vm1819, %v1794, %v1795
      %v1844 = vsel %vm1819, %v1793, %v1794
      %v1845 = vsel %vm1819, %v1792, %v1793
      %v1846 = vsel %vm1819, %v1791, %v1792
      %v1847 = vsel %vm1819, %v1790, %v1791
      %v1848 = vsel %vm1819, %v1789, %v1790
      %v1849 = vsel %vm1819, %v1788, %v1789
      %v1850 = vsel %vm1819, %v1787, %v1788
      %v1851 = vsel %vm1819, %v1786, %v1787
      %v1852 = vsel %vm1819, %v1785, %v1786
      %v1853 = vsel %vm1819, %v1784, %v1785
      %v1854 = vsel %vm1819, %v1783, %v1784
      %v1855 = vsel %vm1819, %v1818, %v1783
      %v1856 = vpack.c.bf16 %v1853, %v1854
      %v1857 = vpack.c.bf16 %v1851, %v1852
      %v1858 = vpack.c.bf16 %v1849, %v1850
      %v1859 = vpack.c.bf16 %v1847, %v1848
      %v1860 = vpack.c.bf16 %v1845, %v1846
      %v1861 = vpack.c.bf16 %v1843, %v1844
      %v1862 = vpack.c.bf16 %v1841, %v1842
      %v1863 = vpack.c.bf16 %v1839, %v1840
      %v1864 = vpack.c.bf16 %v1837, %v1838
      %v1865 = vpack.c.bf16 %v1835, %v1836
      %v1866 = vpack.c.bf16 %v1833, %v1834
      %v1867 = vpack.c.bf16 %v1831, %v1832
      %v1868 = vpack.c.bf16 %v1829, %v1830
      %v1869 = vpack.c.bf16 %v1827, %v1828
      %v1870 = vpack.c.bf16 %v1825, %v1826
      %v1871 = vpack.c.bf16 %v1823, %v1824
      %v1872 = vpack.c.bf16 %v1821, %v1822
      %v1873 = vpack.c.bf16 %v1855, %v1820
      %s1874 = scalar_lea.vmem %s8, 8
      %v1875 = vld [vmem:[%s1874] sm:$0xf]
      %v1877 = vsel %vm1201, %v1856, 0
      %v1880 = vsel %vm1201, %v1857, 0
      %v1883 = vsel %vm1201, %v1858, 0
      %v1886 = vsel %vm1201, %v1859, 0
      %v1889 = vsel %vm1201, %v1860, 0
      %v1892 = vsel %vm1201, %v1861, 0
      %v1895 = vsel %vm1201, %v1862, 0
      %v1898 = vsel %vm1201, %v1863, 0
      %v1901 = vsel %vm1201, %v1864, 0
      %v1904 = vsel %vm1201, %v1865, 0
      %v1907 = vsel %vm1201, %v1866, 0
      %v1910 = vsel %vm1201, %v1867, 0
      %v1913 = vsel %vm1201, %v1868, 0
      %v1916 = vsel %vm1201, %v1869, 0
      %v1919 = vsel %vm1201, %v1870, 0
      %v1922 = vsel %vm1201, %v1871, 0
      %v1925 = vsel %vm1250, %v1875, 0
      %1927 = vmatprep.subr.bf16.mxu0 0
      %1928 = vmatpush1.bf16.msra.mxu0 %v1925
      %1929 = vmatprep.subr.bf16.mxu0 0
      %1930 = vmatpush1.bf16.msra.mxu0 0
      %1931 = vmatprep.subr.bf16.mxu0 0
      %1932 = vmatpush1.bf16.msra.mxu0 0
      %1933 = vmatprep.subr.bf16.mxu0 0
      %1934 = vmatpush1.bf16.msra.mxu0 0
      %1935 = vmatprep.subr.bf16.mxu0 0
      %1936 = vmatpush1.bf16.msra.mxu0 0
      %1937 = vmatprep.subr.bf16.mxu0 0
      %1938 = vmatpush1.bf16.msra.mxu0 0
      %1939 = vmatprep.subr.bf16.mxu0 0
      %1940 = vmatpush1.bf16.msra.mxu0 0
      %1941 = vmatprep.subr.bf16.mxu0 0
      %1942 = vmatpush1.bf16.msra.mxu0 0
      %1943 = vmatprep.subr.bf16.mxu0 0
      %1944 = vmatpush1.bf16.msra.mxu0 0
      %1945 = vmatprep.subr.bf16.mxu0 0
      %1946 = vmatpush1.bf16.msra.mxu0 0
      %1947 = vmatprep.subr.bf16.mxu0 0
      %1948 = vmatpush1.bf16.msra.mxu0 0
      %1949 = vmatprep.subr.bf16.mxu0 0
      %1950 = vmatpush1.bf16.msra.mxu0 0
      %1951 = vmatprep.subr.bf16.mxu0 0
      %1952 = vmatpush1.bf16.msra.mxu0 0
      %1953 = vmatprep.subr.bf16.mxu0 0
      %1954 = vmatpush1.bf16.msra.mxu0 0
      %1955 = vmatprep.subr.bf16.mxu0 0
      %1956 = vmatpush1.bf16.msra.mxu0 0
      %1957 = vmatprep.subr.bf16.mxu0 0
      %1958 = vmatpush1.bf16.msra.mxu0 0
      %1959 = vmatprep.mubr.bf16.mxu0 0
      %1960 = vmatmul.mubr.bf16.gmra.mrb[0].mxu0 %v1877
      %v1961 = vpop.f32.mrb[0].mxu0
      %v1962 = vadd.f32 0.0, %v1961
      %v1963 = vpop.f32.mrb[0].mxu0
      %v1964 = vpop.f32.mrb[0].mxu0
      %v1965 = vadd.f32 0.0, %v1964
      %v1966 = vpop.f32.mrb[0].mxu0
      %1967 = vmatprep.mubr.bf16.mxu0 0
      %1968 = vmatmul.mubr.bf16.gmra.mrb[0].mxu0 %v1880
      %v1969 = vpop.f32.mrb[0].mxu0
      %v1970 = vadd.f32 0.0, %v1969
      %v1971 = vpop.f32.mrb[0].mxu0
      %v1972 = vpop.f32.mrb[0].mxu0
      %v1973 = vadd.f32 0.0, %v1972
      %v1974 = vpop.f32.mrb[0].mxu0
      %1975 = vmatprep.mubr.bf16.mxu0 0
      %1976 = vmatmul.mubr.bf16.gmra.mrb[0].mxu0 %v1883
      %v1977 = vpop.f32.mrb[0].mxu0
      %v1978 = vadd.f32 0.0, %v1977
      %v1979 = vpop.f32.mrb[0].mxu0
      %v1980 = vpop.f32.mrb[0].mxu0
      %v1981 = vadd.f32 0.0, %v1980
      %v1982 = vpop.f32.mrb[0].mxu0
      %1983 = vmatprep.mubr.bf16.mxu0 0
      %1984 = vmatmul.mubr.bf16.gmra.mrb[0].mxu0 %v1886
      %v1985 = vpop.f32.mrb[0].mxu0
      %v1986 = vadd.f32 0.0, %v1985
      %v1987 = vpop.f32.mrb[0].mxu0
      %v1988 = vpop.f32.mrb[0].mxu0
      %v1989 = vadd.f32 0.0, %v1988
      %v1990 = vpop.f32.mrb[0].mxu0
      %1991 = vmatprep.mubr.bf16.mxu0 0
      %1992 = vmatmul.mubr.bf16.gmra.mrb[0].mxu0 %v1889
      %v1993 = vpop.f32.mrb[0].mxu0
      %v1994 = vadd.f32 0.0, %v1993
      %v1995 = vpop.f32.mrb[0].mxu0
      %v1996 = vpop.f32.mrb[0].mxu0
      %v1997 = vadd.f32 0.0, %v1996
      %v1998 = vpop.f32.mrb[0].mxu0
      %1999 = vmatprep.mubr.bf16.mxu0 0
      %2000 = vmatmul.mubr.bf16.gmra.mrb[0].mxu0 %v1892
      %v2001 = vpop.f32.mrb[0].mxu0
      %v2002 = vadd.f32 0.0, %v2001
      %v2003 = vpop.f32.mrb[0].mxu0
      %v2004 = vpop.f32.mrb[0].mxu0
      %v2005 = vadd.f32 0.0, %v2004
      %v2006 = vpop.f32.mrb[0].mxu0
      %2007 = vmatprep.mubr.bf16.mxu0 0
      %2008 = vmatmul.mubr.bf16.gmra.mrb[0].mxu0 %v1895
      %v2009 = vpop.f32.mrb[0].mxu0
      %v2010 = vadd.f32 0.0, %v2009
      %v2011 = vpop.f32.mrb[0].mxu0
      %v2012 = vpop.f32.mrb[0].mxu0
      %v2013 = vadd.f32 0.0, %v2012
      %v2014 = vpop.f32.mrb[0].mxu0
      %2015 = vmatprep.mubr.bf16.mxu0 0
      %2016 = vmatmul.mubr.bf16.gmra.mrb[0].mxu0 %v1898
      %v2017 = vpop.f32.mrb[0].mxu0
      %v2018 = vadd.f32 0.0, %v2017
      %v2019 = vpop.f32.mrb[0].mxu0
      %v2020 = vpop.f32.mrb[0].mxu0
      %v2021 = vadd.f32 0.0, %v2020
      %v2022 = vpop.f32.mrb[0].mxu0
      %2023 = vmatprep.mubr.bf16.mxu0 0
      %2024 = vmatmul.mubr.bf16.gmra.mrb[0].mxu0 %v1901
      %v2025 = vpop.f32.mrb[0].mxu0
      %v2026 = vadd.f32 0.0, %v2025
      %v2027 = vpop.f32.mrb[0].mxu0
      %v2028 = vpop.f32.mrb[0].mxu0
      %v2029 = vadd.f32 0.0, %v2028
      %v2030 = vpop.f32.mrb[0].mxu0
      %2031 = vmatprep.mubr.bf16.mxu0 0
      %2032 = vmatmul.mubr.bf16.gmra.mrb[0].mxu0 %v1904
      %v2033 = vpop.f32.mrb[0].mxu0
      %v2034 = vadd.f32 0.0, %v2033
      %v2035 = vpop.f32.mrb[0].mxu0
      %v2036 = vpop.f32.mrb[0].mxu0
      %v2037 = vadd.f32 0.0, %v2036
      %v2038 = vpop.f32.mrb[0].mxu0
      %2039 = vmatprep.mubr.bf16.mxu0 0
      %2040 = vmatmul.mubr.bf16.gmra.mrb[0].mxu0 %v1907
      %v2041 = vpop.f32.mrb[0].mxu0
      %v2042 = vadd.f32 0.0, %v2041
      %v2043 = vpop.f32.mrb[0].mxu0
      %v2044 = vpop.f32.mrb[0].mxu0
      %v2045 = vadd.f32 0.0, %v2044
      %v2046 = vpop.f32.mrb[0].mxu0
      %2047 = vmatprep.mubr.bf16.mxu0 0
      %2048 = vmatmul.mubr.bf16.gmra.mrb[0].mxu0 %v1910
      %v2049 = vpop.f32.mrb[0].mxu0
      %v2050 = vadd.f32 0.0, %v2049
      %v2051 = vpop.f32.mrb[0].mxu0
      %v2052 = vpop.f32.mrb[0].mxu0
      %v2053 = vadd.f32 0.0, %v2052
      %v2054 = vpop.f32.mrb[0].mxu0
      %2055 = vmatprep.mubr.bf16.mxu0 0
      %2056 = vmatmul.mubr.bf16.gmra.mrb[0].mxu0 %v1913
      %v2057 = vpop.f32.mrb[0].mxu0
      %v2058 = vadd.f32 0.0, %v2057
      %v2059 = vpop.f32.mrb[0].mxu0
      %v2060 = vpop.f32.mrb[0].mxu0
      %v2061 = vadd.f32 0.0, %v2060
      %v2062 = vpop.f32.mrb[0].mxu0
      %2063 = vmatprep.mubr.bf16.mxu0 0
      %2064 = vmatmul.mubr.bf16.gmra.mrb[0].mxu0 %v1916
      %v2065 = vpop.f32.mrb[0].mxu0
      %v2066 = vadd.f32 0.0, %v2065
      %v2067 = vpop.f32.mrb[0].mxu0
      %v2068 = vpop.f32.mrb[0].mxu0
      %v2069 = vadd.f32 0.0, %v2068
      %v2070 = vpop.f32.mrb[0].mxu0
      %2071 = vmatprep.mubr.bf16.mxu0 0
      %2072 = vmatmul.mubr.bf16.gmra.mrb[0].mxu0 %v1919
      %v2073 = vpop.f32.mrb[0].mxu0
      %v2074 = vadd.f32 0.0, %v2073
      %v2075 = vpop.f32.mrb[0].mxu0
      %v2076 = vpop.f32.mrb[0].mxu0
      %v2077 = vadd.f32 0.0, %v2076
      %v2078 = vpop.f32.mrb[0].mxu0
      %2079 = vmatprep.mubr.bf16.mxu0 0
      %2080 = vmatmul.mubr.bf16.gmra.mrb[0].mxu0 %v1922
      %v2081 = vpop.f32.mrb[0].mxu0
      %v2082 = vadd.f32 0.0, %v2081
      %v2083 = vpop.f32.mrb[0].mxu0
      %v2084 = vpop.f32.mrb[0].mxu0
      %v2085 = vadd.f32 0.0, %v2084
      %v2086 = vpop.f32.mrb[0].mxu0
      %2087 = vdwg.mxu0
      %v2088 = vadd.f32 %v1751, %v1962
      %v2089 = vadd.f32 %v1752, %v1965
      %v2090 = vadd.f32 %v1753, %v1970
      %v2091 = vadd.f32 %v1754, %v1973
      %v2092 = vadd.f32 %v1755, %v1978
      %v2093 = vadd.f32 %v1756, %v1981
      %v2094 = vadd.f32 %v1757, %v1986
      %v2095 = vadd.f32 %v1758, %v1989
      %v2096 = vadd.f32 %v1759, %v1994
      %v2097 = vadd.f32 %v1760, %v1997
      %v2098 = vadd.f32 %v1761, %v2002
      %v2099 = vadd.f32 %v1762, %v2005
      %v2100 = vadd.f32 %v1763, %v2010
      %v2101 = vadd.f32 %v1764, %v2013
      %v2102 = vadd.f32 %v1765, %v2018
      %v2103 = vadd.f32 %v1766, %v2021
      %v2104 = vadd.f32 %v1767, %v2026
      %v2105 = vadd.f32 %v1768, %v2029
      %v2106 = vadd.f32 %v1769, %v2034
      %v2107 = vadd.f32 %v1770, %v2037
      %v2108 = vadd.f32 %v1771, %v2042
      %v2109 = vadd.f32 %v1772, %v2045
      %v2110 = vadd.f32 %v1773, %v2050
      %v2111 = vadd.f32 %v1774, %v2053
      %v2112 = vadd.f32 %v1775, %v2058
      %v2113 = vadd.f32 %v1776, %v2061
      %v2114 = vadd.f32 %v1777, %v2066
      %v2115 = vadd.f32 %v1778, %v2069
      %v2116 = vadd.f32 %v1779, %v2074
      %v2117 = vadd.f32 %v1780, %v2077
      %v2118 = vadd.f32 %v1781, %v2082
      %v2119 = vadd.f32 %v1782, %v2085
      %s2120 = scalar_lea.vmem %s8, 20
      %v2121 = vld [vmem:[%s2120] sm:$0xf]
      %v2123 = vsel %vm1201, %v1872, 0
      %v2126 = vsel %vm1250, %v2121, 0
      %2128 = vmatprep.subr.bf16.mxu0 0
      %2129 = vmatpush1.bf16.msra.mxu0 %v2126
      %2130 = vmatprep.subr.bf16.mxu0 0
      %2131 = vmatpush1.bf16.msra.mxu0 0
      %2132 = vmatprep.subr.bf16.mxu0 0
      %2133 = vmatpush1.bf16.msra.mxu0 0
      %2134 = vmatprep.subr.bf16.mxu0 0
      %2135 = vmatpush1.bf16.msra.mxu0 0
      %2136 = vmatprep.subr.bf16.mxu0 0
      %2137 = vmatpush1.bf16.msra.mxu0 0
      %2138 = vmatprep.subr.bf16.mxu0 0
      %2139 = vmatpush1.bf16.msra.mxu0 0
      %2140 = vmatprep.subr.bf16.mxu0 0
      %2141 = vmatpush1.bf16.msra.mxu0 0
      %2142 = vmatprep.subr.bf16.mxu0 0
      %2143 = vmatpush1.bf16.msra.mxu0 0
      %2144 = vmatprep.subr.bf16.mxu0 0
      %2145 = vmatpush1.bf16.msra.mxu0 0
      %2146 = vmatprep.subr.bf16.mxu0 0
      %2147 = vmatpush1.bf16.msra.mxu0 0
      %2148 = vmatprep.subr.bf16.mxu0 0
      %2149 = vmatpush1.bf16.msra.mxu0 0
      %2150 = vmatprep.subr.bf16.mxu0 0
      %2151 = vmatpush1.bf16.msra.mxu0 0
      %2152 = vmatprep.subr.bf16.mxu0 0
      %2153 = vmatpush1.bf16.msra.mxu0 0
      %2154 = vmatprep.subr.bf16.mxu0 0
      %2155 = vmatpush1.bf16.msra.mxu0 0
      %2156 = vmatprep.subr.bf16.mxu0 0
      %2157 = vmatpush1.bf16.msra.mxu0 0
      %2158 = vmatprep.subr.bf16.mxu0 0
      %2159 = vmatpush1.bf16.msra.mxu0 0
      %2160 = vmatprep.mubr.bf16.mxu0 0
      %2161 = vmatmul.mubr.bf16.gmra.mrb[0].mxu0 %v1880
      %v2162 = vpop.f32.mrb[0].mxu0
      %v2163 = vadd.f32 0.0, %v2162
      %v2164 = vpop.f32.mrb[0].mxu0
      %v2165 = vpop.f32.mrb[0].mxu0
      %v2166 = vadd.f32 0.0, %v2165
      %v2167 = vpop.f32.mrb[0].mxu0
      %2168 = vmatprep.mubr.bf16.mxu0 0
      %2169 = vmatmul.mubr.bf16.gmra.mrb[0].mxu0 %v1883
      %v2170 = vpop.f32.mrb[0].mxu0
      %v2171 = vadd.f32 0.0, %v2170
      %v2172 = vpop.f32.mrb[0].mxu0
      %v2173 = vpop.f32.mrb[0].mxu0
      %v2174 = vadd.f32 0.0, %v2173
      %v2175 = vpop.f32.mrb[0].mxu0
      %2176 = vmatprep.mubr.bf16.mxu0 0
      %2177 = vmatmul.mubr.bf16.gmra.mrb[0].mxu0 %v1886
      %v2178 = vpop.f32.mrb[0].mxu0
      %v2179 = vadd.f32 0.0, %v2178
      %v2180 = vpop.f32.mrb[0].mxu0
      %v2181 = vpop.f32.mrb[0].mxu0
      %v2182 = vadd.f32 0.0, %v2181
      %v2183 = vpop.f32.mrb[0].mxu0
      %2184 = vmatprep.mubr.bf16.mxu0 0
      %2185 = vmatmul.mubr.bf16.gmra.mrb[0].mxu0 %v1889
      %v2186 = vpop.f32.mrb[0].mxu0
      %v2187 = vadd.f32 0.0, %v2186
      %v2188 = vpop.f32.mrb[0].mxu0
      %v2189 = vpop.f32.mrb[0].mxu0
      %v2190 = vadd.f32 0.0, %v2189
      %v2191 = vpop.f32.mrb[0].mxu0
      %2192 = vmatprep.mubr.bf16.mxu0 0
      %2193 = vmatmul.mubr.bf16.gmra.mrb[0].mxu0 %v1892
      %v2194 = vpop.f32.mrb[0].mxu0
      %v2195 = vadd.f32 0.0, %v2194
      %v2196 = vpop.f32.mrb[0].mxu0
      %v2197 = vpop.f32.mrb[0].mxu0
      %v2198 = vadd.f32 0.0, %v2197
      %v2199 = vpop.f32.mrb[0].mxu0
      %2200 = vmatprep.mubr.bf16.mxu0 0
      %2201 = vmatmul.mubr.bf16.gmra.mrb[0].mxu0 %v1895
      %v2202 = vpop.f32.mrb[0].mxu0
      %v2203 = vadd.f32 0.0, %v2202
      %v2204 = vpop.f32.mrb[0].mxu0
      %v2205 = vpop.f32.mrb[0].mxu0
      %v2206 = vadd.f32 0.0, %v2205
      %v2207 = vpop.f32.mrb[0].mxu0
      %2208 = vmatprep.mubr.bf16.mxu0 0
      %2209 = vmatmul.mubr.bf16.gmra.mrb[0].mxu0 %v1898
      %v2210 = vpop.f32.mrb[0].mxu0
      %v2211 = vadd.f32 0.0, %v2210
      %v2212 = vpop.f32.mrb[0].mxu0
      %v2213 = vpop.f32.mrb[0].mxu0
      %v2214 = vadd.f32 0.0, %v2213
      %v2215 = vpop.f32.mrb[0].mxu0
      %2216 = vmatprep.mubr.bf16.mxu0 0
      %2217 = vmatmul.mubr.bf16.gmra.mrb[0].mxu0 %v1901
      %v2218 = vpop.f32.mrb[0].mxu0
      %v2219 = vadd.f32 0.0, %v2218
      %v2220 = vpop.f32.mrb[0].mxu0
      %v2221 = vpop.f32.mrb[0].mxu0
      %v2222 = vadd.f32 0.0, %v2221
      %v2223 = vpop.f32.mrb[0].mxu0
      %2224 = vmatprep.mubr.bf16.mxu0 0
      %2225 = vmatmul.mubr.bf16.gmra.mrb[0].mxu0 %v1904
      %v2226 = vpop.f32.mrb[0].mxu0
      %v2227 = vadd.f32 0.0, %v2226
      %v2228 = vpop.f32.mrb[0].mxu0
      %v2229 = vpop.f32.mrb[0].mxu0
      %v2230 = vadd.f32 0.0, %v2229
      %v2231 = vpop.f32.mrb[0].mxu0
      %2232 = vmatprep.mubr.bf16.mxu0 0
      %2233 = vmatmul.mubr.bf16.gmra.mrb[0].mxu0 %v1907
      %v2234 = vpop.f32.mrb[0].mxu0
      %v2235 = vadd.f32 0.0, %v2234
      %v2236 = vpop.f32.mrb[0].mxu0
      %v2237 = vpop.f32.mrb[0].mxu0
      %v2238 = vadd.f32 0.0, %v2237
      %v2239 = vpop.f32.mrb[0].mxu0
      %2240 = vmatprep.mubr.bf16.mxu0 0
      %2241 = vmatmul.mubr.bf16.gmra.mrb[0].mxu0 %v1910
      %v2242 = vpop.f32.mrb[0].mxu0
      %v2243 = vadd.f32 0.0, %v2242
      %v2244 = vpop.f32.mrb[0].mxu0
      %v2245 = vpop.f32.mrb[0].mxu0
      %v2246 = vadd.f32 0.0, %v2245
      %v2247 = vpop.f32.mrb[0].mxu0
      %2248 = vmatprep.mubr.bf16.mxu0 0
      %2249 = vmatmul.mubr.bf16.gmra.mrb[0].mxu0 %v1913
      %v2250 = vpop.f32.mrb[0].mxu0
      %v2251 = vadd.f32 0.0, %v2250
      %v2252 = vpop.f32.mrb[0].mxu0
      %v2253 = vpop.f32.mrb[0].mxu0
      %v2254 = vadd.f32 0.0, %v2253
      %v2255 = vpop.f32.mrb[0].mxu0
      %2256 = vmatprep.mubr.bf16.mxu0 0
      %2257 = vmatmul.mubr.bf16.gmra.mrb[0].mxu0 %v1916
      %v2258 = vpop.f32.mrb[0].mxu0
      %v2259 = vadd.f32 0.0, %v2258
      %v2260 = vpop.f32.mrb[0].mxu0
      %v2261 = vpop.f32.mrb[0].mxu0
      %v2262 = vadd.f32 0.0, %v2261
      %v2263 = vpop.f32.mrb[0].mxu0
      %2264 = vmatprep.mubr.bf16.mxu0 0
      %2265 = vmatmul.mubr.bf16.gmra.mrb[0].mxu0 %v1919
      %v2266 = vpop.f32.mrb[0].mxu0
      %v2267 = vadd.f32 0.0, %v2266
      %v2268 = vpop.f32.mrb[0].mxu0
      %v2269 = vpop.f32.mrb[0].mxu0
      %v2270 = vadd.f32 0.0, %v2269
      %v2271 = vpop.f32.mrb[0].mxu0
      %2272 = vmatprep.mubr.bf16.mxu0 0
      %2273 = vmatmul.mubr.bf16.gmra.mrb[0].mxu0 %v1922
      %v2274 = vpop.f32.mrb[0].mxu0
      %v2275 = vadd.f32 0.0, %v2274
      %v2276 = vpop.f32.mrb[0].mxu0
      %v2277 = vpop.f32.mrb[0].mxu0
      %v2278 = vadd.f32 0.0, %v2277
      %v2279 = vpop.f32.mrb[0].mxu0
      %2280 = vmatprep.mubr.bf16.mxu0 0
      %2281 = vmatmul.mubr.bf16.gmra.mrb[0].mxu0 %v2123
      %v2282 = vpop.f32.mrb[0].mxu0
      %v2283 = vadd.f32 0.0, %v2282
      %v2284 = vpop.f32.mrb[0].mxu0
      %v2285 = vpop.f32.mrb[0].mxu0
      %v2286 = vadd.f32 0.0, %v2285
      %v2287 = vpop.f32.mrb[0].mxu0
      %2288 = vdwg.mxu0
      %v2289 = vadd.f32 %v2088, %v2163
      %v2290 = vadd.f32 %v2089, %v2166
      %v2291 = vadd.f32 %v2090, %v2171
      %v2292 = vadd.f32 %v2091, %v2174
      %v2293 = vadd.f32 %v2092, %v2179
      %v2294 = vadd.f32 %v2093, %v2182
      %v2295 = vadd.f32 %v2094, %v2187
      %v2296 = vadd.f32 %v2095, %v2190
      %v2297 = vadd.f32 %v2096, %v2195
      %v2298 = vadd.f32 %v2097, %v2198
      %v2299 = vadd.f32 %v2098, %v2203
      %v2300 = vadd.f32 %v2099, %v2206
      %v2301 = vadd.f32 %v2100, %v2211
      %v2302 = vadd.f32 %v2101, %v2214
      %v2303 = vadd.f32 %v2102, %v2219
      %v2304 = vadd.f32 %v2103, %v2222
      %v2305 = vadd.f32 %v2104, %v2227
      %v2306 = vadd.f32 %v2105, %v2230
      %v2307 = vadd.f32 %v2106, %v2235
      %v2308 = vadd.f32 %v2107, %v2238
      %v2309 = vadd.f32 %v2108, %v2243
      %v2310 = vadd.f32 %v2109, %v2246
      %v2311 = vadd.f32 %v2110, %v2251
      %v2312 = vadd.f32 %v2111, %v2254
      %v2313 = vadd.f32 %v2112, %v2259
      %v2314 = vadd.f32 %v2113, %v2262
      %v2315 = vadd.f32 %v2114, %v2267
      %v2316 = vadd.f32 %v2115, %v2270
      %v2317 = vadd.f32 %v2116, %v2275
      %v2318 = vadd.f32 %v2117, %v2278
      %v2319 = vadd.f32 %v2118, %v2283
      %v2320 = vadd.f32 %v2119, %v2286
      %s2321 = scalar_lea.vmem %s8, 32
      %v2322 = vld [vmem:[%s2321] sm:$0xf]
      %v2324 = vsel %vm1201, %v1873, 0
      %v2327 = vsel %vm1250, %v2322, 0
      %2329 = vmatprep.subr.bf16.mxu0 0
      %2330 = vmatpush1.bf16.msra.mxu0 %v2327
      %2331 = vmatprep.subr.bf16.mxu0 0
      %2332 = vmatpush1.bf16.msra.mxu0 0
      %2333 = vmatprep.subr.bf16.mxu0 0
      %2334 = vmatpush1.bf16.msra.mxu0 0
      %2335 = vmatprep.subr.bf16.mxu0 0
      %2336 = vmatpush1.bf16.msra.mxu0 0
      %2337 = vmatprep.subr.bf16.mxu0 0
      %2338 = vmatpush1.bf16.msra.mxu0 0
      %2339 = vmatprep.subr.bf16.mxu0 0
      %2340 = vmatpush1.bf16.msra.mxu0 0
      %2341 = vmatprep.subr.bf16.mxu0 0
      %2342 = vmatpush1.bf16.msra.mxu0 0
      %2343 = vmatprep.subr.bf16.mxu0 0
      %2344 = vmatpush1.bf16.msra.mxu0 0
      %2345 = vmatprep.subr.bf16.mxu0 0
      %2346 = vmatpush1.bf16.msra.mxu0 0
      %2347 = vmatprep.subr.bf16.mxu0 0
      %2348 = vmatpush1.bf16.msra.mxu0 0
      %2349 = vmatprep.subr.bf16.mxu0 0
      %2350 = vmatpush1.bf16.msra.mxu0 0
      %2351 = vmatprep.subr.bf16.mxu0 0
      %2352 = vmatpush1.bf16.msra.mxu0 0
      %2353 = vmatprep.subr.bf16.mxu0 0
      %2354 = vmatpush1.bf16.msra.mxu0 0
      %2355 = vmatprep.subr.bf16.mxu0 0
      %2356 = vmatpush1.bf16.msra.mxu0 0
      %2357 = vmatprep.subr.bf16.mxu0 0
      %2358 = vmatpush1.bf16.msra.mxu0 0
      %2359 = vmatprep.subr.bf16.mxu0 0
      %2360 = vmatpush1.bf16.msra.mxu0 0
      %2361 = vmatprep.mubr.bf16.mxu0 0
      %2362 = vmatmul.mubr.bf16.gmra.mrb[0].mxu0 %v1883
      %v2363 = vpop.f32.mrb[0].mxu0
      %v2364 = vadd.f32 0.0, %v2363
      %v2365 = vpop.f32.mrb[0].mxu0
      %v2366 = vpop.f32.mrb[0].mxu0
      %v2367 = vadd.f32 0.0, %v2366
      %v2368 = vpop.f32.mrb[0].mxu0
      %2369 = vmatprep.mubr.bf16.mxu0 0
      %2370 = vmatmul.mubr.bf16.gmra.mrb[0].mxu0 %v1886
      %v2371 = vpop.f32.mrb[0].mxu0
      %v2372 = vadd.f32 0.0, %v2371
      %v2373 = vpop.f32.mrb[0].mxu0
      %v2374 = vpop.f32.mrb[0].mxu0
      %v2375 = vadd.f32 0.0, %v2374
      %v2376 = vpop.f32.mrb[0].mxu0
      %2377 = vmatprep.mubr.bf16.mxu0 0
      %2378 = vmatmul.mubr.bf16.gmra.mrb[0].mxu0 %v1889
      %v2379 = vpop.f32.mrb[0].mxu0
      %v2380 = vadd.f32 0.0, %v2379
      %v2381 = vpop.f32.mrb[0].mxu0
      %v2382 = vpop.f32.mrb[0].mxu0
      %v2383 = vadd.f32 0.0, %v2382
      %v2384 = vpop.f32.mrb[0].mxu0
      %2385 = vmatprep.mubr.bf16.mxu0 0
      %2386 = vmatmul.mubr.bf16.gmra.mrb[0].mxu0 %v1892
      %v2387 = vpop.f32.mrb[0].mxu0
      %v2388 = vadd.f32 0.0, %v2387
      %v2389 = vpop.f32.mrb[0].mxu0
      %v2390 = vpop.f32.mrb[0].mxu0
      %v2391 = vadd.f32 0.0, %v2390
      %v2392 = vpop.f32.mrb[0].mxu0
      %2393 = vmatprep.mubr.bf16.mxu0 0
      %2394 = vmatmul.mubr.bf16.gmra.mrb[0].mxu0 %v1895
      %v2395 = vpop.f32.mrb[0].mxu0
      %v2396 = vadd.f32 0.0, %v2395
      %v2397 = vpop.f32.mrb[0].mxu0
      %v2398 = vpop.f32.mrb[0].mxu0
      %v2399 = vadd.f32 0.0, %v2398
      %v2400 = vpop.f32.mrb[0].mxu0
      %2401 = vmatprep.mubr.bf16.mxu0 0
      %2402 = vmatmul.mubr.bf16.gmra.mrb[0].mxu0 %v1898
      %v2403 = vpop.f32.mrb[0].mxu0
      %v2404 = vadd.f32 0.0, %v2403
      %v2405 = vpop.f32.mrb[0].mxu0
      %v2406 = vpop.f32.mrb[0].mxu0
      %v2407 = vadd.f32 0.0, %v2406
      %v2408 = vpop.f32.mrb[0].mxu0
      %2409 = vmatprep.mubr.bf16.mxu0 0
      %2410 = vmatmul.mubr.bf16.gmra.mrb[0].mxu0 %v1901
      %v2411 = vpop.f32.mrb[0].mxu0
      %v2412 = vadd.f32 0.0, %v2411
      %v2413 = vpop.f32.mrb[0].mxu0
      %v2414 = vpop.f32.mrb[0].mxu0
      %v2415 = vadd.f32 0.0, %v2414
      %v2416 = vpop.f32.mrb[0].mxu0
      %2417 = vmatprep.mubr.bf16.mxu0 0
      %2418 = vmatmul.mubr.bf16.gmra.mrb[0].mxu0 %v1904
      %v2419 = vpop.f32.mrb[0].mxu0
      %v2420 = vadd.f32 0.0, %v2419
      %v2421 = vpop.f32.mrb[0].mxu0
      %v2422 = vpop.f32.mrb[0].mxu0
      %v2423 = vadd.f32 0.0, %v2422
      %v2424 = vpop.f32.mrb[0].mxu0
      %2425 = vmatprep.mubr.bf16.mxu0 0
      %2426 = vmatmul.mubr.bf16.gmra.mrb[0].mxu0 %v1907
      %v2427 = vpop.f32.mrb[0].mxu0
      %v2428 = vadd.f32 0.0, %v2427
      %v2429 = vpop.f32.mrb[0].mxu0
      %v2430 = vpop.f32.mrb[0].mxu0
      %v2431 = vadd.f32 0.0, %v2430
      %v2432 = vpop.f32.mrb[0].mxu0
      %2433 = vmatprep.mubr.bf16.mxu0 0
      %2434 = vmatmul.mubr.bf16.gmra.mrb[0].mxu0 %v1910
      %v2435 = vpop.f32.mrb[0].mxu0
      %v2436 = vadd.f32 0.0, %v2435
      %v2437 = vpop.f32.mrb[0].mxu0
      %v2438 = vpop.f32.mrb[0].mxu0
      %v2439 = vadd.f32 0.0, %v2438
      %v2440 = vpop.f32.mrb[0].mxu0
      %2441 = vmatprep.mubr.bf16.mxu0 0
      %2442 = vmatmul.mubr.bf16.gmra.mrb[0].mxu0 %v1913
      %v2443 = vpop.f32.mrb[0].mxu0
      %v2444 = vadd.f32 0.0, %v2443
      %v2445 = vpop.f32.mrb[0].mxu0
      %v2446 = vpop.f32.mrb[0].mxu0
      %v2447 = vadd.f32 0.0, %v2446
      %v2448 = vpop.f32.mrb[0].mxu0
      %2449 = vmatprep.mubr.bf16.mxu0 0
      %2450 = vmatmul.mubr.bf16.gmra.mrb[0].mxu0 %v1916
      %v2451 = vpop.f32.mrb[0].mxu0
      %v2452 = vadd.f32 0.0, %v2451
      %v2453 = vpop.f32.mrb[0].mxu0
      %v2454 = vpop.f32.mrb[0].mxu0
      %v2455 = vadd.f32 0.0, %v2454
      %v2456 = vpop.f32.mrb[0].mxu0
      %2457 = vmatprep.mubr.bf16.mxu0 0
      %2458 = vmatmul.mubr.bf16.gmra.mrb[0].mxu0 %v1919
      %v2459 = vpop.f32.mrb[0].mxu0
      %v2460 = vadd.f32 0.0, %v2459
      %v2461 = vpop.f32.mrb[0].mxu0
      %v2462 = vpop.f32.mrb[0].mxu0
      %v2463 = vadd.f32 0.0, %v2462
      %v2464 = vpop.f32.mrb[0].mxu0
      %2465 = vmatprep.mubr.bf16.mxu0 0
      %2466 = vmatmul.mubr.bf16.gmra.mrb[0].mxu0 %v1922
      %v2467 = vpop.f32.mrb[0].mxu0
      %v2468 = vadd.f32 0.0, %v2467
      %v2469 = vpop.f32.mrb[0].mxu0
      %v2470 = vpop.f32.mrb[0].mxu0
      %v2471 = vadd.f32 0.0, %v2470
      %v2472 = vpop.f32.mrb[0].mxu0
      %2473 = vmatprep.mubr.bf16.mxu0 0
      %2474 = vmatmul.mubr.bf16.gmra.mrb[0].mxu0 %v2123
      %v2475 = vpop.f32.mrb[0].mxu0
      %v2476 = vadd.f32 0.0, %v2475
      %v2477 = vpop.f32.mrb[0].mxu0
      %v2478 = vpop.f32.mrb[0].mxu0
      %v2479 = vadd.f32 0.0, %v2478
      %v2480 = vpop.f32.mrb[0].mxu0
      %2481 = vmatprep.mubr.bf16.mxu0 0
      %2482 = vmatmul.mubr.bf16.gmra.mrb[0].mxu0 %v2324
      %v2483 = vpop.f32.mrb[0].mxu0
      %v2484 = vadd.f32 0.0, %v2483
      %v2485 = vpop.f32.mrb[0].mxu0
      %v2486 = vpop.f32.mrb[0].mxu0
      %v2487 = vadd.f32 0.0, %v2486
      %v2488 = vpop.f32.mrb[0].mxu0
      %2489 = vdwg.mxu0
      %v2490 = vadd.f32 %v2289, %v2364
      %v2491 = vadd.f32 %v2290, %v2367
      %v2492 = vadd.f32 %v2291, %v2372
      %v2493 = vadd.f32 %v2292, %v2375
      %v2494 = vadd.f32 %v2293, %v2380
      %v2495 = vadd.f32 %v2294, %v2383
      %v2496 = vadd.f32 %v2295, %v2388
      %v2497 = vadd.f32 %v2296, %v2391
      %v2498 = vadd.f32 %v2297, %v2396
      %v2499 = vadd.f32 %v2298, %v2399
      %v2500 = vadd.f32 %v2299, %v2404
      %v2501 = vadd.f32 %v2300, %v2407
      %v2502 = vadd.f32 %v2301, %v2412
      %v2503 = vadd.f32 %v2302, %v2415
      %v2504 = vadd.f32 %v2303, %v2420
      %v2505 = vadd.f32 %v2304, %v2423
      %v2506 = vadd.f32 %v2305, %v2428
      %v2507 = vadd.f32 %v2306, %v2431
      %v2508 = vadd.f32 %v2307, %v2436
      %v2509 = vadd.f32 %v2308, %v2439
      %v2510 = vadd.f32 %v2309, %v2444
      %v2511 = vadd.f32 %v2310, %v2447
      %v2512 = vadd.f32 %v2311, %v2452
      %v2513 = vadd.f32 %v2312, %v2455
      %v2514 = vadd.f32 %v2313, %v2460
      %v2515 = vadd.f32 %v2314, %v2463
      %v2516 = vadd.f32 %v2315, %v2468
      %v2517 = vadd.f32 %v2316, %v2471
      %v2518 = vadd.f32 %v2317, %v2476
      %v2519 = vadd.f32 %v2318, %v2479
      %v2520 = vadd.f32 %v2319, %v2484
      %v2521 = vadd.f32 %v2320, %v2487
      %v2522 = vrot.slane %v1143, 7
      %v2523 = vrot.slane %v1144, 7
      %v2524 = vrot.slane %v1145, 7
      %v2525 = vrot.slane %v1146, 7
      %v2526 = vrot.slane %v1147, 7
      %v2527 = vrot.slane %v1148, 7
      %v2528 = vrot.slane %v1149, 7
      %v2529 = vrot.slane %v1150, 7
      %v2530 = vrot.slane %v1151, 7
      %v2531 = vrot.slane %v1152, 7
      %v2532 = vrot.slane %v1153, 7
      %v2533 = vrot.slane %v1154, 7
      %v2534 = vrot.slane %v1155, 7
      %v2535 = vrot.slane %v1156, 7
      %v2536 = vrot.slane %v1157, 7
      %v2537 = vrot.slane %v1158, 7
      %v2538 = vrot.slane %v1159, 7
      %v2539 = vrot.slane %v1160, 7
      %v2540 = vrot.slane %v1161, 7
      %v2541 = vrot.slane %v1162, 7
      %v2542 = vrot.slane %v1163, 7
      %v2543 = vrot.slane %v1164, 7
      %v2544 = vrot.slane %v1165, 7
      %v2545 = vrot.slane %v1166, 7
      %v2546 = vrot.slane %v1167, 7
      %v2547 = vrot.slane %v1168, 7
      %v2548 = vrot.slane %v1169, 7
      %v2549 = vrot.slane %v1170, 7
      %v2550 = vrot.slane %v1171, 7
      %v2551 = vrot.slane %v1172, 7
      %v2552 = vrot.slane %v1173, 7
      %v2553 = vrot.slane %v1174, 7
      %v2554 = vrot.slane %v1175, 7
      %v2555 = vrot.slane %v1176, 7
      %v2556 = vrot.slane %v1177, 7
      %v2557 = vrot.slane %v1178, 7
      %vm2558 = vcmp.lt.s32.totalorder %v1093, 1
      %v2559 = vsel %vm2558, %v2556, %v2557
      %v2560 = vsel %vm2558, %v2555, %v2556
      %v2561 = vsel %vm2558, %v2554, %v2555
      %v2562 = vsel %vm2558, %v2553, %v2554
      %v2563 = vsel %vm2558, %v2552, %v2553
      %v2564 = vsel %vm2558, %v2551, %v2552
      %v2565 = vsel %vm2558, %v2550, %v2551
      %v2566 = vsel %vm2558, %v2549, %v2550
      %v2567 = vsel %vm2558, %v2548, %v2549
      %v2568 = vsel %vm2558, %v2547, %v2548
      %v2569 = vsel %vm2558, %v2546, %v2547
      %v2570 = vsel %vm2558, %v2545, %v2546
      %v2571 = vsel %vm2558, %v2544, %v2545
      %v2572 = vsel %vm2558, %v2543, %v2544
      %v2573 = vsel %vm2558, %v2542, %v2543
      %v2574 = vsel %vm2558, %v2541, %v2542
      %v2575 = vsel %vm2558, %v2540, %v2541
      %v2576 = vsel %vm2558, %v2539, %v2540
      %v2577 = vsel %vm2558, %v2538, %v2539
      %v2578 = vsel %vm2558, %v2537, %v2538
      %v2579 = vsel %vm2558, %v2536, %v2537
      %v2580 = vsel %vm2558, %v2535, %v2536
      %v2581 = vsel %vm2558, %v2534, %v2535
      %v2582 = vsel %vm2558, %v2533, %v2534
      %v2583 = vsel %vm2558, %v2532, %v2533
      %v2584 = vsel %vm2558, %v2531, %v2532
      %v2585 = vsel %vm2558, %v2530, %v2531
      %v2586 = vsel %vm2558, %v2529, %v2530
      %v2587 = vsel %vm2558, %v2528, %v2529
      %v2588 = vsel %vm2558, %v2527, %v2528
      %v2589 = vsel %vm2558, %v2526, %v2527
      %v2590 = vsel %vm2558, %v2525, %v2526
      %v2591 = vsel %vm2558, %v2524, %v2525
      %v2592 = vsel %vm2558, %v2523, %v2524
      %v2593 = vsel %vm2558, %v2522, %v2523
      %v2594 = vsel %vm2558, %v2557, %v2522
      %v2595 = vpack.c.bf16 %v2593, %v2594
      %v2596 = vpack.c.bf16 %v2591, %v2592
      %v2597 = vpack.c.bf16 %v2589, %v2590
      %v2598 = vpack.c.bf16 %v2587, %v2588
      %v2599 = vpack.c.bf16 %v2585, %v2586
      %v2600 = vpack.c.bf16 %v2583, %v2584
      %v2601 = vpack.c.bf16 %v2581, %v2582
      %v2602 = vpack.c.bf16 %v2579, %v2580
      %v2603 = vpack.c.bf16 %v2577, %v2578
      %v2604 = vpack.c.bf16 %v2575, %v2576
      %v2605 = vpack.c.bf16 %v2573, %v2574
      %v2606 = vpack.c.bf16 %v2571, %v2572
      %v2607 = vpack.c.bf16 %v2569, %v2570
      %v2608 = vpack.c.bf16 %v2567, %v2568
      %v2609 = vpack.c.bf16 %v2565, %v2566
      %v2610 = vpack.c.bf16 %v2563, %v2564
      %v2611 = vpack.c.bf16 %v2561, %v2562
      %v2612 = vpack.c.bf16 %v2559, %v2560
      %v2613 = vld [vmem:[%s8] sm:$0xf]
      %v2615 = vsel %vm1201, %v2595, 0
      %v2618 = vsel %vm1201, %v2596, 0
      %v2621 = vsel %vm1201, %v2597, 0
      %v2624 = vsel %vm1201, %v2598, 0
      %v2627 = vsel %vm1201, %v2599, 0
      %v2630 = vsel %vm1201, %v2600, 0
      %v2633 = vsel %vm1201, %v2601, 0
      %v2636 = vsel %vm1201, %v2602, 0
      %v2639 = vsel %vm1201, %v2603, 0
      %v2642 = vsel %vm1201, %v2604, 0
      %v2645 = vsel %vm1201, %v2605, 0
      %v2648 = vsel %vm1201, %v2606, 0
      %v2651 = vsel %vm1201, %v2607, 0
      %v2654 = vsel %vm1201, %v2608, 0
      %v2657 = vsel %vm1201, %v2609, 0
      %v2660 = vsel %vm1201, %v2610, 0
      %v2663 = vsel %vm1250, %v2613, 0
      %2665 = vmatprep.subr.bf16.mxu0 0
      %2666 = vmatpush1.bf16.msra.mxu0 %v2663
      %2667 = vmatprep.subr.bf16.mxu0 0
      %2668 = vmatpush1.bf16.msra.mxu0 0
      %2669 = vmatprep.subr.bf16.mxu0 0
      %2670 = vmatpush1.bf16.msra.mxu0 0
      %2671 = vmatprep.subr.bf16.mxu0 0
      %2672 = vmatpush1.bf16.msra.mxu0 0
      %2673 = vmatprep.subr.bf16.mxu0 0
      %2674 = vmatpush1.bf16.msra.mxu0 0
      %2675 = vmatprep.subr.bf16.mxu0 0
      %2676 = vmatpush1.bf16.msra.mxu0 0
      %2677 = vmatprep.subr.bf16.mxu0 0
      %2678 = vmatpush1.bf16.msra.mxu0 0
      %2679 = vmatprep.subr.bf16.mxu0 0
      %2680 = vmatpush1.bf16.msra.mxu0 0
      %2681 = vmatprep.subr.bf16.mxu0 0
      %2682 = vmatpush1.bf16.msra.mxu0 0
      %2683 = vmatprep.subr.bf16.mxu0 0
      %2684 = vmatpush1.bf16.msra.mxu0 0
      %2685 = vmatprep.subr.bf16.mxu0 0
      %2686 = vmatpush1.bf16.msra.mxu0 0
      %2687 = vmatprep.subr.bf16.mxu0 0
      %2688 = vmatpush1.bf16.msra.mxu0 0
      %2689 = vmatprep.subr.bf16.mxu0 0
      %2690 = vmatpush1.bf16.msra.mxu0 0
      %2691 = vmatprep.subr.bf16.mxu0 0
      %2692 = vmatpush1.bf16.msra.mxu0 0
      %2693 = vmatprep.subr.bf16.mxu0 0
      %2694 = vmatpush1.bf16.msra.mxu0 0
      %2695 = vmatprep.subr.bf16.mxu0 0
      %2696 = vmatpush1.bf16.msra.mxu0 0
      %2697 = vmatprep.mubr.bf16.mxu0 0
      %2698 = vmatmul.mubr.bf16.gmra.mrb[0].mxu0 %v2615
      %v2699 = vpop.f32.mrb[0].mxu0
      %v2700 = vadd.f32 0.0, %v2699
      %v2701 = vpop.f32.mrb[0].mxu0
      %v2702 = vpop.f32.mrb[0].mxu0
      %v2703 = vadd.f32 0.0, %v2702
      %v2704 = vpop.f32.mrb[0].mxu0
      %2705 = vmatprep.mubr.bf16.mxu0 0
      %2706 = vmatmul.mubr.bf16.gmra.mrb[0].mxu0 %v2618
      %v2707 = vpop.f32.mrb[0].mxu0
      %v2708 = vadd.f32 0.0, %v2707
      %v2709 = vpop.f32.mrb[0].mxu0
      %v2710 = vpop.f32.mrb[0].mxu0
      %v2711 = vadd.f32 0.0, %v2710
      %v2712 = vpop.f32.mrb[0].mxu0
      %2713 = vmatprep.mubr.bf16.mxu0 0
      %2714 = vmatmul.mubr.bf16.gmra.mrb[0].mxu0 %v2621
      %v2715 = vpop.f32.mrb[0].mxu0
      %v2716 = vadd.f32 0.0, %v2715
      %v2717 = vpop.f32.mrb[0].mxu0
      %v2718 = vpop.f32.mrb[0].mxu0
      %v2719 = vadd.f32 0.0, %v2718
      %v2720 = vpop.f32.mrb[0].mxu0
      %2721 = vmatprep.mubr.bf16.mxu0 0
      %2722 = vmatmul.mubr.bf16.gmra.mrb[0].mxu0 %v2624
      %v2723 = vpop.f32.mrb[0].mxu0
      %v2724 = vadd.f32 0.0, %v2723
      %v2725 = vpop.f32.mrb[0].mxu0
      %v2726 = vpop.f32.mrb[0].mxu0
      %v2727 = vadd.f32 0.0, %v2726
      %v2728 = vpop.f32.mrb[0].mxu0
      %2729 = vmatprep.mubr.bf16.mxu0 0
      %2730 = vmatmul.mubr.bf16.gmra.mrb[0].mxu0 %v2627
      %v2731 = vpop.f32.mrb[0].mxu0
      %v2732 = vadd.f32 0.0, %v2731
      %v2733 = vpop.f32.mrb[0].mxu0
      %v2734 = vpop.f32.mrb[0].mxu0
      %v2735 = vadd.f32 0.0, %v2734
      %v2736 = vpop.f32.mrb[0].mxu0
      %2737 = vmatprep.mubr.bf16.mxu0 0
      %2738 = vmatmul.mubr.bf16.gmra.mrb[0].mxu0 %v2630
      %v2739 = vpop.f32.mrb[0].mxu0
      %v2740 = vadd.f32 0.0, %v2739
      %v2741 = vpop.f32.mrb[0].mxu0
      %v2742 = vpop.f32.mrb[0].mxu0
      %v2743 = vadd.f32 0.0, %v2742
      %v2744 = vpop.f32.mrb[0].mxu0
      %2745 = vmatprep.mubr.bf16.mxu0 0
      %2746 = vmatmul.mubr.bf16.gmra.mrb[0].mxu0 %v2633
      %v2747 = vpop.f32.mrb[0].mxu0
      %v2748 = vadd.f32 0.0, %v2747
      %v2749 = vpop.f32.mrb[0].mxu0
      %v2750 = vpop.f32.mrb[0].mxu0
      %v2751 = vadd.f32 0.0, %v2750
      %v2752 = vpop.f32.mrb[0].mxu0
      %2753 = vmatprep.mubr.bf16.mxu0 0
      %2754 = vmatmul.mubr.bf16.gmra.mrb[0].mxu0 %v2636
      %v2755 = vpop.f32.mrb[0].mxu0
      %v2756 = vadd.f32 0.0, %v2755
      %v2757 = vpop.f32.mrb[0].mxu0
      %v2758 = vpop.f32.mrb[0].mxu0
      %v2759 = vadd.f32 0.0, %v2758
      %v2760 = vpop.f32.mrb[0].mxu0
      %2761 = vmatprep.mubr.bf16.mxu0 0
      %2762 = vmatmul.mubr.bf16.gmra.mrb[0].mxu0 %v2639
      %v2763 = vpop.f32.mrb[0].mxu0
      %v2764 = vadd.f32 0.0, %v2763
      %v2765 = vpop.f32.mrb[0].mxu0
      %v2766 = vpop.f32.mrb[0].mxu0
      %v2767 = vadd.f32 0.0, %v2766
      %v2768 = vpop.f32.mrb[0].mxu0
      %2769 = vmatprep.mubr.bf16.mxu0 0
      %2770 = vmatmul.mubr.bf16.gmra.mrb[0].mxu0 %v2642
      %v2771 = vpop.f32.mrb[0].mxu0
      %v2772 = vadd.f32 0.0, %v2771
      %v2773 = vpop.f32.mrb[0].mxu0
      %v2774 = vpop.f32.mrb[0].mxu0
      %v2775 = vadd.f32 0.0, %v2774
      %v2776 = vpop.f32.mrb[0].mxu0
      %2777 = vmatprep.mubr.bf16.mxu0 0
      %2778 = vmatmul.mubr.bf16.gmra.mrb[0].mxu0 %v2645
      %v2779 = vpop.f32.mrb[0].mxu0
      %v2780 = vadd.f32 0.0, %v2779
      %v2781 = vpop.f32.mrb[0].mxu0
      %v2782 = vpop.f32.mrb[0].mxu0
      %v2783 = vadd.f32 0.0, %v2782
      %v2784 = vpop.f32.mrb[0].mxu0
      %2785 = vmatprep.mubr.bf16.mxu0 0
      %2786 = vmatmul.mubr.bf16.gmra.mrb[0].mxu0 %v2648
      %v2787 = vpop.f32.mrb[0].mxu0
      %v2788 = vadd.f32 0.0, %v2787
      %v2789 = vpop.f32.mrb[0].mxu0
      %v2790 = vpop.f32.mrb[0].mxu0
      %v2791 = vadd.f32 0.0, %v2790
      %v2792 = vpop.f32.mrb[0].mxu0
      %2793 = vmatprep.mubr.bf16.mxu0 0
      %2794 = vmatmul.mubr.bf16.gmra.mrb[0].mxu0 %v2651
      %v2795 = vpop.f32.mrb[0].mxu0
      %v2796 = vadd.f32 0.0, %v2795
      %v2797 = vpop.f32.mrb[0].mxu0
      %v2798 = vpop.f32.mrb[0].mxu0
      %v2799 = vadd.f32 0.0, %v2798
      %v2800 = vpop.f32.mrb[0].mxu0
      %2801 = vmatprep.mubr.bf16.mxu0 0
      %2802 = vmatmul.mubr.bf16.gmra.mrb[0].mxu0 %v2654
      %v2803 = vpop.f32.mrb[0].mxu0
      %v2804 = vadd.f32 0.0, %v2803
      %v2805 = vpop.f32.mrb[0].mxu0
      %v2806 = vpop.f32.mrb[0].mxu0
      %v2807 = vadd.f32 0.0, %v2806
      %v2808 = vpop.f32.mrb[0].mxu0
      %2809 = vmatprep.mubr.bf16.mxu0 0
      %2810 = vmatmul.mubr.bf16.gmra.mrb[0].mxu0 %v2657
      %v2811 = vpop.f32.mrb[0].mxu0
      %v2812 = vadd.f32 0.0, %v2811
      %v2813 = vpop.f32.mrb[0].mxu0
      %v2814 = vpop.f32.mrb[0].mxu0
      %v2815 = vadd.f32 0.0, %v2814
      %v2816 = vpop.f32.mrb[0].mxu0
      %2817 = vmatprep.mubr.bf16.mxu0 0
      %2818 = vmatmul.mubr.bf16.gmra.mrb[0].mxu0 %v2660
      %v2819 = vpop.f32.mrb[0].mxu0
      %v2820 = vadd.f32 0.0, %v2819
      %v2821 = vpop.f32.mrb[0].mxu0
      %v2822 = vpop.f32.mrb[0].mxu0
      %v2823 = vadd.f32 0.0, %v2822
      %v2824 = vpop.f32.mrb[0].mxu0
      %2825 = vdwg.mxu0
      %v2826 = vadd.f32 %v2490, %v2700
      %v2827 = vadd.f32 %v2491, %v2703
      %v2828 = vadd.f32 %v2492, %v2708
      %v2829 = vadd.f32 %v2493, %v2711
      %v2830 = vadd.f32 %v2494, %v2716
      %v2831 = vadd.f32 %v2495, %v2719
      %v2832 = vadd.f32 %v2496, %v2724
      %v2833 = vadd.f32 %v2497, %v2727
      %v2834 = vadd.f32 %v2498, %v2732
      %v2835 = vadd.f32 %v2499, %v2735
      %v2836 = vadd.f32 %v2500, %v2740
      %v2837 = vadd.f32 %v2501, %v2743
      %v2838 = vadd.f32 %v2502, %v2748
      %v2839 = vadd.f32 %v2503, %v2751
      %v2840 = vadd.f32 %v2504, %v2756
      %v2841 = vadd.f32 %v2505, %v2759
      %v2842 = vadd.f32 %v2506, %v2764
      %v2843 = vadd.f32 %v2507, %v2767
      %v2844 = vadd.f32 %v2508, %v2772
      %v2845 = vadd.f32 %v2509, %v2775
      %v2846 = vadd.f32 %v2510, %v2780
      %v2847 = vadd.f32 %v2511, %v2783
      %v2848 = vadd.f32 %v2512, %v2788
      %v2849 = vadd.f32 %v2513, %v2791
      %v2850 = vadd.f32 %v2514, %v2796
      %v2851 = vadd.f32 %v2515, %v2799
      %v2852 = vadd.f32 %v2516, %v2804
      %v2853 = vadd.f32 %v2517, %v2807
      %v2854 = vadd.f32 %v2518, %v2812
      %v2855 = vadd.f32 %v2519, %v2815
      %v2856 = vadd.f32 %v2520, %v2820
      %v2857 = vadd.f32 %v2521, %v2823
      %s2858 = scalar_lea.vmem %s8, 12
      %v2859 = vld [vmem:[%s2858] sm:$0xf]
      %v2861 = vsel %vm1201, %v2611, 0
      %v2864 = vsel %vm1250, %v2859, 0
      %2866 = vmatprep.subr.bf16.mxu0 0
      %2867 = vmatpush1.bf16.msra.mxu0 %v2864
      %2868 = vmatprep.subr.bf16.mxu0 0
      %2869 = vmatpush1.bf16.msra.mxu0 0
      %2870 = vmatprep.subr.bf16.mxu0 0
      %2871 = vmatpush1.bf16.msra.mxu0 0
      %2872 = vmatprep.subr.bf16.mxu0 0
      %2873 = vmatpush1.bf16.msra.mxu0 0
      %2874 = vmatprep.subr.bf16.mxu0 0
      %2875 = vmatpush1.bf16.msra.mxu0 0
      %2876 = vmatprep.subr.bf16.mxu0 0
      %2877 = vmatpush1.bf16.msra.mxu0 0
      %2878 = vmatprep.subr.bf16.mxu0 0
      %2879 = vmatpush1.bf16.msra.mxu0 0
      %2880 = vmatprep.subr.bf16.mxu0 0
      %2881 = vmatpush1.bf16.msra.mxu0 0
      %2882 = vmatprep.subr.bf16.mxu0 0
      %2883 = vmatpush1.bf16.msra.mxu0 0
      %2884 = vmatprep.subr.bf16.mxu0 0
      %2885 = vmatpush1.bf16.msra.mxu0 0
      %2886 = vmatprep.subr.bf16.mxu0 0
      %2887 = vmatpush1.bf16.msra.mxu0 0
      %2888 = vmatprep.subr.bf16.mxu0 0
      %2889 = vmatpush1.bf16.msra.mxu0 0
      %2890 = vmatprep.subr.bf16.mxu0 0
      %2891 = vmatpush1.bf16.msra.mxu0 0
      %2892 = vmatprep.subr.bf16.mxu0 0
      %2893 = vmatpush1.bf16.msra.mxu0 0
      %2894 = vmatprep.subr.bf16.mxu0 0
      %2895 = vmatpush1.bf16.msra.mxu0 0
      %2896 = vmatprep.subr.bf16.mxu0 0
      %2897 = vmatpush1.bf16.msra.mxu0 0
      %2898 = vmatprep.mubr.bf16.mxu0 0
      %2899 = vmatmul.mubr.bf16.gmra.mrb[0].mxu0 %v2618
      %v2900 = vpop.f32.mrb[0].mxu0
      %v2901 = vadd.f32 0.0, %v2900
      %v2902 = vpop.f32.mrb[0].mxu0
      %v2903 = vpop.f32.mrb[0].mxu0
      %v2904 = vadd.f32 0.0, %v2903
      %v2905 = vpop.f32.mrb[0].mxu0
      %2906 = vmatprep.mubr.bf16.mxu0 0
      %2907 = vmatmul.mubr.bf16.gmra.mrb[0].mxu0 %v2621
      %v2908 = vpop.f32.mrb[0].mxu0
      %v2909 = vadd.f32 0.0, %v2908
      %v2910 = vpop.f32.mrb[0].mxu0
      %v2911 = vpop.f32.mrb[0].mxu0
      %v2912 = vadd.f32 0.0, %v2911
      %v2913 = vpop.f32.mrb[0].mxu0
      %2914 = vmatprep.mubr.bf16.mxu0 0
      %2915 = vmatmul.mubr.bf16.gmra.mrb[0].mxu0 %v2624
      %v2916 = vpop.f32.mrb[0].mxu0
      %v2917 = vadd.f32 0.0, %v2916
      %v2918 = vpop.f32.mrb[0].mxu0
      %v2919 = vpop.f32.mrb[0].mxu0
      %v2920 = vadd.f32 0.0, %v2919
      %v2921 = vpop.f32.mrb[0].mxu0
      %2922 = vmatprep.mubr.bf16.mxu0 0
      %2923 = vmatmul.mubr.bf16.gmra.mrb[0].mxu0 %v2627
      %v2924 = vpop.f32.mrb[0].mxu0
      %v2925 = vadd.f32 0.0, %v2924
      %v2926 = vpop.f32.mrb[0].mxu0
      %v2927 = vpop.f32.mrb[0].mxu0
      %v2928 = vadd.f32 0.0, %v2927
      %v2929 = vpop.f32.mrb[0].mxu0
      %2930 = vmatprep.mubr.bf16.mxu0 0
      %2931 = vmatmul.mubr.bf16.gmra.mrb[0].mxu0 %v2630
      %v2932 = vpop.f32.mrb[0].mxu0
      %v2933 = vadd.f32 0.0, %v2932
      %v2934 = vpop.f32.mrb[0].mxu0
      %v2935 = vpop.f32.mrb[0].mxu0
      %v2936 = vadd.f32 0.0, %v2935
      %v2937 = vpop.f32.mrb[0].mxu0
      %2938 = vmatprep.mubr.bf16.mxu0 0
      %2939 = vmatmul.mubr.bf16.gmra.mrb[0].mxu0 %v2633
      %v2940 = vpop.f32.mrb[0].mxu0
      %v2941 = vadd.f32 0.0, %v2940
      %v2942 = vpop.f32.mrb[0].mxu0
      %v2943 = vpop.f32.mrb[0].mxu0
      %v2944 = vadd.f32 0.0, %v2943
      %v2945 = vpop.f32.mrb[0].mxu0
      %2946 = vmatprep.mubr.bf16.mxu0 0
      %2947 = vmatmul.mubr.bf16.gmra.mrb[0].mxu0 %v2636
      %v2948 = vpop.f32.mrb[0].mxu0
      %v2949 = vadd.f32 0.0, %v2948
      %v2950 = vpop.f32.mrb[0].mxu0
      %v2951 = vpop.f32.mrb[0].mxu0
      %v2952 = vadd.f32 0.0, %v2951
      %v2953 = vpop.f32.mrb[0].mxu0
      %2954 = vmatprep.mubr.bf16.mxu0 0
      %2955 = vmatmul.mubr.bf16.gmra.mrb[0].mxu0 %v2639
      %v2956 = vpop.f32.mrb[0].mxu0
      %v2957 = vadd.f32 0.0, %v2956
      %v2958 = vpop.f32.mrb[0].mxu0
      %v2959 = vpop.f32.mrb[0].mxu0
      %v2960 = vadd.f32 0.0, %v2959
      %v2961 = vpop.f32.mrb[0].mxu0
      %2962 = vmatprep.mubr.bf16.mxu0 0
      %2963 = vmatmul.mubr.bf16.gmra.mrb[0].mxu0 %v2642
      %v2964 = vpop.f32.mrb[0].mxu0
      %v2965 = vadd.f32 0.0, %v2964
      %v2966 = vpop.f32.mrb[0].mxu0
      %v2967 = vpop.f32.mrb[0].mxu0
      %v2968 = vadd.f32 0.0, %v2967
      %v2969 = vpop.f32.mrb[0].mxu0
      %2970 = vmatprep.mubr.bf16.mxu0 0
      %2971 = vmatmul.mubr.bf16.gmra.mrb[0].mxu0 %v2645
      %v2972 = vpop.f32.mrb[0].mxu0
      %v2973 = vadd.f32 0.0, %v2972
      %v2974 = vpop.f32.mrb[0].mxu0
      %v2975 = vpop.f32.mrb[0].mxu0
      %v2976 = vadd.f32 0.0, %v2975
      %v2977 = vpop.f32.mrb[0].mxu0
      %2978 = vmatprep.mubr.bf16.mxu0 0
      %2979 = vmatmul.mubr.bf16.gmra.mrb[0].mxu0 %v2648
      %v2980 = vpop.f32.mrb[0].mxu0
      %v2981 = vadd.f32 0.0, %v2980
      %v2982 = vpop.f32.mrb[0].mxu0
      %v2983 = vpop.f32.mrb[0].mxu0
      %v2984 = vadd.f32 0.0, %v2983
      %v2985 = vpop.f32.mrb[0].mxu0
      %2986 = vmatprep.mubr.bf16.mxu0 0
      %2987 = vmatmul.mubr.bf16.gmra.mrb[0].mxu0 %v2651
      %v2988 = vpop.f32.mrb[0].mxu0
      %v2989 = vadd.f32 0.0, %v2988
      %v2990 = vpop.f32.mrb[0].mxu0
      %v2991 = vpop.f32.mrb[0].mxu0
      %v2992 = vadd.f32 0.0, %v2991
      %v2993 = vpop.f32.mrb[0].mxu0
      %2994 = vmatprep.mubr.bf16.mxu0 0
      %2995 = vmatmul.mubr.bf16.gmra.mrb[0].mxu0 %v2654
      %v2996 = vpop.f32.mrb[0].mxu0
      %v2997 = vadd.f32 0.0, %v2996
      %v2998 = vpop.f32.mrb[0].mxu0
      %v2999 = vpop.f32.mrb[0].mxu0
      %v3000 = vadd.f32 0.0, %v2999
      %v3001 = vpop.f32.mrb[0].mxu0
      %3002 = vmatprep.mubr.bf16.mxu0 0
      %3003 = vmatmul.mubr.bf16.gmra.mrb[0].mxu0 %v2657
      %v3004 = vpop.f32.mrb[0].mxu0
      %v3005 = vadd.f32 0.0, %v3004
      %v3006 = vpop.f32.mrb[0].mxu0
      %v3007 = vpop.f32.mrb[0].mxu0
      %v3008 = vadd.f32 0.0, %v3007
      %v3009 = vpop.f32.mrb[0].mxu0
      %3010 = vmatprep.mubr.bf16.mxu0 0
      %3011 = vmatmul.mubr.bf16.gmra.mrb[0].mxu0 %v2660
      %v3012 = vpop.f32.mrb[0].mxu0
      %v3013 = vadd.f32 0.0, %v3012
      %v3014 = vpop.f32.mrb[0].mxu0
      %v3015 = vpop.f32.mrb[0].mxu0
      %v3016 = vadd.f32 0.0, %v3015
      %v3017 = vpop.f32.mrb[0].mxu0
      %3018 = vmatprep.mubr.bf16.mxu0 0
      %3019 = vmatmul.mubr.bf16.gmra.mrb[0].mxu0 %v2861
      %v3020 = vpop.f32.mrb[0].mxu0
      %v3021 = vadd.f32 0.0, %v3020
      %v3022 = vpop.f32.mrb[0].mxu0
      %v3023 = vpop.f32.mrb[0].mxu0
      %v3024 = vadd.f32 0.0, %v3023
      %v3025 = vpop.f32.mrb[0].mxu0
      %3026 = vdwg.mxu0
      %v3027 = vadd.f32 %v2826, %v2901
      %v3028 = vadd.f32 %v2827, %v2904
      %v3029 = vadd.f32 %v2828, %v2909
      %v3030 = vadd.f32 %v2829, %v2912
      %v3031 = vadd.f32 %v2830, %v2917
      %v3032 = vadd.f32 %v2831, %v2920
      %v3033 = vadd.f32 %v2832, %v2925
      %v3034 = vadd.f32 %v2833, %v2928
      %v3035 = vadd.f32 %v2834, %v2933
      %v3036 = vadd.f32 %v2835, %v2936
      %v3037 = vadd.f32 %v2836, %v2941
      %v3038 = vadd.f32 %v2837, %v2944
      %v3039 = vadd.f32 %v2838, %v2949
      %v3040 = vadd.f32 %v2839, %v2952
      %v3041 = vadd.f32 %v2840, %v2957
      %v3042 = vadd.f32 %v2841, %v2960
      %v3043 = vadd.f32 %v2842, %v2965
      %v3044 = vadd.f32 %v2843, %v2968
      %v3045 = vadd.f32 %v2844, %v2973
      %v3046 = vadd.f32 %v2845, %v2976
      %v3047 = vadd.f32 %v2846, %v2981
      %v3048 = vadd.f32 %v2847, %v2984
      %v3049 = vadd.f32 %v2848, %v2989
      %v3050 = vadd.f32 %v2849, %v2992
      %v3051 = vadd.f32 %v2850, %v2997
      %v3052 = vadd.f32 %v2851, %v3000
      %v3053 = vadd.f32 %v2852, %v3005
      %v3054 = vadd.f32 %v2853, %v3008
      %v3055 = vadd.f32 %v2854, %v3013
      %v3056 = vadd.f32 %v2855, %v3016
      %v3057 = vadd.f32 %v2856, %v3021
      %v3058 = vadd.f32 %v2857, %v3024
      %s3059 = scalar_lea.vmem %s8, 24
      %v3060 = vld [vmem:[%s3059] sm:$0xf]
      %v3062 = vsel %vm1201, %v2612, 0
      %v3065 = vsel %vm1250, %v3060, 0
      %3067 = vmatprep.subr.bf16.mxu0 0
      %3068 = vmatpush1.bf16.msra.mxu0 %v3065
      %3069 = vmatprep.subr.bf16.mxu0 0
      %3070 = vmatpush1.bf16.msra.mxu0 0
      %3071 = vmatprep.subr.bf16.mxu0 0
      %3072 = vmatpush1.bf16.msra.mxu0 0
      %3073 = vmatprep.subr.bf16.mxu0 0
      %3074 = vmatpush1.bf16.msra.mxu0 0
      %3075 = vmatprep.subr.bf16.mxu0 0
      %3076 = vmatpush1.bf16.msra.mxu0 0
      %3077 = vmatprep.subr.bf16.mxu0 0
      %3078 = vmatpush1.bf16.msra.mxu0 0
      %3079 = vmatprep.subr.bf16.mxu0 0
      %3080 = vmatpush1.bf16.msra.mxu0 0
      %3081 = vmatprep.subr.bf16.mxu0 0
      %3082 = vmatpush1.bf16.msra.mxu0 0
      %3083 = vmatprep.subr.bf16.mxu0 0
      %3084 = vmatpush1.bf16.msra.mxu0 0
      %3085 = vmatprep.subr.bf16.mxu0 0
      %3086 = vmatpush1.bf16.msra.mxu0 0
      %3087 = vmatprep.subr.bf16.mxu0 0
      %3088 = vmatpush1.bf16.msra.mxu0 0
      %3089 = vmatprep.subr.bf16.mxu0 0
      %3090 = vmatpush1.bf16.msra.mxu0 0
      %3091 = vmatprep.subr.bf16.mxu0 0
      %3092 = vmatpush1.bf16.msra.mxu0 0
      %3093 = vmatprep.subr.bf16.mxu0 0
      %3094 = vmatpush1.bf16.msra.mxu0 0
      %3095 = vmatprep.subr.bf16.mxu0 0
      %3096 = vmatpush1.bf16.msra.mxu0 0
      %3097 = vmatprep.subr.bf16.mxu0 0
      %3098 = vmatpush1.bf16.msra.mxu0 0
      %3099 = vmatprep.mubr.bf16.mxu0 0
      %3100 = vmatmul.mubr.bf16.gmra.mrb[0].mxu0 %v2621
      %v3101 = vpop.f32.mrb[0].mxu0
      %v3102 = vadd.f32 0.0, %v3101
      %v3103 = vpop.f32.mrb[0].mxu0
      %v3104 = vpop.f32.mrb[0].mxu0
      %v3105 = vadd.f32 0.0, %v3104
      %v3106 = vpop.f32.mrb[0].mxu0
      %3107 = vmatprep.mubr.bf16.mxu0 0
      %3108 = vmatmul.mubr.bf16.gmra.mrb[0].mxu0 %v2624
      %v3109 = vpop.f32.mrb[0].mxu0
      %v3110 = vadd.f32 0.0, %v3109
      %v3111 = vpop.f32.mrb[0].mxu0
      %v3112 = vpop.f32.mrb[0].mxu0
      %v3113 = vadd.f32 0.0, %v3112
      %v3114 = vpop.f32.mrb[0].mxu0
      %3115 = vmatprep.mubr.bf16.mxu0 0
      %3116 = vmatmul.mubr.bf16.gmra.mrb[0].mxu0 %v2627
      %v3117 = vpop.f32.mrb[0].mxu0
      %v3118 = vadd.f32 0.0, %v3117
      %v3119 = vpop.f32.mrb[0].mxu0
      %v3120 = vpop.f32.mrb[0].mxu0
      %v3121 = vadd.f32 0.0, %v3120
      %v3122 = vpop.f32.mrb[0].mxu0
      %3123 = vmatprep.mubr.bf16.mxu0 0
      %3124 = vmatmul.mubr.bf16.gmra.mrb[0].mxu0 %v2630
      %v3125 = vpop.f32.mrb[0].mxu0
      %v3126 = vadd.f32 0.0, %v3125
      %v3127 = vpop.f32.mrb[0].mxu0
      %v3128 = vpop.f32.mrb[0].mxu0
      %v3129 = vadd.f32 0.0, %v3128
      %v3130 = vpop.f32.mrb[0].mxu0
      %3131 = vmatprep.mubr.bf16.mxu0 0
      %3132 = vmatmul.mubr.bf16.gmra.mrb[0].mxu0 %v2633
      %v3133 = vpop.f32.mrb[0].mxu0
      %v3134 = vadd.f32 0.0, %v3133
      %v3135 = vpop.f32.mrb[0].mxu0
      %v3136 = vpop.f32.mrb[0].mxu0
      %v3137 = vadd.f32 0.0, %v3136
      %v3138 = vpop.f32.mrb[0].mxu0
      %3139 = vmatprep.mubr.bf16.mxu0 0
      %3140 = vmatmul.mubr.bf16.gmra.mrb[0].mxu0 %v2636
      %v3141 = vpop.f32.mrb[0].mxu0
      %v3142 = vadd.f32 0.0, %v3141
      %v3143 = vpop.f32.mrb[0].mxu0
      %v3144 = vpop.f32.mrb[0].mxu0
      %v3145 = vadd.f32 0.0, %v3144
      %v3146 = vpop.f32.mrb[0].mxu0
      %3147 = vmatprep.mubr.bf16.mxu0 0
      %3148 = vmatmul.mubr.bf16.gmra.mrb[0].mxu0 %v2639
      %v3149 = vpop.f32.mrb[0].mxu0
      %v3150 = vadd.f32 0.0, %v3149
      %v3151 = vpop.f32.mrb[0].mxu0
      %v3152 = vpop.f32.mrb[0].mxu0
      %v3153 = vadd.f32 0.0, %v3152
      %v3154 = vpop.f32.mrb[0].mxu0
      %3155 = vmatprep.mubr.bf16.mxu0 0
      %3156 = vmatmul.mubr.bf16.gmra.mrb[0].mxu0 %v2642
      %v3157 = vpop.f32.mrb[0].mxu0
      %v3158 = vadd.f32 0.0, %v3157
      %v3159 = vpop.f32.mrb[0].mxu0
      %v3160 = vpop.f32.mrb[0].mxu0
      %v3161 = vadd.f32 0.0, %v3160
      %v3162 = vpop.f32.mrb[0].mxu0
      %3163 = vmatprep.mubr.bf16.mxu0 0
      %3164 = vmatmul.mubr.bf16.gmra.mrb[0].mxu0 %v2645
      %v3165 = vpop.f32.mrb[0].mxu0
      %v3166 = vadd.f32 0.0, %v3165
      %v3167 = vpop.f32.mrb[0].mxu0
      %v3168 = vpop.f32.mrb[0].mxu0
      %v3169 = vadd.f32 0.0, %v3168
      %v3170 = vpop.f32.mrb[0].mxu0
      %3171 = vmatprep.mubr.bf16.mxu0 0
      %3172 = vmatmul.mubr.bf16.gmra.mrb[0].mxu0 %v2648
      %v3173 = vpop.f32.mrb[0].mxu0
      %v3174 = vadd.f32 0.0, %v3173
      %v3175 = vpop.f32.mrb[0].mxu0
      %v3176 = vpop.f32.mrb[0].mxu0
      %v3177 = vadd.f32 0.0, %v3176
      %v3178 = vpop.f32.mrb[0].mxu0
      %3179 = vmatprep.mubr.bf16.mxu0 0
      %3180 = vmatmul.mubr.bf16.gmra.mrb[0].mxu0 %v2651
      %v3181 = vpop.f32.mrb[0].mxu0
      %v3182 = vadd.f32 0.0, %v3181
      %v3183 = vpop.f32.mrb[0].mxu0
      %v3184 = vpop.f32.mrb[0].mxu0
      %v3185 = vadd.f32 0.0, %v3184
      %v3186 = vpop.f32.mrb[0].mxu0
      %3187 = vmatprep.mubr.bf16.mxu0 0
      %3188 = vmatmul.mubr.bf16.gmra.mrb[0].mxu0 %v2654
      %v3189 = vpop.f32.mrb[0].mxu0
      %v3190 = vadd.f32 0.0, %v3189
      %v3191 = vpop.f32.mrb[0].mxu0
      %v3192 = vpop.f32.mrb[0].mxu0
      %v3193 = vadd.f32 0.0, %v3192
      %v3194 = vpop.f32.mrb[0].mxu0
      %3195 = vmatprep.mubr.bf16.mxu0 0
      %3196 = vmatmul.mubr.bf16.gmra.mrb[0].mxu0 %v2657
      %v3197 = vpop.f32.mrb[0].mxu0
      %v3198 = vadd.f32 0.0, %v3197
      %v3199 = vpop.f32.mrb[0].mxu0
      %v3200 = vpop.f32.mrb[0].mxu0
      %v3201 = vadd.f32 0.0, %v3200
      %v3202 = vpop.f32.mrb[0].mxu0
      %3203 = vmatprep.mubr.bf16.mxu0 0
      %3204 = vmatmul.mubr.bf16.gmra.mrb[0].mxu0 %v2660
      %v3205 = vpop.f32.mrb[0].mxu0
      %v3206 = vadd.f32 0.0, %v3205
      %v3207 = vpop.f32.mrb[0].mxu0
      %v3208 = vpop.f32.mrb[0].mxu0
      %v3209 = vadd.f32 0.0, %v3208
      %v3210 = vpop.f32.mrb[0].mxu0
      %3211 = vmatprep.mubr.bf16.mxu0 0
      %3212 = vmatmul.mubr.bf16.gmra.mrb[0].mxu0 %v2861
      %v3213 = vpop.f32.mrb[0].mxu0
      %v3214 = vadd.f32 0.0, %v3213
      %v3215 = vpop.f32.mrb[0].mxu0
      %v3216 = vpop.f32.mrb[0].mxu0
      %v3217 = vadd.f32 0.0, %v3216
      %v3218 = vpop.f32.mrb[0].mxu0
      %3219 = vmatprep.mubr.bf16.mxu0 0
      %3220 = vmatmul.mubr.bf16.gmra.mrb[0].mxu0 %v3062
      %v3221 = vpop.f32.mrb[0].mxu0
      %v3222 = vadd.f32 0.0, %v3221
      %v3223 = vpop.f32.mrb[0].mxu0
      %v3224 = vpop.f32.mrb[0].mxu0
      %v3225 = vadd.f32 0.0, %v3224
      %v3226 = vpop.f32.mrb[0].mxu0
      %3227 = vdwg.mxu0
      %v3228 = vadd.f32 %v3027, %v3102
      %v3229 = vadd.f32 %v3028, %v3105
      %v3230 = vadd.f32 %v3029, %v3110
      %v3231 = vadd.f32 %v3030, %v3113
      %v3232 = vadd.f32 %v3031, %v3118
      %v3233 = vadd.f32 %v3032, %v3121
      %v3234 = vadd.f32 %v3033, %v3126
      %v3235 = vadd.f32 %v3034, %v3129
      %v3236 = vadd.f32 %v3035, %v3134
      %v3237 = vadd.f32 %v3036, %v3137
      %v3238 = vadd.f32 %v3037, %v3142
      %v3239 = vadd.f32 %v3038, %v3145
      %v3240 = vadd.f32 %v3039, %v3150
      %v3241 = vadd.f32 %v3040, %v3153
      %v3242 = vadd.f32 %v3041, %v3158
      %v3243 = vadd.f32 %v3042, %v3161
      %v3244 = vadd.f32 %v3043, %v3166
      %v3245 = vadd.f32 %v3044, %v3169
      %v3246 = vadd.f32 %v3045, %v3174
      %v3247 = vadd.f32 %v3046, %v3177
      %v3248 = vadd.f32 %v3047, %v3182
      %v3249 = vadd.f32 %v3048, %v3185
      %v3250 = vadd.f32 %v3049, %v3190
      %v3251 = vadd.f32 %v3050, %v3193
      %v3252 = vadd.f32 %v3051, %v3198
      %v3253 = vadd.f32 %v3052, %v3201
      %v3254 = vadd.f32 %v3053, %v3206
      %v3255 = vadd.f32 %v3054, %v3209
      %v3256 = vadd.f32 %v3055, %v3214
      %v3257 = vadd.f32 %v3056, %v3217
      %v3258 = vadd.f32 %v3057, %v3222
      %v3259 = vadd.f32 %v3058, %v3225
      %3260 = vst.msk [vmem:[%s662] sm:$0xff] %vm1201, %v3228
      %3261 = vst.msk [vmem:[%s662 + $0x8] sm:$0xff] %vm1201, %v3229
      %3262 = vst.msk [vmem:[%s662 + $0x10] sm:$0xff] %vm1201, %v3230
      %3263 = vst.msk [vmem:[%s662 + $0x18] sm:$0xff] %vm1201, %v3231
      %3264 = vst.msk [vmem:[%s662 + $0x20] sm:$0xff] %vm1201, %v3232
      %3265 = vst.msk [vmem:[%s662 + $0x28] sm:$0xff] %vm1201, %v3233
      %3266 = vst.msk [vmem:[%s662 + $0x30] sm:$0xff] %vm1201, %v3234
      %3267 = vst.msk [vmem:[%s662 + $0x38] sm:$0xff] %vm1201, %v3235
      %3268 = vst.msk [vmem:[%s662 + $0x40] sm:$0xff] %vm1201, %v3236
      %3269 = vst.msk [vmem:[%s662 + $0x48] sm:$0xff] %vm1201, %v3237
      %3270 = vst.msk [vmem:[%s662 + $0x50] sm:$0xff] %vm1201, %v3238
      %3271 = vst.msk [vmem:[%s662 + $0x58] sm:$0xff] %vm1201, %v3239
      %3272 = vst.msk [vmem:[%s662 + $0x60] sm:$0xff] %vm1201, %v3240
      %3273 = vst.msk [vmem:[%s662 + $0x68] sm:$0xff] %vm1201, %v3241
      %3274 = vst.msk [vmem:[%s662 + $0x70] sm:$0xff] %vm1201, %v3242
      %3275 = vst.msk [vmem:[%s662 + $0x78] sm:$0xff] %vm1201, %v3243
      %3276 = vst.msk [vmem:[%s662 + $0x80] sm:$0xff] %vm1201, %v3244
      %3277 = vst.msk [vmem:[%s662 + $0x88] sm:$0xff] %vm1201, %v3245
      %3278 = vst.msk [vmem:[%s662 + $0x90] sm:$0xff] %vm1201, %v3246
      %3279 = vst.msk [vmem:[%s662 + $0x98] sm:$0xff] %vm1201, %v3247
      %3280 = vst.msk [vmem:[%s662 + $0xa0] sm:$0xff] %vm1201, %v3248
      %3281 = vst.msk [vmem:[%s662 + $0xa8] sm:$0xff] %vm1201, %v3249
      %3282 = vst.msk [vmem:[%s662 + $0xb0] sm:$0xff] %vm1201, %v3250
      %3283 = vst.msk [vmem:[%s662 + $0xb8] sm:$0xff] %vm1201, %v3251
      %3284 = vst.msk [vmem:[%s662 + $0xc0] sm:$0xff] %vm1201, %v3252
      %3285 = vst.msk [vmem:[%s662 + $0xc8] sm:$0xff] %vm1201, %v3253
      %3286 = vst.msk [vmem:[%s662 + $0xd0] sm:$0xff] %vm1201, %v3254
      %3287 = vst.msk [vmem:[%s662 + $0xd8] sm:$0xff] %vm1201, %v3255
      %3288 = vst.msk [vmem:[%s662 + $0xe0] sm:$0xff] %vm1201, %v3256
      %3289 = vst.msk [vmem:[%s662 + $0xe8] sm:$0xff] %vm1201, %v3257
      %3290 = vst.msk [vmem:[%s662 + $0xf0] sm:$0xff] %vm1201, %v3258
      %3291 = vst.msk [vmem:[%s662 + $0xf8] sm:$0xff] %vm1201, %v3259
      %s3292 = smul.u32 16, %s25
      %p3293 = scmp.lt.s32.totalorder %s24, 1
      %s3294 = scalar_select %p3293, %s24, 1
      %p3295 = scmp.lt.s32.totalorder %s3292, 15
      %s3296 = scalar_select %p3295, %s3292, 15
      %s3297 = smul.addr %s3296, 2
      %s3298 = smul.addr %s3294, 32
      %s3299 = sadd.s32 %s3297, %s3298
      %s3300 = smul.addr %s3299, 8
      %s3301 = scalar_lea.vmem %s9, %s3300
      // Predicated region
      $region57: #{tpu_custom_call.1} parent=55 // pred_check
        %p3302 = pneg %p315
      $region58: #{tpu_custom_call.1} parent=55 // pred_check_branch
        %3304 = sbr.rel (%p3302) target = $region60
      $region59: #{tpu_custom_call.1} parent=55 // pred_region
        %s3305 = smul.u32 16, %s25
      $region60: #{tpu_custom_call.1} parent=55 // pred_fallthru
        _
    $region56: #{tpu_custom_call.1} parent=5 // pred_fallthru
      _
    %p3306 = scmp.le.s32.totalorder 2, %s15
    // Predicated region
    $region61: #{tpu_custom_call.1} parent=5 // pred_check
      %p3307 = pneg %p3306
    $region62: #{tpu_custom_call.1} parent=5 // pred_check_branch
      %3309 = sbr.rel (%p3307) target = $region64
    $region63: #{tpu_custom_call.1} parent=5 // pred_region
      %s3310 = ssub.s32 %s15, 2
      // Predicated region
      $region65: #{tpu_custom_call.1} parent=63 // pred_check
        %p3311 = pneg %p321
      $region66: #{tpu_custom_call.1} parent=63 // pred_check_branch
        %3313 = sbr.rel (%p3311) target = $region68
      $region67: #{tpu_custom_call.1} parent=63 // pred_region
        %s3314 = smul.u32 16, %s27
        %p3315 = scmp.lt.s32.totalorder %s26, 1
        %s3316 = scalar_select %p3315, %s26, 1
        %p3317 = scmp.lt.s32.totalorder %s3314, 15
        %s3318 = scalar_select %p3317, %s3314, 15
        %s3319 = smul.addr %s3318, 2
        %s3320 = smul.addr %s3316, 32
        %s3321 = sadd.s32 %s3319, %s3320
        %s3322 = smul.addr %s3321, 8
        %s3323 = scalar_lea.vmem %s9, %s3322
      $region68: #{tpu_custom_call.1} parent=63 // pred_fallthru
        _
    $region64: #{tpu_custom_call.1} parent=5 // pred_fallthru
      _
  $region6: #{tpu_custom_call.1} parent=0 // loop_footer
    %s19 = sadd.s32 1, %s15
  $region7: #{tpu_custom_call.1} parent=0 // loop_footer_branch
    %14 = sbr.rel target = $region3
  $region8: #{tpu_custom_call.1} parent=0 // loop_exit
    _

</llo_original>
